<compile_context>
chip_gen: v6e
topology: v6e:2x2x1
jax: 0.10.0
libtpu: 0.0.40
codegen_flags: <defaults>
</compile_context>

<pallas_src>
import numpy as np
import jax
import jax.numpy as jnp
from jax.experimental import pallas as pl
from jax.experimental.pallas import tpu as pltpu


# ----------------------------------------------------------------------------
# Graph definition (identical to the PyTorch script)
# ----------------------------------------------------------------------------
EDGES = [(0, 2), (1, 3), (0, 4), (4, 5), (5, 7), (6, 8)]
NUM_NODES = 9
F_IN, F_HID, F_OUT = 16, 32, 16

NP_ = 128            # node dimension padded to 128 rows (uniform (128,128) tiles)
LANES = 128          # feature dimensions padded to 128 lanes

# packed constant-slab layout (rows; every block starts on an 8-row boundary)
ROW_A = 0            # rows   0..127 : A_hat (9,9)   zero-padded to (128,128)
ROW_W1 = 128         # rows 128..255 : W1    (16,32) zero-padded to (128,128)
ROW_B1 = 256         # row  256      : b1    (1,32)  zero-padded to (1,128)
ROW_W2 = 264         # rows 264..391 : W2    (32,16) zero-padded to (128,128)
ROW_B2 = 392         # row  392      : b2    (1,16)  zero-padded to (1,128)
PACK_ROWS = 400


def build_normalized_adjacency(num_nodes, edges):
    """Dense A_hat = D^-1/2 (A + I) D^-1/2 (PyG GCNConv gcn_norm, directed input)."""
    src = np.array([e[0] for e in edges], dtype=np.int64)
    dst = np.array([e[1] for e in edges], dtype=np.int64)
    loop = np.arange(num_nodes, dtype=np.int64)            # add_self_loops=True
    src = np.concatenate([src, loop])
    dst = np.concatenate([dst, loop])
    deg = np.zeros(num_nodes, dtype=np.float32)            # in-degree, weight 1
    np.add.at(deg, dst, 1.0)
    deg_inv_sqrt = np.where(deg > 0, 1.0 / np.sqrt(deg), 0.0)
    a_hat = np.zeros((num_nodes, num_nodes), dtype=np.float32)
    a_hat[dst, src] = deg_inv_sqrt[dst] * deg_inv_sqrt[src]  # row = destination
    return a_hat


def pack_constants(a_hat, w1, b1, w2, b2):
    """Host-side (numpy) packing of every per-graph constant into one 128-lane slab."""
    p = np.zeros((PACK_ROWS, LANES), np.float32)
    n = a_hat.shape[0]
    p[ROW_A:ROW_A + n, 0:n] = a_hat
    p[ROW_W1:ROW_W1 + F_IN, 0:F_HID] = w1
    p[ROW_B1, 0:F_HID] = np.reshape(b1, (-1,))
    p[ROW_W2:ROW_W2 + F_HID, 0:F_OUT] = w2
    p[ROW_B2, 0:F_OUT] = np.reshape(b2, (-1,))
    return p


# ----------------------------------------------------------------------------
# Pallas kernel: fused two-layer GCN forward (single invocation, no grid)
# ----------------------------------------------------------------------------
def gcn_kernel(x_ref, p_ref, o_ref):
    x = x_ref[...]                                  # (128,128) f32, X in top-left
    a = p_ref[ROW_A:ROW_A + NP_, :]                 # (128,128) A_hat (zero-padded)
    w1 = p_ref[ROW_W1:ROW_W1 + NP_, :]              # (128,128)
    b1 = p_ref[ROW_B1:ROW_B1 + 1, :]                # (1,128)
    w2 = p_ref[ROW_W2:ROW_W2 + NP_, :]              # (128,128)
    b2 = p_ref[ROW_B2:ROW_B2 + 1, :]                # (1,128)

    dot = lambda l, r: jnp.dot(l, r,
                               precision=jax.lax.Precision.HIGHEST,
                               preferred_element_type=jnp.float32)

    # layer 1: relu( A_hat @ (X W1) + b1 )   -- zero padding keeps extra lanes 0
    h = jnp.maximum(dot(a, dot(x, w1)) + b1, 0.0)
    # layer 2: A_hat @ (H W2) + b2           -- padded rows of H are annihilated
    # by A_hat's zero columns, so only the real (9,16) block is meaningful.
    o_ref[...] = dot(a, dot(h, w2)) + b2


def make_gcn_forward(a_hat, w1, b1, w2, b2):
    """Pack all constants once (host-side) and return a jitted forward: x -> y."""
    slab = jnp.asarray(pack_constants(np.asarray(a_hat, np.float32),
                                      np.asarray(w1, np.float32),
                                      np.asarray(b1, np.float32),
                                      np.asarray(w2, np.float32),
                                      np.asarray(b2, np.float32)))
    n = a_hat.shape[0]
    vmem = pl.BlockSpec(memory_space=pltpu.MemorySpace.VMEM)
    call = pl.pallas_call(
        gcn_kernel,
        out_shape=jax.ShapeDtypeStruct((NP_, LANES), jnp.float32),
        in_specs=[vmem, vmem],
        out_specs=vmem,
    )

    @jax.jit
    def forward(x):
        x_p = jnp.zeros((NP_, LANES), jnp.float32).at[:n, :F_IN].set(x)
        return call(x_p, slab)[:n, :F_OUT]

    return forward


# ----------------------------------------------------------------------------
# Reference (float64 numpy, identical to the PyTorch module semantics)
# ----------------------------------------------------------------------------
def gcn_reference_f64(a_hat, x, w1, b1, w2, b2):
    a_hat, x, w1, b1, w2, b2 = (np.asarray(t, np.float64)
                                for t in (a_hat, x, w1, b1, w2, b2))
    h = np.maximum(a_hat @ (x @ w1) + b1, 0.0)
    return a_hat @ (h @ w2) + b2


if __name__ == "__main__":
    key = jax.random.PRNGKey(0)
    k_x, k_w1, k_b1, k_w2, k_b2 = jax.random.split(key, 5)

    # deterministic synthetic parameters (glorot-ish scaling) and node features
    x = jax.random.uniform(k_x, (NUM_NODES, F_IN), dtype=jnp.float32)
    w1 = jax.random.normal(k_w1, (F_IN, F_HID), dtype=jnp.float32) / np.sqrt(F_IN)
    b1 = jax.random.normal(k_b1, (1, F_HID), dtype=jnp.float32) * 0.01
    w2 = jax.random.normal(k_w2, (F_HID, F_OUT), dtype=jnp.float32) / np.sqrt(F_HID)
    b2 = jax.random.normal(k_b2, (1, F_OUT), dtype=jnp.float32) * 0.01

    a_hat = build_normalized_adjacency(NUM_NODES, EDGES)

    forward = make_gcn_forward(a_hat, w1, b1, w2, b2)
    out = jax.block_until_ready(forward(x))

    ref = gcn_reference_f64(a_hat, x, w1, b1, w2, b2)
    np.testing.assert_allclose(np.asarray(out), ref, rtol=1e-3, atol=1e-3)

    assert out.shape == (NUM_NODES, F_OUT)
    print("KERNEL_OK")
</pallas_src>

<mosaic_0001>
module attributes {stable_mosaic.version = 11 : i64} {
  func.func @gcn_kernel(%arg0: memref<128x128xf32, #tpu.memory_space<vmem>>, %arg1: memref<400x128xf32, #tpu.memory_space<vmem>>, %arg2: memref<128x128xf32, #tpu.memory_space<vmem>>) attributes {dimension_semantics = [], scalar_prefetch = 0 : i64, scratch_operands = 0 : i64, tpu.core_type = #tpu.core_type<tc>} {
    %c0 = arith.constant 0 : index
    %c0_0 = arith.constant 0 : index
    %0 = vector.load %arg0[%c0, %c0_0] : memref<128x128xf32, #tpu.memory_space<vmem>>, vector<128x128xf32>
    %c0_1 = arith.constant 0 : index
    %c0_2 = arith.constant 0 : index
    %1 = vector.load %arg1[%c0_1, %c0_2] : memref<400x128xf32, #tpu.memory_space<vmem>>, vector<128x128xf32>
    %c128 = arith.constant 128 : index
    %c0_3 = arith.constant 0 : index
    %2 = vector.load %arg1[%c128, %c0_3] : memref<400x128xf32, #tpu.memory_space<vmem>>, vector<128x128xf32>
    %c256 = arith.constant 256 : index
    %c0_4 = arith.constant 0 : index
    %3 = vector.load %arg1[%c256, %c0_4] : memref<400x128xf32, #tpu.memory_space<vmem>>, vector<1x128xf32>
    %c264 = arith.constant 264 : index
    %c0_5 = arith.constant 0 : index
    %4 = vector.load %arg1[%c264, %c0_5] : memref<400x128xf32, #tpu.memory_space<vmem>>, vector<128x128xf32>
    %c392 = arith.constant 392 : index
    %c0_6 = arith.constant 0 : index
    %5 = vector.load %arg1[%c392, %c0_6] : memref<400x128xf32, #tpu.memory_space<vmem>>, vector<1x128xf32>
    %cst = arith.constant dense<0.000000e+00> : vector<128x128xf32>
    %6 = tpu.matmul %0, %2, %cst {dimension_numbers = #tpu.dot_dimension_numbers<[1], [0], [0], [1], [0, 0, 1, 1], [], []>, precision = #tpu.contract_precision<fp32>} : vector<128x128xf32>, vector<128x128xf32>, vector<128x128xf32> -> vector<128x128xf32>
    %cst_7 = arith.constant dense<0.000000e+00> : vector<128x128xf32>
    %7 = tpu.matmul %1, %6, %cst_7 {dimension_numbers = #tpu.dot_dimension_numbers<[1], [0], [0], [1], [0, 0, 1, 1], [], []>, precision = #tpu.contract_precision<fp32>} : vector<128x128xf32>, vector<128x128xf32>, vector<128x128xf32> -> vector<128x128xf32>
    %8 = vector.broadcast %3 : vector<1x128xf32> to vector<128x128xf32>
    %9 = arith.addf %7, %8 : vector<128x128xf32>
    %cst_8 = arith.constant 0.000000e+00 : f32
    %10 = vector.broadcast %cst_8 : f32 to vector<128x128xf32>
    %11 = arith.maximumf %9, %10 : vector<128x128xf32>
    %cst_9 = arith.constant dense<0.000000e+00> : vector<128x128xf32>
    %12 = tpu.matmul %11, %4, %cst_9 {dimension_numbers = #tpu.dot_dimension_numbers<[1], [0], [0], [1], [0, 0, 1, 1], [], []>, precision = #tpu.contract_precision<fp32>} : vector<128x128xf32>, vector<128x128xf32>, vector<128x128xf32> -> vector<128x128xf32>
    %cst_10 = arith.constant dense<0.000000e+00> : vector<128x128xf32>
    %13 = tpu.matmul %1, %12, %cst_10 {dimension_numbers = #tpu.dot_dimension_numbers<[1], [0], [0], [1], [0, 0, 1, 1], [], []>, precision = #tpu.contract_precision<fp32>} : vector<128x128xf32>, vector<128x128xf32>, vector<128x128xf32> -> vector<128x128xf32>
    %14 = vector.broadcast %5 : vector<1x128xf32> to vector<128x128xf32>
    %15 = arith.addf %13, %14 : vector<128x128xf32>
    %c0_11 = arith.constant 0 : index
    %c0_12 = arith.constant 0 : index
    %16 = vector.load %arg2[%c0_11, %c0_12] : memref<128x128xf32, #tpu.memory_space<vmem>>, vector<128x128xf32>
    tpu.vector_store %arg2[%c0_11, %c0_12], %15 {strides = array<i32>} : memref<128x128xf32, #tpu.memory_space<vmem>>, vector<128x128xf32>,
    return
  }
}

</mosaic_0001>

<llo_original>
// kernel: forward.1
$region0: #{forward.1}
  #allocation0 [shape = 'u32[]', space=smem, size = 0x4, offset = 0x4, fixed_abs, tag = 'smem constant byte address 0x4 - core index']
  #allocation1 [shape = 'u32[144,128]{1,0:T(1,128)}', space=vmem, size = 0x12000, scoped, tag = 'internal scratch']
  %s0 = inlined_call_operand.vmem [shape: f32[128,128], index: 0, kind: input, shape index: {}]
  %s1 = inlined_call_operand.hbm [shape: f32[400,128], index: 1, kind: input, shape index: {}]
  %s2 = inlined_call_operand.vmem [shape: f32[128,128], index: 2, kind: output, shape index: {}]
  %s3 = sld [smem:[#allocation0]]
  $region22: #{forward.1} parent=0
    _
  %s5 = ssub.s32 1, %s3
  %s6 = scalar_select 0, %s5, %s3
  $region1: #{forward.1} parent=0
    #allocation2 [shape = 'u8[204800]{0}', space=vmem, size = 0x32000, scoped, tag = 'input window, operand 1, single buffered']
    #allocation3 [shape = 's32[1]{0}', space=sflag, size = 0x4, scoped, tag = 'scoped memory for forward.1']
    %7 = vsyncpa [#allocation3], 0
    // Predicated region
    $region2: #{forward.1} parent=1 // pred_check
      _
    $region3: #{forward.1} parent=1 // pred_check_branch
      %9 = sbr.rel (0) target = $region5
    $region4: #{forward.1} parent=1 // pred_region
      _
    $region5: #{forward.1} parent=1 // pred_fallthru
      _
    // Predicated region
    $region6: #{forward.1} parent=1 // pred_check
      _
    $region7: #{forward.1} parent=1 // pred_check_branch
      %11 = sbr.rel (0) target = $region9
    $region8: #{forward.1} parent=1 // pred_region
      %s13 = ssub.s32 6400, 6400
      %14 = vsyncadd [#allocation3], %s13
      %s15 = sshll.u32 [#allocation2], 4
      %s16 = int_to_ptr.vmem [resolvable:$true] %s15
      %21 = dma.hbm_to_vmem [thread:$0]  %s1, 6400, %s16, [#allocation3], 128, 128, 8
    $region9: #{forward.1} parent=1 // pred_fallthru
      _
    // Predicated region
    $region10: #{forward.1} parent=1 // pred_check
      _
    $region11: #{forward.1} parent=1 // pred_check_branch
      %23 = sbr.rel (0) target = $region13
    $region12: #{forward.1} parent=1 // pred_region
      %24 = dma.done [#allocation3], 6400
    $region13: #{forward.1} parent=1 // pred_fallthru
      _
    %v25 = vld [vmem:[%s0] sm:$0xff]
    %v26 = vld [vmem:[%s0 + $0x8] sm:$0xff]
    %v27 = vld [vmem:[%s0 + $0x10] sm:$0xff]
    %v28 = vld [vmem:[%s0 + $0x18] sm:$0xff]
    %v29 = vld [vmem:[%s0 + $0x20] sm:$0xff]
    %v30 = vld [vmem:[%s0 + $0x28] sm:$0xff]
    %v31 = vld [vmem:[%s0 + $0x30] sm:$0xff]
    %v32 = vld [vmem:[%s0 + $0x38] sm:$0xff]
    %v33 = vld [vmem:[%s0 + $0x40] sm:$0xff]
    %v34 = vld [vmem:[%s0 + $0x48] sm:$0xff]
    %v35 = vld [vmem:[%s0 + $0x50] sm:$0xff]
    %v36 = vld [vmem:[%s0 + $0x58] sm:$0xff]
    %v37 = vld [vmem:[%s0 + $0x60] sm:$0xff]
    %v38 = vld [vmem:[%s0 + $0x68] sm:$0xff]
    %v39 = vld [vmem:[%s0 + $0x70] sm:$0xff]
    %v40 = vld [vmem:[%s0 + $0x78] sm:$0xff]
    %v41 = vld [vmem:[#allocation2] sm:$0xff]
    %v42 = vld [vmem:[#allocation2 + $0x8] sm:$0xff]
    %v43 = vld [vmem:[#allocation2 + $0x10] sm:$0xff]
    %v44 = vld [vmem:[#allocation2 + $0x18] sm:$0xff]
    %v45 = vld [vmem:[#allocation2 + $0x20] sm:$0xff]
    %v46 = vld [vmem:[#allocation2 + $0x28] sm:$0xff]
    %v47 = vld [vmem:[#allocation2 + $0x30] sm:$0xff]
    %v48 = vld [vmem:[#allocation2 + $0x38] sm:$0xff]
    %v49 = vld [vmem:[#allocation2 + $0x40] sm:$0xff]
    %v50 = vld [vmem:[#allocation2 + $0x48] sm:$0xff]
    %v51 = vld [vmem:[#allocation2 + $0x50] sm:$0xff]
    %v52 = vld [vmem:[#allocation2 + $0x58] sm:$0xff]
    %v53 = vld [vmem:[#allocation2 + $0x60] sm:$0xff]
    %v54 = vld [vmem:[#allocation2 + $0x68] sm:$0xff]
    %v55 = vld [vmem:[#allocation2 + $0x70] sm:$0xff]
    %v56 = vld [vmem:[#allocation2 + $0x78] sm:$0xff]
    %v57 = vld [vmem:[#allocation2 + $0x80] sm:$0xff]
    %v58 = vld [vmem:[#allocation2 + $0x88] sm:$0xff]
    %v59 = vld [vmem:[#allocation2 + $0x90] sm:$0xff]
    %v60 = vld [vmem:[#allocation2 + $0x98] sm:$0xff]
    %v61 = vld [vmem:[#allocation2 + $0xa0] sm:$0xff]
    %v62 = vld [vmem:[#allocation2 + $0xa8] sm:$0xff]
    %v63 = vld [vmem:[#allocation2 + $0xb0] sm:$0xff]
    %v64 = vld [vmem:[#allocation2 + $0xb8] sm:$0xff]
    %v65 = vld [vmem:[#allocation2 + $0xc0] sm:$0xff]
    %v66 = vld [vmem:[#allocation2 + $0xc8] sm:$0xff]
    %v67 = vld [vmem:[#allocation2 + $0xd0] sm:$0xff]
    %v68 = vld [vmem:[#allocation2 + $0xd8] sm:$0xff]
    %v69 = vld [vmem:[#allocation2 + $0xe0] sm:$0xff]
    %v70 = vld [vmem:[#allocation2 + $0xe8] sm:$0xff]
    %v71 = vld [vmem:[#allocation2 + $0xf0] sm:$0xff]
    %v72 = vld [vmem:[#allocation2 + $0xf8] sm:$0xff]
    %v73 = vld [vmem:[#allocation2 + $0x100] sm:$0x1]
    %v74 = vld [vmem:[#allocation2 + $0x108] sm:$0xff]
    %v75 = vld [vmem:[#allocation2 + $0x110] sm:$0xff]
    %v76 = vld [vmem:[#allocation2 + $0x118] sm:$0xff]
    %v77 = vld [vmem:[#allocation2 + $0x120] sm:$0xff]
    %v78 = vld [vmem:[#allocation2 + $0x128] sm:$0xff]
    %v79 = vld [vmem:[#allocation2 + $0x130] sm:$0xff]
    %v80 = vld [vmem:[#allocation2 + $0x138] sm:$0xff]
    %v81 = vld [vmem:[#allocation2 + $0x140] sm:$0xff]
    %v82 = vld [vmem:[#allocation2 + $0x148] sm:$0xff]
    %v83 = vld [vmem:[#allocation2 + $0x150] sm:$0xff]
    %v84 = vld [vmem:[#allocation2 + $0x158] sm:$0xff]
    %v85 = vld [vmem:[#allocation2 + $0x160] sm:$0xff]
    %v86 = vld [vmem:[#allocation2 + $0x168] sm:$0xff]
    %v87 = vld [vmem:[#allocation2 + $0x170] sm:$0xff]
    %v88 = vld [vmem:[#allocation2 + $0x178] sm:$0xff]
    %v89 = vld [vmem:[#allocation2 + $0x180] sm:$0xff]
    %v90 = vld [vmem:[#allocation2 + $0x188] sm:$0x1]
    %91 = vmatprep.subr.mxu0 0.0
    %v92 = vand.u32 %v72, 4294901760
    %93 = vmatpush1.msra.mxu0 %v92
    %94 = vmatprep.subr.mxu0 0.0
    %v95 = vand.u32 %v71, 4294901760
    %96 = vmatpush1.msra.mxu0 %v95
    %97 = vmatprep.subr.mxu0 0.0
    %v98 = vand.u32 %v70, 4294901760
    %99 = vmatpush1.msra.mxu0 %v98
    %100 = vmatprep.subr.mxu0 0.0
    %v101 = vand.u32 %v69, 4294901760
    %102 = vmatpush1.msra.mxu0 %v101
    %103 = vmatprep.subr.mxu0 0.0
    %v104 = vand.u32 %v68, 4294901760
    %105 = vmatpush1.msra.mxu0 %v104
    %106 = vmatprep.subr.mxu0 0.0
    %v107 = vand.u32 %v67, 4294901760
    %108 = vmatpush1.msra.mxu0 %v107
    %109 = vmatprep.subr.mxu0 0.0
    %v110 = vand.u32 %v66, 4294901760
    %111 = vmatpush1.msra.mxu0 %v110
    %112 = vmatprep.subr.mxu0 0.0
    %v113 = vand.u32 %v65, 4294901760
    %114 = vmatpush1.msra.mxu0 %v113
    %115 = vmatprep.subr.mxu0 0.0
    %v116 = vand.u32 %v64, 4294901760
    %117 = vmatpush1.msra.mxu0 %v116
    %118 = vmatprep.subr.mxu0 0.0
    %v119 = vand.u32 %v63, 4294901760
    %120 = vmatpush1.msra.mxu0 %v119
    %121 = vmatprep.subr.mxu0 0.0
    %v122 = vand.u32 %v62, 4294901760
    %123 = vmatpush1.msra.mxu0 %v122
    %124 = vmatprep.subr.mxu0 0.0
    %v125 = vand.u32 %v61, 4294901760
    %126 = vmatpush1.msra.mxu0 %v125
    %127 = vmatprep.subr.mxu0 0.0
    %v128 = vand.u32 %v60, 4294901760
    %129 = vmatpush1.msra.mxu0 %v128
    %130 = vmatprep.subr.mxu0 0.0
    %v131 = vand.u32 %v59, 4294901760
    %132 = vmatpush1.msra.mxu0 %v131
    %133 = vmatprep.subr.mxu0 0.0
    %v134 = vand.u32 %v58, 4294901760
    %135 = vmatpush1.msra.mxu0 %v134
    %136 = vmatprep.subr.mxu0 0.0
    %v137 = vand.u32 %v57, 4294901760
    %138 = vmatpush1.msra.mxu0 %v137
    %139 = vmatprep.subr.mxu0 0.0
    %140 = vmatpush2.msra.mxu0 0.0
    %141 = vmatprep.subr.mxu0 0.0
    %142 = vmatpush2.msra.mxu0 0.0
    %143 = vmatprep.subr.mxu0 0.0
    %144 = vmatpush2.msra.mxu0 0.0
    %145 = vmatprep.subr.mxu0 0.0
    %146 = vmatpush2.msra.mxu0 0.0
    %147 = vmatprep.subr.mxu0 0.0
    %148 = vmatpush2.msra.mxu0 0.0
    %149 = vmatprep.subr.mxu0 0.0
    %150 = vmatpush2.msra.mxu0 0.0
    %151 = vmatprep.subr.mxu0 0.0
    %152 = vmatpush2.msra.mxu0 0.0
    %153 = vmatprep.subr.mxu0 0.0
    %154 = vmatpush2.msra.mxu0 0.0
    %155 = vmatprep.subr.mxu0 0.0
    %156 = vmatpush2.msra.mxu0 0.0
    %157 = vmatprep.subr.mxu0 0.0
    %158 = vmatpush2.msra.mxu0 0.0
    %159 = vmatprep.subr.mxu0 0.0
    %160 = vmatpush2.msra.mxu0 0.0
    %161 = vmatprep.subr.mxu0 0.0
    %162 = vmatpush2.msra.mxu0 0.0
    %163 = vmatprep.subr.mxu0 0.0
    %164 = vmatpush2.msra.mxu0 0.0
    %165 = vmatprep.subr.mxu0 0.0
    %166 = vmatpush2.msra.mxu0 0.0
    %167 = vmatprep.subr.mxu0 0.0
    %168 = vmatpush2.msra.mxu0 0.0
    %169 = vmatprep.subr.mxu0 0.0
    %170 = vmatpush2.msra.mxu0 0.0
    %171 = vmatprep.mubr.f32.mxu0 0.0
    %v172 = vand.u32 %v25, 4294901760
    %v173 = vsub.f32 %v25, %v172
    %v174 = vand.u32 %v173, 4294901760
    %v175 = vsub.f32 %v173, %v174
    %v176 = vand.u32 %v175, 4294901760
    %177 = vmatmul.mubr.f32.gmra.mxu0 %v176
    %v178 = vpop.f32.mrf.mxu0
    %v179 = vadd.f32 0.0, %v178
    %v180 = vpop.f32.mrf.mxu0
    %181 = vmatprep.mubr.f32.mxu0 0.0
    %v182 = vand.u32 %v26, 4294901760
    %v183 = vsub.f32 %v26, %v182
    %v184 = vand.u32 %v183, 4294901760
    %v185 = vsub.f32 %v183, %v184
    %v186 = vand.u32 %v185, 4294901760
    %187 = vmatmul.mubr.f32.gmra.mxu0 %v186
    %v188 = vpop.f32.mrf.mxu0
    %v189 = vadd.f32 0.0, %v188
    %v190 = vpop.f32.mrf.mxu0
    %191 = vmatprep.mubr.f32.mxu0 0.0
    %v192 = vand.u32 %v27, 4294901760
    %v193 = vsub.f32 %v27, %v192
    %v194 = vand.u32 %v193, 4294901760
    %v195 = vsub.f32 %v193, %v194
    %v196 = vand.u32 %v195, 4294901760
    %197 = vmatmul.mubr.f32.gmra.mxu0 %v196
    %v198 = vpop.f32.mrf.mxu0
    %v199 = vadd.f32 0.0, %v198
    %v200 = vpop.f32.mrf.mxu0
    %201 = vmatprep.mubr.f32.mxu0 0.0
    %v202 = vand.u32 %v28, 4294901760
    %v203 = vsub.f32 %v28, %v202
    %v204 = vand.u32 %v203, 4294901760
    %v205 = vsub.f32 %v203, %v204
    %v206 = vand.u32 %v205, 4294901760
    %207 = vmatmul.mubr.f32.gmra.mxu0 %v206
    %v208 = vpop.f32.mrf.mxu0
    %v209 = vadd.f32 0.0, %v208
    %v210 = vpop.f32.mrf.mxu0
    %211 = vmatprep.mubr.f32.mxu0 0.0
    %v212 = vand.u32 %v29, 4294901760
    %v213 = vsub.f32 %v29, %v212
    %v214 = vand.u32 %v213, 4294901760
    %v215 = vsub.f32 %v213, %v214
    %v216 = vand.u32 %v215, 4294901760
    %217 = vmatmul.mubr.f32.gmra.mxu0 %v216
    %v218 = vpop.f32.mrf.mxu0
    %v219 = vadd.f32 0.0, %v218
    %v220 = vpop.f32.mrf.mxu0
    %221 = vmatprep.mubr.f32.mxu0 0.0
    %v222 = vand.u32 %v30, 4294901760
    %v223 = vsub.f32 %v30, %v222
    %v224 = vand.u32 %v223, 4294901760
    %v225 = vsub.f32 %v223, %v224
    %v226 = vand.u32 %v225, 4294901760
    %227 = vmatmul.mubr.f32.gmra.mxu0 %v226
    %v228 = vpop.f32.mrf.mxu0
    %v229 = vadd.f32 0.0, %v228
    %v230 = vpop.f32.mrf.mxu0
    %231 = vmatprep.mubr.f32.mxu0 0.0
    %v232 = vand.u32 %v31, 4294901760
    %v233 = vsub.f32 %v31, %v232
    %v234 = vand.u32 %v233, 4294901760
    %v235 = vsub.f32 %v233, %v234
    %v236 = vand.u32 %v235, 4294901760
    %237 = vmatmul.mubr.f32.gmra.mxu0 %v236
    %v238 = vpop.f32.mrf.mxu0
    %v239 = vadd.f32 0.0, %v238
    %v240 = vpop.f32.mrf.mxu0
    %241 = vmatprep.mubr.f32.mxu0 0.0
    %v242 = vand.u32 %v32, 4294901760
    %v243 = vsub.f32 %v32, %v242
    %v244 = vand.u32 %v243, 4294901760
    %v245 = vsub.f32 %v243, %v244
    %v246 = vand.u32 %v245, 4294901760
    %247 = vmatmul.mubr.f32.gmra.mxu0 %v246
    %v248 = vpop.f32.mrf.mxu0
    %v249 = vadd.f32 0.0, %v248
    %v250 = vpop.f32.mrf.mxu0
    %251 = vmatprep.mubr.f32.mxu0 0.0
    %v252 = vand.u32 %v33, 4294901760
    %v253 = vsub.f32 %v33, %v252
    %v254 = vand.u32 %v253, 4294901760
    %v255 = vsub.f32 %v253, %v254
    %v256 = vand.u32 %v255, 4294901760
    %257 = vmatmul.mubr.f32.gmra.mxu0 %v256
    %v258 = vpop.f32.mrf.mxu0
    %v259 = vadd.f32 0.0, %v258
    %v260 = vpop.f32.mrf.mxu0
    %261 = vmatprep.mubr.f32.mxu0 0.0
    %v262 = vand.u32 %v34, 4294901760
    %v263 = vsub.f32 %v34, %v262
    %v264 = vand.u32 %v263, 4294901760
    %v265 = vsub.f32 %v263, %v264
    %v266 = vand.u32 %v265, 4294901760
    %267 = vmatmul.mubr.f32.gmra.mxu0 %v266
    %v268 = vpop.f32.mrf.mxu0
    %v269 = vadd.f32 0.0, %v268
    %v270 = vpop.f32.mrf.mxu0
    %271 = vmatprep.mubr.f32.mxu0 0.0
    %v272 = vand.u32 %v35, 4294901760
    %v273 = vsub.f32 %v35, %v272
    %v274 = vand.u32 %v273, 4294901760
    %v275 = vsub.f32 %v273, %v274
    %v276 = vand.u32 %v275, 4294901760
    %277 = vmatmul.mubr.f32.gmra.mxu0 %v276
    %v278 = vpop.f32.mrf.mxu0
    %v279 = vadd.f32 0.0, %v278
    %v280 = vpop.f32.mrf.mxu0
    %281 = vmatprep.mubr.f32.mxu0 0.0
    %v282 = vand.u32 %v36, 4294901760
    %v283 = vsub.f32 %v36, %v282
    %v284 = vand.u32 %v283, 4294901760
    %v285 = vsub.f32 %v283, %v284
    %v286 = vand.u32 %v285, 4294901760
    %287 = vmatmul.mubr.f32.gmra.mxu0 %v286
    %v288 = vpop.f32.mrf.mxu0
    %v289 = vadd.f32 0.0, %v288
    %v290 = vpop.f32.mrf.mxu0
    %291 = vmatprep.mubr.f32.mxu0 0.0
    %v292 = vand.u32 %v37, 4294901760
    %v293 = vsub.f32 %v37, %v292
    %v294 = vand.u32 %v293, 4294901760
    %v295 = vsub.f32 %v293, %v294
    %v296 = vand.u32 %v295, 4294901760
    %297 = vmatmul.mubr.f32.gmra.mxu0 %v296
    %v298 = vpop.f32.mrf.mxu0
    %v299 = vadd.f32 0.0, %v298
    %v300 = vpop.f32.mrf.mxu0
    %301 = vmatprep.mubr.f32.mxu0 0.0
    %v302 = vand.u32 %v38, 4294901760
    %v303 = vsub.f32 %v38, %v302
    %v304 = vand.u32 %v303, 4294901760
    %v305 = vsub.f32 %v303, %v304
    %v306 = vand.u32 %v305, 4294901760
    %307 = vmatmul.mubr.f32.gmra.mxu0 %v306
    %v308 = vpop.f32.mrf.mxu0
    %v309 = vadd.f32 0.0, %v308
    %v310 = vpop.f32.mrf.mxu0
    %311 = vmatprep.mubr.f32.mxu0 0.0
    %v312 = vand.u32 %v39, 4294901760
    %v313 = vsub.f32 %v39, %v312
    %v314 = vand.u32 %v313, 4294901760
    %v315 = vsub.f32 %v313, %v314
    %v316 = vand.u32 %v315, 4294901760
    %317 = vmatmul.mubr.f32.gmra.mxu0 %v316
    %v318 = vpop.f32.mrf.mxu0
    %v319 = vadd.f32 0.0, %v318
    %v320 = vpop.f32.mrf.mxu0
    %321 = vmatprep.mubr.f32.mxu0 0.0
    %v322 = vand.u32 %v40, 4294901760
    %v323 = vsub.f32 %v40, %v322
    %v324 = vand.u32 %v323, 4294901760
    %v325 = vsub.f32 %v323, %v324
    %v326 = vand.u32 %v325, 4294901760
    %327 = vmatmul.mubr.f32.gmra.mxu0 %v326
    %v328 = vpop.f32.mrf.mxu0
    %v329 = vadd.f32 0.0, %v328
    %v330 = vpop.f32.mrf.mxu0
    %331 = vdwg.mxu0
    %332 = vmatprep.subr.mxu0 0.0
    %v333 = vand.u32 %v72, 4294901760
    %v334 = vsub.f32 %v72, %v333
    %v335 = vand.u32 %v334, 4294901760
    %v336 = vsub.f32 %v334, %v335
    %v337 = vand.u32 %v336, 4294901760
    %338 = vmatpush1.msra.mxu0 %v337
    %339 = vmatprep.subr.mxu0 0.0
    %v340 = vand.u32 %v71, 4294901760
    %v341 = vsub.f32 %v71, %v340
    %v342 = vand.u32 %v341, 4294901760
    %v343 = vsub.f32 %v341, %v342
    %v344 = vand.u32 %v343, 4294901760
    %345 = vmatpush1.msra.mxu0 %v344
    %346 = vmatprep.subr.mxu0 0.0
    %v347 = vand.u32 %v70, 4294901760
    %v348 = vsub.f32 %v70, %v347
    %v349 = vand.u32 %v348, 4294901760
    %v350 = vsub.f32 %v348, %v349
    %v351 = vand.u32 %v350, 4294901760
    %352 = vmatpush1.msra.mxu0 %v351
    %353 = vmatprep.subr.mxu0 0.0
    %v354 = vand.u32 %v69, 4294901760
    %v355 = vsub.f32 %v69, %v354
    %v356 = vand.u32 %v355, 4294901760
    %v357 = vsub.f32 %v355, %v356
    %v358 = vand.u32 %v357, 4294901760
    %359 = vmatpush1.msra.mxu0 %v358
    %360 = vmatprep.subr.mxu0 0.0
    %v361 = vand.u32 %v68, 4294901760
    %v362 = vsub.f32 %v68, %v361
    %v363 = vand.u32 %v362, 4294901760
    %v364 = vsub.f32 %v362, %v363
    %v365 = vand.u32 %v364, 4294901760
    %366 = vmatpush1.msra.mxu0 %v365
    %367 = vmatprep.subr.mxu0 0.0
    %v368 = vand.u32 %v67, 4294901760
    %v369 = vsub.f32 %v67, %v368
    %v370 = vand.u32 %v369, 4294901760
    %v371 = vsub.f32 %v369, %v370
    %v372 = vand.u32 %v371, 4294901760
    %373 = vmatpush1.msra.mxu0 %v372
    %374 = vmatprep.subr.mxu0 0.0
    %v375 = vand.u32 %v66, 4294901760
    %v376 = vsub.f32 %v66, %v375
    %v377 = vand.u32 %v376, 4294901760
    %v378 = vsub.f32 %v376, %v377
    %v379 = vand.u32 %v378, 4294901760
    %380 = vmatpush1.msra.mxu0 %v379
    %381 = vmatprep.subr.mxu0 0.0
    %v382 = vand.u32 %v65, 4294901760
    %v383 = vsub.f32 %v65, %v382
    %v384 = vand.u32 %v383, 4294901760
    %v385 = vsub.f32 %v383, %v384
    %v386 = vand.u32 %v385, 4294901760
    %387 = vmatpush1.msra.mxu0 %v386
    %388 = vmatprep.subr.mxu0 0.0
    %v389 = vand.u32 %v64, 4294901760
    %v390 = vsub.f32 %v64, %v389
    %v391 = vand.u32 %v390, 4294901760
    %v392 = vsub.f32 %v390, %v391
    %v393 = vand.u32 %v392, 4294901760
    %394 = vmatpush1.msra.mxu0 %v393
    %395 = vmatprep.subr.mxu0 0.0
    %v396 = vand.u32 %v63, 4294901760
    %v397 = vsub.f32 %v63, %v396
    %v398 = vand.u32 %v397, 4294901760
    %v399 = vsub.f32 %v397, %v398
    %v400 = vand.u32 %v399, 4294901760
    %401 = vmatpush1.msra.mxu0 %v400
    %402 = vmatprep.subr.mxu0 0.0
    %v403 = vand.u32 %v62, 4294901760
    %v404 = vsub.f32 %v62, %v403
    %v405 = vand.u32 %v404, 4294901760
    %v406 = vsub.f32 %v404, %v405
    %v407 = vand.u32 %v406, 4294901760
    %408 = vmatpush1.msra.mxu0 %v407
    %409 = vmatprep.subr.mxu0 0.0
    %v410 = vand.u32 %v61, 4294901760
    %v411 = vsub.f32 %v61, %v410
    %v412 = vand.u32 %v411, 4294901760
    %v413 = vsub.f32 %v411, %v412
    %v414 = vand.u32 %v413, 4294901760
    %415 = vmatpush1.msra.mxu0 %v414
    %416 = vmatprep.subr.mxu0 0.0
    %v417 = vand.u32 %v60, 4294901760
    %v418 = vsub.f32 %v60, %v417
    %v419 = vand.u32 %v418, 4294901760
    %v420 = vsub.f32 %v418, %v419
    %v421 = vand.u32 %v420, 4294901760
    %422 = vmatpush1.msra.mxu0 %v421
    %423 = vmatprep.subr.mxu0 0.0
    %v424 = vand.u32 %v59, 4294901760
    %v425 = vsub.f32 %v59, %v424
    %v426 = vand.u32 %v425, 4294901760
    %v427 = vsub.f32 %v425, %v426
    %v428 = vand.u32 %v427, 4294901760
    %429 = vmatpush1.msra.mxu0 %v428
    %430 = vmatprep.subr.mxu0 0.0
    %v431 = vand.u32 %v58, 4294901760
    %v432 = vsub.f32 %v58, %v431
    %v433 = vand.u32 %v432, 4294901760
    %v434 = vsub.f32 %v432, %v433
    %v435 = vand.u32 %v434, 4294901760
    %436 = vmatpush1.msra.mxu0 %v435
    %437 = vmatprep.subr.mxu0 0.0
    %v438 = vand.u32 %v57, 4294901760
    %v439 = vsub.f32 %v57, %v438
    %v440 = vand.u32 %v439, 4294901760
    %v441 = vsub.f32 %v439, %v440
    %v442 = vand.u32 %v441, 4294901760
    %443 = vmatpush1.msra.mxu0 %v442
    %444 = vmatprep.subr.mxu0 0.0
    %445 = vmatpush2.msra.mxu0 0.0
    %446 = vmatprep.subr.mxu0 0.0
    %447 = vmatpush2.msra.mxu0 0.0
    %448 = vmatprep.subr.mxu0 0.0
    %449 = vmatpush2.msra.mxu0 0.0
    %450 = vmatprep.subr.mxu0 0.0
    %451 = vmatpush2.msra.mxu0 0.0
    %452 = vmatprep.subr.mxu0 0.0
    %453 = vmatpush2.msra.mxu0 0.0
    %454 = vmatprep.subr.mxu0 0.0
    %455 = vmatpush2.msra.mxu0 0.0
    %456 = vmatprep.subr.mxu0 0.0
    %457 = vmatpush2.msra.mxu0 0.0
    %458 = vmatprep.subr.mxu0 0.0
    %459 = vmatpush2.msra.mxu0 0.0
    %460 = vmatprep.subr.mxu0 0.0
    %461 = vmatpush2.msra.mxu0 0.0
    %462 = vmatprep.subr.mxu0 0.0
    %463 = vmatpush2.msra.mxu0 0.0
    %464 = vmatprep.subr.mxu0 0.0
    %465 = vmatpush2.msra.mxu0 0.0
    %466 = vmatprep.subr.mxu0 0.0
    %467 = vmatpush2.msra.mxu0 0.0
    %468 = vmatprep.subr.mxu0 0.0
    %469 = vmatpush2.msra.mxu0 0.0
    %470 = vmatprep.subr.mxu0 0.0
    %471 = vmatpush2.msra.mxu0 0.0
    %472 = vmatprep.subr.mxu0 0.0
    %473 = vmatpush2.msra.mxu0 0.0
    %474 = vmatprep.subr.mxu0 0.0
    %475 = vmatpush2.msra.mxu0 0.0
    %476 = vmatprep.mubr.f32.mxu0 0.0
    %v477 = vand.u32 %v25, 4294901760
    %478 = vmatmul.mubr.f32.gmra.mxu0 %v477
    %v479 = vpop.f32.mrf.mxu0
    %v480 = vadd.f32 %v179, %v479
    %v481 = vpop.f32.mrf.mxu0
    %482 = vmatprep.mubr.f32.mxu0 0.0
    %v483 = vand.u32 %v26, 4294901760
    %484 = vmatmul.mubr.f32.gmra.mxu0 %v483
    %v485 = vpop.f32.mrf.mxu0
    %v486 = vadd.f32 %v189, %v485
    %v487 = vpop.f32.mrf.mxu0
    %488 = vmatprep.mubr.f32.mxu0 0.0
    %v489 = vand.u32 %v27, 4294901760
    %490 = vmatmul.mubr.f32.gmra.mxu0 %v489
    %v491 = vpop.f32.mrf.mxu0
    %v492 = vadd.f32 %v199, %v491
    %v493 = vpop.f32.mrf.mxu0
    %494 = vmatprep.mubr.f32.mxu0 0.0
    %v495 = vand.u32 %v28, 4294901760
    %496 = vmatmul.mubr.f32.gmra.mxu0 %v495
    %v497 = vpop.f32.mrf.mxu0
    %v498 = vadd.f32 %v209, %v497
    %v499 = vpop.f32.mrf.mxu0
    %500 = vmatprep.mubr.f32.mxu0 0.0
    %v501 = vand.u32 %v29, 4294901760
    %502 = vmatmul.mubr.f32.gmra.mxu0 %v501
    %v503 = vpop.f32.mrf.mxu0
    %v504 = vadd.f32 %v219, %v503
    %v505 = vpop.f32.mrf.mxu0
    %506 = vmatprep.mubr.f32.mxu0 0.0
    %v507 = vand.u32 %v30, 4294901760
    %508 = vmatmul.mubr.f32.gmra.mxu0 %v507
    %v509 = vpop.f32.mrf.mxu0
    %v510 = vadd.f32 %v229, %v509
    %v511 = vpop.f32.mrf.mxu0
    %512 = vmatprep.mubr.f32.mxu0 0.0
    %v513 = vand.u32 %v31, 4294901760
    %514 = vmatmul.mubr.f32.gmra.mxu0 %v513
    %v515 = vpop.f32.mrf.mxu0
    %v516 = vadd.f32 %v239, %v515
    %v517 = vpop.f32.mrf.mxu0
    %518 = vmatprep.mubr.f32.mxu0 0.0
    %v519 = vand.u32 %v32, 4294901760
    %520 = vmatmul.mubr.f32.gmra.mxu0 %v519
    %v521 = vpop.f32.mrf.mxu0
    %v522 = vadd.f32 %v249, %v521
    %v523 = vpop.f32.mrf.mxu0
    %524 = vmatprep.mubr.f32.mxu0 0.0
    %v525 = vand.u32 %v33, 4294901760
    %526 = vmatmul.mubr.f32.gmra.mxu0 %v525
    %v527 = vpop.f32.mrf.mxu0
    %v528 = vadd.f32 %v259, %v527
    %v529 = vpop.f32.mrf.mxu0
    %530 = vmatprep.mubr.f32.mxu0 0.0
    %v531 = vand.u32 %v34, 4294901760
    %532 = vmatmul.mubr.f32.gmra.mxu0 %v531
    %v533 = vpop.f32.mrf.mxu0
    %v534 = vadd.f32 %v269, %v533
    %v535 = vpop.f32.mrf.mxu0
    %536 = vmatprep.mubr.f32.mxu0 0.0
    %v537 = vand.u32 %v35, 4294901760
    %538 = vmatmul.mubr.f32.gmra.mxu0 %v537
    %v539 = vpop.f32.mrf.mxu0
    %v540 = vadd.f32 %v279, %v539
    %v541 = vpop.f32.mrf.mxu0
    %542 = vmatprep.mubr.f32.mxu0 0.0
    %v543 = vand.u32 %v36, 4294901760
    %544 = vmatmul.mubr.f32.gmra.mxu0 %v543
    %v545 = vpop.f32.mrf.mxu0
    %v546 = vadd.f32 %v289, %v545
    %v547 = vpop.f32.mrf.mxu0
    %548 = vmatprep.mubr.f32.mxu0 0.0
    %v549 = vand.u32 %v37, 4294901760
    %550 = vmatmul.mubr.f32.gmra.mxu0 %v549
    %v551 = vpop.f32.mrf.mxu0
    %v552 = vadd.f32 %v299, %v551
    %v553 = vpop.f32.mrf.mxu0
    %554 = vmatprep.mubr.f32.mxu0 0.0
    %v555 = vand.u32 %v38, 4294901760
    %556 = vmatmul.mubr.f32.gmra.mxu0 %v555
    %v557 = vpop.f32.mrf.mxu0
    %v558 = vadd.f32 %v309, %v557
    %v559 = vpop.f32.mrf.mxu0
    %560 = vmatprep.mubr.f32.mxu0 0.0
    %v561 = vand.u32 %v39, 4294901760
    %562 = vmatmul.mubr.f32.gmra.mxu0 %v561
    %v563 = vpop.f32.mrf.mxu0
    %v564 = vadd.f32 %v319, %v563
    %v565 = vpop.f32.mrf.mxu0
    %566 = vmatprep.mubr.f32.mxu0 0.0
    %v567 = vand.u32 %v40, 4294901760
    %568 = vmatmul.mubr.f32.gmra.mxu0 %v567
    %v569 = vpop.f32.mrf.mxu0
    %v570 = vadd.f32 %v329, %v569
    %v571 = vpop.f32.mrf.mxu0
    %572 = vdwg.mxu0
    %573 = vmatprep.subr.mxu0 0.0
    %v574 = vand.u32 %v72, 4294901760
    %v575 = vsub.f32 %v72, %v574
    %576 = vmatpush1.msra.mxu0 %v575
    %577 = vmatprep.subr.mxu0 0.0
    %v578 = vand.u32 %v71, 4294901760
    %v579 = vsub.f32 %v71, %v578
    %580 = vmatpush1.msra.mxu0 %v579
    %581 = vmatprep.subr.mxu0 0.0
    %v582 = vand.u32 %v70, 4294901760
    %v583 = vsub.f32 %v70, %v582
    %584 = vmatpush1.msra.mxu0 %v583
    %585 = vmatprep.subr.mxu0 0.0
    %v586 = vand.u32 %v69, 4294901760
    %v587 = vsub.f32 %v69, %v586
    %588 = vmatpush1.msra.mxu0 %v587
    %589 = vmatprep.subr.mxu0 0.0
    %v590 = vand.u32 %v68, 4294901760
    %v591 = vsub.f32 %v68, %v590
    %592 = vmatpush1.msra.mxu0 %v591
    %593 = vmatprep.subr.mxu0 0.0
    %v594 = vand.u32 %v67, 4294901760
    %v595 = vsub.f32 %v67, %v594
    %596 = vmatpush1.msra.mxu0 %v595
    %597 = vmatprep.subr.mxu0 0.0
    %v598 = vand.u32 %v66, 4294901760
    %v599 = vsub.f32 %v66, %v598
    %600 = vmatpush1.msra.mxu0 %v599
    %601 = vmatprep.subr.mxu0 0.0
    %v602 = vand.u32 %v65, 4294901760
    %v603 = vsub.f32 %v65, %v602
    %604 = vmatpush1.msra.mxu0 %v603
    %605 = vmatprep.subr.mxu0 0.0
    %v606 = vand.u32 %v64, 4294901760
    %v607 = vsub.f32 %v64, %v606
    %608 = vmatpush1.msra.mxu0 %v607
    %609 = vmatprep.subr.mxu0 0.0
    %v610 = vand.u32 %v63, 4294901760
    %v611 = vsub.f32 %v63, %v610
    %612 = vmatpush1.msra.mxu0 %v611
    %613 = vmatprep.subr.mxu0 0.0
    %v614 = vand.u32 %v62, 4294901760
    %v615 = vsub.f32 %v62, %v614
    %616 = vmatpush1.msra.mxu0 %v615
    %617 = vmatprep.subr.mxu0 0.0
    %v618 = vand.u32 %v61, 4294901760
    %v619 = vsub.f32 %v61, %v618
    %620 = vmatpush1.msra.mxu0 %v619
    %621 = vmatprep.subr.mxu0 0.0
    %v622 = vand.u32 %v60, 4294901760
    %v623 = vsub.f32 %v60, %v622
    %624 = vmatpush1.msra.mxu0 %v623
    %625 = vmatprep.subr.mxu0 0.0
    %v626 = vand.u32 %v59, 4294901760
    %v627 = vsub.f32 %v59, %v626
    %628 = vmatpush1.msra.mxu0 %v627
    %629 = vmatprep.subr.mxu0 0.0
    %v630 = vand.u32 %v58, 4294901760
    %v631 = vsub.f32 %v58, %v630
    %632 = vmatpush1.msra.mxu0 %v631
    %633 = vmatprep.subr.mxu0 0.0
    %v634 = vand.u32 %v57, 4294901760
    %v635 = vsub.f32 %v57, %v634
    %636 = vmatpush1.msra.mxu0 %v635
    %637 = vmatprep.subr.mxu0 0.0
    %638 = vmatpush2.msra.mxu0 0.0
    %639 = vmatprep.subr.mxu0 0.0
    %640 = vmatpush2.msra.mxu0 0.0
    %641 = vmatprep.subr.mxu0 0.0
    %642 = vmatpush2.msra.mxu0 0.0
    %643 = vmatprep.subr.mxu0 0.0
    %644 = vmatpush2.msra.mxu0 0.0
    %645 = vmatprep.subr.mxu0 0.0
    %646 = vmatpush2.msra.mxu0 0.0
    %647 = vmatprep.subr.mxu0 0.0
    %648 = vmatpush2.msra.mxu0 0.0
    %649 = vmatprep.subr.mxu0 0.0
    %650 = vmatpush2.msra.mxu0 0.0
    %651 = vmatprep.subr.mxu0 0.0
    %652 = vmatpush2.msra.mxu0 0.0
    %653 = vmatprep.subr.mxu0 0.0
    %654 = vmatpush2.msra.mxu0 0.0
    %655 = vmatprep.subr.mxu0 0.0
    %656 = vmatpush2.msra.mxu0 0.0
    %657 = vmatprep.subr.mxu0 0.0
    %658 = vmatpush2.msra.mxu0 0.0
    %659 = vmatprep.subr.mxu0 0.0
    %660 = vmatpush2.msra.mxu0 0.0
    %661 = vmatprep.subr.mxu0 0.0
    %662 = vmatpush2.msra.mxu0 0.0
    %663 = vmatprep.subr.mxu0 0.0
    %664 = vmatpush2.msra.mxu0 0.0
    %665 = vmatprep.subr.mxu0 0.0
    %666 = vmatpush2.msra.mxu0 0.0
    %667 = vmatprep.subr.mxu0 0.0
    %668 = vmatpush2.msra.mxu0 0.0
    %669 = vmatprep.mubr.f32.mxu0 0.0
    %v670 = vand.u32 %v25, 4294901760
    %v671 = vsub.f32 %v25, %v670
    %672 = vmatmul.mubr.f32.gmra.mxu0 %v671
    %v673 = vpop.f32.mrf.mxu0
    %v674 = vadd.f32 %v480, %v673
    %v675 = vpop.f32.mrf.mxu0
    %676 = vmatprep.mubr.f32.mxu0 0.0
    %v677 = vand.u32 %v26, 4294901760
    %v678 = vsub.f32 %v26, %v677
    %679 = vmatmul.mubr.f32.gmra.mxu0 %v678
    %v680 = vpop.f32.mrf.mxu0
    %v681 = vadd.f32 %v486, %v680
    %v682 = vpop.f32.mrf.mxu0
    %683 = vmatprep.mubr.f32.mxu0 0.0
    %v684 = vand.u32 %v27, 4294901760
    %v685 = vsub.f32 %v27, %v684
    %686 = vmatmul.mubr.f32.gmra.mxu0 %v685
    %v687 = vpop.f32.mrf.mxu0
    %v688 = vadd.f32 %v492, %v687
    %v689 = vpop.f32.mrf.mxu0
    %690 = vmatprep.mubr.f32.mxu0 0.0
    %v691 = vand.u32 %v28, 4294901760
    %v692 = vsub.f32 %v28, %v691
    %693 = vmatmul.mubr.f32.gmra.mxu0 %v692
    %v694 = vpop.f32.mrf.mxu0
    %v695 = vadd.f32 %v498, %v694
    %v696 = vpop.f32.mrf.mxu0
    %697 = vmatprep.mubr.f32.mxu0 0.0
    %v698 = vand.u32 %v29, 4294901760
    %v699 = vsub.f32 %v29, %v698
    %700 = vmatmul.mubr.f32.gmra.mxu0 %v699
    %v701 = vpop.f32.mrf.mxu0
    %v702 = vadd.f32 %v504, %v701
    %v703 = vpop.f32.mrf.mxu0
    %704 = vmatprep.mubr.f32.mxu0 0.0
    %v705 = vand.u32 %v30, 4294901760
    %v706 = vsub.f32 %v30, %v705
    %707 = vmatmul.mubr.f32.gmra.mxu0 %v706
    %v708 = vpop.f32.mrf.mxu0
    %v709 = vadd.f32 %v510, %v708
    %v710 = vpop.f32.mrf.mxu0
    %711 = vmatprep.mubr.f32.mxu0 0.0
    %v712 = vand.u32 %v31, 4294901760
    %v713 = vsub.f32 %v31, %v712
    %714 = vmatmul.mubr.f32.gmra.mxu0 %v713
    %v715 = vpop.f32.mrf.mxu0
    %v716 = vadd.f32 %v516, %v715
    %v717 = vpop.f32.mrf.mxu0
    %718 = vmatprep.mubr.f32.mxu0 0.0
    %v719 = vand.u32 %v32, 4294901760
    %v720 = vsub.f32 %v32, %v719
    %721 = vmatmul.mubr.f32.gmra.mxu0 %v720
    %v722 = vpop.f32.mrf.mxu0
    %v723 = vadd.f32 %v522, %v722
    %v724 = vpop.f32.mrf.mxu0
    %725 = vmatprep.mubr.f32.mxu0 0.0
    %v726 = vand.u32 %v33, 4294901760
    %v727 = vsub.f32 %v33, %v726
    %728 = vmatmul.mubr.f32.gmra.mxu0 %v727
    %v729 = vpop.f32.mrf.mxu0
    %v730 = vadd.f32 %v528, %v729
    %v731 = vpop.f32.mrf.mxu0
    %732 = vmatprep.mubr.f32.mxu0 0.0
    %v733 = vand.u32 %v34, 4294901760
    %v734 = vsub.f32 %v34, %v733
    %735 = vmatmul.mubr.f32.gmra.mxu0 %v734
    %v736 = vpop.f32.mrf.mxu0
    %v737 = vadd.f32 %v534, %v736
    %v738 = vpop.f32.mrf.mxu0
    %739 = vmatprep.mubr.f32.mxu0 0.0
    %v740 = vand.u32 %v35, 4294901760
    %v741 = vsub.f32 %v35, %v740
    %742 = vmatmul.mubr.f32.gmra.mxu0 %v741
    %v743 = vpop.f32.mrf.mxu0
    %v744 = vadd.f32 %v540, %v743
    %v745 = vpop.f32.mrf.mxu0
    %746 = vmatprep.mubr.f32.mxu0 0.0
    %v747 = vand.u32 %v36, 4294901760
    %v748 = vsub.f32 %v36, %v747
    %749 = vmatmul.mubr.f32.gmra.mxu0 %v748
    %v750 = vpop.f32.mrf.mxu0
    %v751 = vadd.f32 %v546, %v750
    %v752 = vpop.f32.mrf.mxu0
    %753 = vmatprep.mubr.f32.mxu0 0.0
    %v754 = vand.u32 %v37, 4294901760
    %v755 = vsub.f32 %v37, %v754
    %756 = vmatmul.mubr.f32.gmra.mxu0 %v755
    %v757 = vpop.f32.mrf.mxu0
    %v758 = vadd.f32 %v552, %v757
    %v759 = vpop.f32.mrf.mxu0
    %760 = vmatprep.mubr.f32.mxu0 0.0
    %v761 = vand.u32 %v38, 4294901760
    %v762 = vsub.f32 %v38, %v761
    %763 = vmatmul.mubr.f32.gmra.mxu0 %v762
    %v764 = vpop.f32.mrf.mxu0
    %v765 = vadd.f32 %v558, %v764
    %v766 = vpop.f32.mrf.mxu0
    %767 = vmatprep.mubr.f32.mxu0 0.0
    %v768 = vand.u32 %v39, 4294901760
    %v769 = vsub.f32 %v39, %v768
    %770 = vmatmul.mubr.f32.gmra.mxu0 %v769
    %v771 = vpop.f32.mrf.mxu0
    %v772 = vadd.f32 %v564, %v771
    %v773 = vpop.f32.mrf.mxu0
    %774 = vmatprep.mubr.f32.mxu0 0.0
    %v775 = vand.u32 %v40, 4294901760
    %v776 = vsub.f32 %v40, %v775
    %777 = vmatmul.mubr.f32.gmra.mxu0 %v776
    %v778 = vpop.f32.mrf.mxu0
    %v779 = vadd.f32 %v570, %v778
    %v780 = vpop.f32.mrf.mxu0
    %781 = vdwg.mxu0
    %782 = vmatprep.subr.mxu0 0.0
    %v783 = vand.u32 %v72, 4294901760
    %784 = vmatpush1.msra.mxu0 %v783
    %785 = vmatprep.subr.mxu0 0.0
    %v786 = vand.u32 %v71, 4294901760
    %787 = vmatpush1.msra.mxu0 %v786
    %788 = vmatprep.subr.mxu0 0.0
    %v789 = vand.u32 %v70, 4294901760
    %790 = vmatpush1.msra.mxu0 %v789
    %791 = vmatprep.subr.mxu0 0.0
    %v792 = vand.u32 %v69, 4294901760
    %793 = vmatpush1.msra.mxu0 %v792
    %794 = vmatprep.subr.mxu0 0.0
    %v795 = vand.u32 %v68, 4294901760
    %796 = vmatpush1.msra.mxu0 %v795
    %797 = vmatprep.subr.mxu0 0.0
    %v798 = vand.u32 %v67, 4294901760
    %799 = vmatpush1.msra.mxu0 %v798
    %800 = vmatprep.subr.mxu0 0.0
    %v801 = vand.u32 %v66, 4294901760
    %802 = vmatpush1.msra.mxu0 %v801
    %803 = vmatprep.subr.mxu0 0.0
    %v804 = vand.u32 %v65, 4294901760
    %805 = vmatpush1.msra.mxu0 %v804
    %806 = vmatprep.subr.mxu0 0.0
    %v807 = vand.u32 %v64, 4294901760
    %808 = vmatpush1.msra.mxu0 %v807
    %809 = vmatprep.subr.mxu0 0.0
    %v810 = vand.u32 %v63, 4294901760
    %811 = vmatpush1.msra.mxu0 %v810
    %812 = vmatprep.subr.mxu0 0.0
    %v813 = vand.u32 %v62, 4294901760
    %814 = vmatpush1.msra.mxu0 %v813
    %815 = vmatprep.subr.mxu0 0.0
    %v816 = vand.u32 %v61, 4294901760
    %817 = vmatpush1.msra.mxu0 %v816
    %818 = vmatprep.subr.mxu0 0.0
    %v819 = vand.u32 %v60, 4294901760
    %820 = vmatpush1.msra.mxu0 %v819
    %821 = vmatprep.subr.mxu0 0.0
    %v822 = vand.u32 %v59, 4294901760
    %823 = vmatpush1.msra.mxu0 %v822
    %824 = vmatprep.subr.mxu0 0.0
    %v825 = vand.u32 %v58, 4294901760
    %826 = vmatpush1.msra.mxu0 %v825
    %827 = vmatprep.subr.mxu0 0.0
    %v828 = vand.u32 %v57, 4294901760
    %829 = vmatpush1.msra.mxu0 %v828
    %830 = vmatprep.subr.mxu0 0.0
    %831 = vmatpush2.msra.mxu0 0.0
    %832 = vmatprep.subr.mxu0 0.0
    %833 = vmatpush2.msra.mxu0 0.0
    %834 = vmatprep.subr.mxu0 0.0
    %835 = vmatpush2.msra.mxu0 0.0
    %836 = vmatprep.subr.mxu0 0.0
    %837 = vmatpush2.msra.mxu0 0.0
    %838 = vmatprep.subr.mxu0 0.0
    %839 = vmatpush2.msra.mxu0 0.0
    %840 = vmatprep.subr.mxu0 0.0
    %841 = vmatpush2.msra.mxu0 0.0
    %842 = vmatprep.subr.mxu0 0.0
    %843 = vmatpush2.msra.mxu0 0.0
    %844 = vmatprep.subr.mxu0 0.0
    %845 = vmatpush2.msra.mxu0 0.0
    %846 = vmatprep.subr.mxu0 0.0
    %847 = vmatpush2.msra.mxu0 0.0
    %848 = vmatprep.subr.mxu0 0.0
    %849 = vmatpush2.msra.mxu0 0.0
    %850 = vmatprep.subr.mxu0 0.0
    %851 = vmatpush2.msra.mxu0 0.0
    %852 = vmatprep.subr.mxu0 0.0
    %853 = vmatpush2.msra.mxu0 0.0
    %854 = vmatprep.subr.mxu0 0.0
    %855 = vmatpush2.msra.mxu0 0.0
    %856 = vmatprep.subr.mxu0 0.0
    %857 = vmatpush2.msra.mxu0 0.0
    %858 = vmatprep.subr.mxu0 0.0
    %859 = vmatpush2.msra.mxu0 0.0
    %860 = vmatprep.subr.mxu0 0.0
    %861 = vmatpush2.msra.mxu0 0.0
    %862 = vmatprep.mubr.f32.mxu0 0.0
    %v863 = vand.u32 %v25, 4294901760
    %v864 = vsub.f32 %v25, %v863
    %v865 = vand.u32 %v864, 4294901760
    %866 = vmatmul.mubr.f32.gmra.mxu0 %v865
    %v867 = vpop.f32.mrf.mxu0
    %v868 = vadd.f32 %v674, %v867
    %v869 = vpop.f32.mrf.mxu0
    %870 = vmatprep.mubr.f32.mxu0 0.0
    %v871 = vand.u32 %v26, 4294901760
    %v872 = vsub.f32 %v26, %v871
    %v873 = vand.u32 %v872, 4294901760
    %874 = vmatmul.mubr.f32.gmra.mxu0 %v873
    %v875 = vpop.f32.mrf.mxu0
    %v876 = vadd.f32 %v681, %v875
    %v877 = vpop.f32.mrf.mxu0
    %878 = vmatprep.mubr.f32.mxu0 0.0
    %v879 = vand.u32 %v27, 4294901760
    %v880 = vsub.f32 %v27, %v879
    %v881 = vand.u32 %v880, 4294901760
    %882 = vmatmul.mubr.f32.gmra.mxu0 %v881
    %v883 = vpop.f32.mrf.mxu0
    %v884 = vadd.f32 %v688, %v883
    %v885 = vpop.f32.mrf.mxu0
    %886 = vmatprep.mubr.f32.mxu0 0.0
    %v887 = vand.u32 %v28, 4294901760
    %v888 = vsub.f32 %v28, %v887
    %v889 = vand.u32 %v888, 4294901760
    %890 = vmatmul.mubr.f32.gmra.mxu0 %v889
    %v891 = vpop.f32.mrf.mxu0
    %v892 = vadd.f32 %v695, %v891
    %v893 = vpop.f32.mrf.mxu0
    %894 = vmatprep.mubr.f32.mxu0 0.0
    %v895 = vand.u32 %v29, 4294901760
    %v896 = vsub.f32 %v29, %v895
    %v897 = vand.u32 %v896, 4294901760
    %898 = vmatmul.mubr.f32.gmra.mxu0 %v897
    %v899 = vpop.f32.mrf.mxu0
    %v900 = vadd.f32 %v702, %v899
    %v901 = vpop.f32.mrf.mxu0
    %902 = vmatprep.mubr.f32.mxu0 0.0
    %v903 = vand.u32 %v30, 4294901760
    %v904 = vsub.f32 %v30, %v903
    %v905 = vand.u32 %v904, 4294901760
    %906 = vmatmul.mubr.f32.gmra.mxu0 %v905
    %v907 = vpop.f32.mrf.mxu0
    %v908 = vadd.f32 %v709, %v907
    %v909 = vpop.f32.mrf.mxu0
    %910 = vmatprep.mubr.f32.mxu0 0.0
    %v911 = vand.u32 %v31, 4294901760
    %v912 = vsub.f32 %v31, %v911
    %v913 = vand.u32 %v912, 4294901760
    %914 = vmatmul.mubr.f32.gmra.mxu0 %v913
    %v915 = vpop.f32.mrf.mxu0
    %v916 = vadd.f32 %v716, %v915
    %v917 = vpop.f32.mrf.mxu0
    %918 = vmatprep.mubr.f32.mxu0 0.0
    %v919 = vand.u32 %v32, 4294901760
    %v920 = vsub.f32 %v32, %v919
    %v921 = vand.u32 %v920, 4294901760
    %922 = vmatmul.mubr.f32.gmra.mxu0 %v921
    %v923 = vpop.f32.mrf.mxu0
    %v924 = vadd.f32 %v723, %v923
    %v925 = vpop.f32.mrf.mxu0
    %926 = vmatprep.mubr.f32.mxu0 0.0
    %v927 = vand.u32 %v33, 4294901760
    %v928 = vsub.f32 %v33, %v927
    %v929 = vand.u32 %v928, 4294901760
    %930 = vmatmul.mubr.f32.gmra.mxu0 %v929
    %v931 = vpop.f32.mrf.mxu0
    %v932 = vadd.f32 %v730, %v931
    %v933 = vpop.f32.mrf.mxu0
    %934 = vmatprep.mubr.f32.mxu0 0.0
    %v935 = vand.u32 %v34, 4294901760
    %v936 = vsub.f32 %v34, %v935
    %v937 = vand.u32 %v936, 4294901760
    %938 = vmatmul.mubr.f32.gmra.mxu0 %v937
    %v939 = vpop.f32.mrf.mxu0
    %v940 = vadd.f32 %v737, %v939
    %v941 = vpop.f32.mrf.mxu0
    %942 = vmatprep.mubr.f32.mxu0 0.0
    %v943 = vand.u32 %v35, 4294901760
    %v944 = vsub.f32 %v35, %v943
    %v945 = vand.u32 %v944, 4294901760
    %946 = vmatmul.mubr.f32.gmra.mxu0 %v945
    %v947 = vpop.f32.mrf.mxu0
    %v948 = vadd.f32 %v744, %v947
    %v949 = vpop.f32.mrf.mxu0
    %950 = vmatprep.mubr.f32.mxu0 0.0
    %v951 = vand.u32 %v36, 4294901760
    %v952 = vsub.f32 %v36, %v951
    %v953 = vand.u32 %v952, 4294901760
    %954 = vmatmul.mubr.f32.gmra.mxu0 %v953
    %v955 = vpop.f32.mrf.mxu0
    %v956 = vadd.f32 %v751, %v955
    %v957 = vpop.f32.mrf.mxu0
    %958 = vmatprep.mubr.f32.mxu0 0.0
    %v959 = vand.u32 %v37, 4294901760
    %v960 = vsub.f32 %v37, %v959
    %v961 = vand.u32 %v960, 4294901760
    %962 = vmatmul.mubr.f32.gmra.mxu0 %v961
    %v963 = vpop.f32.mrf.mxu0
    %v964 = vadd.f32 %v758, %v963
    %v965 = vpop.f32.mrf.mxu0
    %966 = vmatprep.mubr.f32.mxu0 0.0
    %v967 = vand.u32 %v38, 4294901760
    %v968 = vsub.f32 %v38, %v967
    %v969 = vand.u32 %v968, 4294901760
    %970 = vmatmul.mubr.f32.gmra.mxu0 %v969
    %v971 = vpop.f32.mrf.mxu0
    %v972 = vadd.f32 %v765, %v971
    %v973 = vpop.f32.mrf.mxu0
    %974 = vmatprep.mubr.f32.mxu0 0.0
    %v975 = vand.u32 %v39, 4294901760
    %v976 = vsub.f32 %v39, %v975
    %v977 = vand.u32 %v976, 4294901760
    %978 = vmatmul.mubr.f32.gmra.mxu0 %v977
    %v979 = vpop.f32.mrf.mxu0
    %v980 = vadd.f32 %v772, %v979
    %v981 = vpop.f32.mrf.mxu0
    %982 = vmatprep.mubr.f32.mxu0 0.0
    %v983 = vand.u32 %v40, 4294901760
    %v984 = vsub.f32 %v40, %v983
    %v985 = vand.u32 %v984, 4294901760
    %986 = vmatmul.mubr.f32.gmra.mxu0 %v985
    %v987 = vpop.f32.mrf.mxu0
    %v988 = vadd.f32 %v779, %v987
    %v989 = vpop.f32.mrf.mxu0
    %990 = vdwg.mxu0
    %991 = vmatprep.subr.mxu0 0.0
    %v992 = vand.u32 %v72, 4294901760
    %v993 = vsub.f32 %v72, %v992
    %v994 = vand.u32 %v993, 4294901760
    %995 = vmatpush1.msra.mxu0 %v994
    %996 = vmatprep.subr.mxu0 0.0
    %v997 = vand.u32 %v71, 4294901760
    %v998 = vsub.f32 %v71, %v997
    %v999 = vand.u32 %v998, 4294901760
    %1000 = vmatpush1.msra.mxu0 %v999
    %1001 = vmatprep.subr.mxu0 0.0
    %v1002 = vand.u32 %v70, 4294901760
    %v1003 = vsub.f32 %v70, %v1002
    %v1004 = vand.u32 %v1003, 4294901760
    %1005 = vmatpush1.msra.mxu0 %v1004
    %1006 = vmatprep.subr.mxu0 0.0
    %v1007 = vand.u32 %v69, 4294901760
    %v1008 = vsub.f32 %v69, %v1007
    %v1009 = vand.u32 %v1008, 4294901760
    %1010 = vmatpush1.msra.mxu0 %v1009
    %1011 = vmatprep.subr.mxu0 0.0
    %v1012 = vand.u32 %v68, 4294901760
    %v1013 = vsub.f32 %v68, %v1012
    %v1014 = vand.u32 %v1013, 4294901760
    %1015 = vmatpush1.msra.mxu0 %v1014
    %1016 = vmatprep.subr.mxu0 0.0
    %v1017 = vand.u32 %v67, 4294901760
    %v1018 = vsub.f32 %v67, %v1017
    %v1019 = vand.u32 %v1018, 4294901760
    %1020 = vmatpush1.msra.mxu0 %v1019
    %1021 = vmatprep.subr.mxu0 0.0
    %v1022 = vand.u32 %v66, 4294901760
    %v1023 = vsub.f32 %v66, %v1022
    %v1024 = vand.u32 %v1023, 4294901760
    %1025 = vmatpush1.msra.mxu0 %v1024
    %1026 = vmatprep.subr.mxu0 0.0
    %v1027 = vand.u32 %v65, 4294901760
    %v1028 = vsub.f32 %v65, %v1027
    %v1029 = vand.u32 %v1028, 4294901760
    %1030 = vmatpush1.msra.mxu0 %v1029
    %1031 = vmatprep.subr.mxu0 0.0
    %v1032 = vand.u32 %v64, 4294901760
    %v1033 = vsub.f32 %v64, %v1032
    %v1034 = vand.u32 %v1033, 4294901760
    %1035 = vmatpush1.msra.mxu0 %v1034
    %1036 = vmatprep.subr.mxu0 0.0
    %v1037 = vand.u32 %v63, 4294901760
    %v1038 = vsub.f32 %v63, %v1037
    %v1039 = vand.u32 %v1038, 4294901760
    %1040 = vmatpush1.msra.mxu0 %v1039
    %1041 = vmatprep.subr.mxu0 0.0
    %v1042 = vand.u32 %v62, 4294901760
    %v1043 = vsub.f32 %v62, %v1042
    %v1044 = vand.u32 %v1043, 4294901760
    %1045 = vmatpush1.msra.mxu0 %v1044
    %1046 = vmatprep.subr.mxu0 0.0
    %v1047 = vand.u32 %v61, 4294901760
    %v1048 = vsub.f32 %v61, %v1047
    %v1049 = vand.u32 %v1048, 4294901760
    %1050 = vmatpush1.msra.mxu0 %v1049
    %1051 = vmatprep.subr.mxu0 0.0
    %v1052 = vand.u32 %v60, 4294901760
    %v1053 = vsub.f32 %v60, %v1052
    %v1054 = vand.u32 %v1053, 4294901760
    %1055 = vmatpush1.msra.mxu0 %v1054
    %1056 = vmatprep.subr.mxu0 0.0
    %v1057 = vand.u32 %v59, 4294901760
    %v1058 = vsub.f32 %v59, %v1057
    %v1059 = vand.u32 %v1058, 4294901760
    %1060 = vmatpush1.msra.mxu0 %v1059
    %1061 = vmatprep.subr.mxu0 0.0
    %v1062 = vand.u32 %v58, 4294901760
    %v1063 = vsub.f32 %v58, %v1062
    %v1064 = vand.u32 %v1063, 4294901760
    %1065 = vmatpush1.msra.mxu0 %v1064
    %1066 = vmatprep.subr.mxu0 0.0
    %v1067 = vand.u32 %v57, 4294901760
    %v1068 = vsub.f32 %v57, %v1067
    %v1069 = vand.u32 %v1068, 4294901760
    %1070 = vmatpush1.msra.mxu0 %v1069
    %1071 = vmatprep.subr.mxu0 0.0
    %1072 = vmatpush2.msra.mxu0 0.0
    %1073 = vmatprep.subr.mxu0 0.0
    %1074 = vmatpush2.msra.mxu0 0.0
    %1075 = vmatprep.subr.mxu0 0.0
    %1076 = vmatpush2.msra.mxu0 0.0
    %1077 = vmatprep.subr.mxu0 0.0
    %1078 = vmatpush2.msra.mxu0 0.0
    %1079 = vmatprep.subr.mxu0 0.0
    %1080 = vmatpush2.msra.mxu0 0.0
    %1081 = vmatprep.subr.mxu0 0.0
    %1082 = vmatpush2.msra.mxu0 0.0
    %1083 = vmatprep.subr.mxu0 0.0
    %1084 = vmatpush2.msra.mxu0 0.0
    %1085 = vmatprep.subr.mxu0 0.0
    %1086 = vmatpush2.msra.mxu0 0.0
    %1087 = vmatprep.subr.mxu0 0.0
    %1088 = vmatpush2.msra.mxu0 0.0
    %1089 = vmatprep.subr.mxu0 0.0
    %1090 = vmatpush2.msra.mxu0 0.0
    %1091 = vmatprep.subr.mxu0 0.0
    %1092 = vmatpush2.msra.mxu0 0.0
    %1093 = vmatprep.subr.mxu0 0.0
    %1094 = vmatpush2.msra.mxu0 0.0
    %1095 = vmatprep.subr.mxu0 0.0
    %1096 = vmatpush2.msra.mxu0 0.0
    %1097 = vmatprep.subr.mxu0 0.0
    %1098 = vmatpush2.msra.mxu0 0.0
    %1099 = vmatprep.subr.mxu0 0.0
    %1100 = vmatpush2.msra.mxu0 0.0
    %1101 = vmatprep.subr.mxu0 0.0
    %1102 = vmatpush2.msra.mxu0 0.0
    %1103 = vmatprep.mubr.f32.mxu0 0.0
    %v1104 = vand.u32 %v25, 4294901760
    %1105 = vmatmul.mubr.f32.gmra.mxu0 %v1104
    %v1106 = vpop.f32.mrf.mxu0
    %v1107 = vadd.f32 %v868, %v1106
    %v1108 = vpop.f32.mrf.mxu0
    %1109 = vmatprep.mubr.f32.mxu0 0.0
    %v1110 = vand.u32 %v26, 4294901760
    %1111 = vmatmul.mubr.f32.gmra.mxu0 %v1110
    %v1112 = vpop.f32.mrf.mxu0
    %v1113 = vadd.f32 %v876, %v1112
    %v1114 = vpop.f32.mrf.mxu0
    %1115 = vmatprep.mubr.f32.mxu0 0.0
    %v1116 = vand.u32 %v27, 4294901760
    %1117 = vmatmul.mubr.f32.gmra.mxu0 %v1116
    %v1118 = vpop.f32.mrf.mxu0
    %v1119 = vadd.f32 %v884, %v1118
    %v1120 = vpop.f32.mrf.mxu0
    %1121 = vmatprep.mubr.f32.mxu0 0.0
    %v1122 = vand.u32 %v28, 4294901760
    %1123 = vmatmul.mubr.f32.gmra.mxu0 %v1122
    %v1124 = vpop.f32.mrf.mxu0
    %v1125 = vadd.f32 %v892, %v1124
    %v1126 = vpop.f32.mrf.mxu0
    %1127 = vmatprep.mubr.f32.mxu0 0.0
    %v1128 = vand.u32 %v29, 4294901760
    %1129 = vmatmul.mubr.f32.gmra.mxu0 %v1128
    %v1130 = vpop.f32.mrf.mxu0
    %v1131 = vadd.f32 %v900, %v1130
    %v1132 = vpop.f32.mrf.mxu0
    %1133 = vmatprep.mubr.f32.mxu0 0.0
    %v1134 = vand.u32 %v30, 4294901760
    %1135 = vmatmul.mubr.f32.gmra.mxu0 %v1134
    %v1136 = vpop.f32.mrf.mxu0
    %v1137 = vadd.f32 %v908, %v1136
    %v1138 = vpop.f32.mrf.mxu0
    %1139 = vmatprep.mubr.f32.mxu0 0.0
    %v1140 = vand.u32 %v31, 4294901760
    %1141 = vmatmul.mubr.f32.gmra.mxu0 %v1140
    %v1142 = vpop.f32.mrf.mxu0
    %v1143 = vadd.f32 %v916, %v1142
    %v1144 = vpop.f32.mrf.mxu0
    %1145 = vmatprep.mubr.f32.mxu0 0.0
    %v1146 = vand.u32 %v32, 4294901760
    %1147 = vmatmul.mubr.f32.gmra.mxu0 %v1146
    %v1148 = vpop.f32.mrf.mxu0
    %v1149 = vadd.f32 %v924, %v1148
    %v1150 = vpop.f32.mrf.mxu0
    %1151 = vmatprep.mubr.f32.mxu0 0.0
    %v1152 = vand.u32 %v33, 4294901760
    %1153 = vmatmul.mubr.f32.gmra.mxu0 %v1152
    %v1154 = vpop.f32.mrf.mxu0
    %v1155 = vadd.f32 %v932, %v1154
    %v1156 = vpop.f32.mrf.mxu0
    %1157 = vmatprep.mubr.f32.mxu0 0.0
    %v1158 = vand.u32 %v34, 4294901760
    %1159 = vmatmul.mubr.f32.gmra.mxu0 %v1158
    %v1160 = vpop.f32.mrf.mxu0
    %v1161 = vadd.f32 %v940, %v1160
    %v1162 = vpop.f32.mrf.mxu0
    %1163 = vmatprep.mubr.f32.mxu0 0.0
    %v1164 = vand.u32 %v35, 4294901760
    %1165 = vmatmul.mubr.f32.gmra.mxu0 %v1164
    %v1166 = vpop.f32.mrf.mxu0
    %v1167 = vadd.f32 %v948, %v1166
    %v1168 = vpop.f32.mrf.mxu0
    %1169 = vmatprep.mubr.f32.mxu0 0.0
    %v1170 = vand.u32 %v36, 4294901760
    %1171 = vmatmul.mubr.f32.gmra.mxu0 %v1170
    %v1172 = vpop.f32.mrf.mxu0
    %v1173 = vadd.f32 %v956, %v1172
    %v1174 = vpop.f32.mrf.mxu0
    %1175 = vmatprep.mubr.f32.mxu0 0.0
    %v1176 = vand.u32 %v37, 4294901760
    %1177 = vmatmul.mubr.f32.gmra.mxu0 %v1176
    %v1178 = vpop.f32.mrf.mxu0
    %v1179 = vadd.f32 %v964, %v1178
    %v1180 = vpop.f32.mrf.mxu0
    %1181 = vmatprep.mubr.f32.mxu0 0.0
    %v1182 = vand.u32 %v38, 4294901760
    %1183 = vmatmul.mubr.f32.gmra.mxu0 %v1182
    %v1184 = vpop.f32.mrf.mxu0
    %v1185 = vadd.f32 %v972, %v1184
    %v1186 = vpop.f32.mrf.mxu0
    %1187 = vmatprep.mubr.f32.mxu0 0.0
    %v1188 = vand.u32 %v39, 4294901760
    %1189 = vmatmul.mubr.f32.gmra.mxu0 %v1188
    %v1190 = vpop.f32.mrf.mxu0
    %v1191 = vadd.f32 %v980, %v1190
    %v1192 = vpop.f32.mrf.mxu0
    %1193 = vmatprep.mubr.f32.mxu0 0.0
    %v1194 = vand.u32 %v40, 4294901760
    %1195 = vmatmul.mubr.f32.gmra.mxu0 %v1194
    %v1196 = vpop.f32.mrf.mxu0
    %v1197 = vadd.f32 %v988, %v1196
    %v1198 = vpop.f32.mrf.mxu0
    %1199 = vdwg.mxu0
    %1200 = vmatprep.subr.mxu0 0.0
    %v1201 = vand.u32 %v72, 4294901760
    %1202 = vmatpush1.msra.mxu0 %v1201
    %1203 = vmatprep.subr.mxu0 0.0
    %v1204 = vand.u32 %v71, 4294901760
    %1205 = vmatpush1.msra.mxu0 %v1204
    %1206 = vmatprep.subr.mxu0 0.0
    %v1207 = vand.u32 %v70, 4294901760
    %1208 = vmatpush1.msra.mxu0 %v1207
    %1209 = vmatprep.subr.mxu0 0.0
    %v1210 = vand.u32 %v69, 4294901760
    %1211 = vmatpush1.msra.mxu0 %v1210
    %1212 = vmatprep.subr.mxu0 0.0
    %v1213 = vand.u32 %v68, 4294901760
    %1214 = vmatpush1.msra.mxu0 %v1213
    %1215 = vmatprep.subr.mxu0 0.0
    %v1216 = vand.u32 %v67, 4294901760
    %1217 = vmatpush1.msra.mxu0 %v1216
    %1218 = vmatprep.subr.mxu0 0.0
    %v1219 = vand.u32 %v66, 4294901760
    %1220 = vmatpush1.msra.mxu0 %v1219
    %1221 = vmatprep.subr.mxu0 0.0
    %v1222 = vand.u32 %v65, 4294901760
    %1223 = vmatpush1.msra.mxu0 %v1222
    %1224 = vmatprep.subr.mxu0 0.0
    %v1225 = vand.u32 %v64, 4294901760
    %1226 = vmatpush1.msra.mxu0 %v1225
    %1227 = vmatprep.subr.mxu0 0.0
    %v1228 = vand.u32 %v63, 4294901760
    %1229 = vmatpush1.msra.mxu0 %v1228
    %1230 = vmatprep.subr.mxu0 0.0
    %v1231 = vand.u32 %v62, 4294901760
    %1232 = vmatpush1.msra.mxu0 %v1231
    %1233 = vmatprep.subr.mxu0 0.0
    %v1234 = vand.u32 %v61, 4294901760
    %1235 = vmatpush1.msra.mxu0 %v1234
    %1236 = vmatprep.subr.mxu0 0.0
    %v1237 = vand.u32 %v60, 4294901760
    %1238 = vmatpush1.msra.mxu0 %v1237
    %1239 = vmatprep.subr.mxu0 0.0
    %v1240 = vand.u32 %v59, 4294901760
    %1241 = vmatpush1.msra.mxu0 %v1240
    %1242 = vmatprep.subr.mxu0 0.0
    %v1243 = vand.u32 %v58, 4294901760
    %1244 = vmatpush1.msra.mxu0 %v1243
    %1245 = vmatprep.subr.mxu0 0.0
    %v1246 = vand.u32 %v57, 4294901760
    %1247 = vmatpush1.msra.mxu0 %v1246
    %1248 = vmatprep.subr.mxu0 0.0
    %1249 = vmatpush2.msra.mxu0 0.0
    %1250 = vmatprep.subr.mxu0 0.0
    %1251 = vmatpush2.msra.mxu0 0.0
    %1252 = vmatprep.subr.mxu0 0.0
    %1253 = vmatpush2.msra.mxu0 0.0
    %1254 = vmatprep.subr.mxu0 0.0
    %1255 = vmatpush2.msra.mxu0 0.0
    %1256 = vmatprep.subr.mxu0 0.0
    %1257 = vmatpush2.msra.mxu0 0.0
    %1258 = vmatprep.subr.mxu0 0.0
    %1259 = vmatpush2.msra.mxu0 0.0
    %1260 = vmatprep.subr.mxu0 0.0
    %1261 = vmatpush2.msra.mxu0 0.0
    %1262 = vmatprep.subr.mxu0 0.0
    %1263 = vmatpush2.msra.mxu0 0.0
    %1264 = vmatprep.subr.mxu0 0.0
    %1265 = vmatpush2.msra.mxu0 0.0
    %1266 = vmatprep.subr.mxu0 0.0
    %1267 = vmatpush2.msra.mxu0 0.0
    %1268 = vmatprep.subr.mxu0 0.0
    %1269 = vmatpush2.msra.mxu0 0.0
    %1270 = vmatprep.subr.mxu0 0.0
    %1271 = vmatpush2.msra.mxu0 0.0
    %1272 = vmatprep.subr.mxu0 0.0
    %1273 = vmatpush2.msra.mxu0 0.0
    %1274 = vmatprep.subr.mxu0 0.0
    %1275 = vmatpush2.msra.mxu0 0.0
    %1276 = vmatprep.subr.mxu0 0.0
    %1277 = vmatpush2.msra.mxu0 0.0
    %1278 = vmatprep.subr.mxu0 0.0
    %1279 = vmatpush2.msra.mxu0 0.0
    %1280 = vmatprep.mubr.f32.mxu0 0.0
    %v1281 = vand.u32 %v25, 4294901760
    %1282 = vmatmul.mubr.f32.gmra.mxu0 %v1281
    %v1283 = vpop.f32.mrf.mxu0
    %v1284 = vadd.f32 %v1107, %v1283
    %v1285 = vpop.f32.mrf.mxu0
    %1286 = vmatprep.mubr.f32.mxu0 0.0
    %v1287 = vand.u32 %v26, 4294901760
    %1288 = vmatmul.mubr.f32.gmra.mxu0 %v1287
    %v1289 = vpop.f32.mrf.mxu0
    %v1290 = vadd.f32 %v1113, %v1289
    %v1291 = vpop.f32.mrf.mxu0
    %1292 = vmatprep.mubr.f32.mxu0 0.0
    %v1293 = vand.u32 %v27, 4294901760
    %1294 = vmatmul.mubr.f32.gmra.mxu0 %v1293
    %v1295 = vpop.f32.mrf.mxu0
    %v1296 = vadd.f32 %v1119, %v1295
    %v1297 = vpop.f32.mrf.mxu0
    %1298 = vmatprep.mubr.f32.mxu0 0.0
    %v1299 = vand.u32 %v28, 4294901760
    %1300 = vmatmul.mubr.f32.gmra.mxu0 %v1299
    %v1301 = vpop.f32.mrf.mxu0
    %v1302 = vadd.f32 %v1125, %v1301
    %v1303 = vpop.f32.mrf.mxu0
    %1304 = vmatprep.mubr.f32.mxu0 0.0
    %v1305 = vand.u32 %v29, 4294901760
    %1306 = vmatmul.mubr.f32.gmra.mxu0 %v1305
    %v1307 = vpop.f32.mrf.mxu0
    %v1308 = vadd.f32 %v1131, %v1307
    %v1309 = vpop.f32.mrf.mxu0
    %1310 = vmatprep.mubr.f32.mxu0 0.0
    %v1311 = vand.u32 %v30, 4294901760
    %1312 = vmatmul.mubr.f32.gmra.mxu0 %v1311
    %v1313 = vpop.f32.mrf.mxu0
    %v1314 = vadd.f32 %v1137, %v1313
    %v1315 = vpop.f32.mrf.mxu0
    %1316 = vmatprep.mubr.f32.mxu0 0.0
    %v1317 = vand.u32 %v31, 4294901760
    %1318 = vmatmul.mubr.f32.gmra.mxu0 %v1317
    %v1319 = vpop.f32.mrf.mxu0
    %v1320 = vadd.f32 %v1143, %v1319
    %v1321 = vpop.f32.mrf.mxu0
    %1322 = vmatprep.mubr.f32.mxu0 0.0
    %v1323 = vand.u32 %v32, 4294901760
    %1324 = vmatmul.mubr.f32.gmra.mxu0 %v1323
    %v1325 = vpop.f32.mrf.mxu0
    %v1326 = vadd.f32 %v1149, %v1325
    %v1327 = vpop.f32.mrf.mxu0
    %1328 = vmatprep.mubr.f32.mxu0 0.0
    %v1329 = vand.u32 %v33, 4294901760
    %1330 = vmatmul.mubr.f32.gmra.mxu0 %v1329
    %v1331 = vpop.f32.mrf.mxu0
    %v1332 = vadd.f32 %v1155, %v1331
    %v1333 = vpop.f32.mrf.mxu0
    %1334 = vmatprep.mubr.f32.mxu0 0.0
    %v1335 = vand.u32 %v34, 4294901760
    %1336 = vmatmul.mubr.f32.gmra.mxu0 %v1335
    %v1337 = vpop.f32.mrf.mxu0
    %v1338 = vadd.f32 %v1161, %v1337
    %v1339 = vpop.f32.mrf.mxu0
    %1340 = vmatprep.mubr.f32.mxu0 0.0
    %v1341 = vand.u32 %v35, 4294901760
    %1342 = vmatmul.mubr.f32.gmra.mxu0 %v1341
    %v1343 = vpop.f32.mrf.mxu0
    %v1344 = vadd.f32 %v1167, %v1343
    %v1345 = vpop.f32.mrf.mxu0
    %1346 = vmatprep.mubr.f32.mxu0 0.0
    %v1347 = vand.u32 %v36, 4294901760
    %1348 = vmatmul.mubr.f32.gmra.mxu0 %v1347
    %v1349 = vpop.f32.mrf.mxu0
    %v1350 = vadd.f32 %v1173, %v1349
    %v1351 = vpop.f32.mrf.mxu0
    %1352 = vmatprep.mubr.f32.mxu0 0.0
    %v1353 = vand.u32 %v37, 4294901760
    %1354 = vmatmul.mubr.f32.gmra.mxu0 %v1353
    %v1355 = vpop.f32.mrf.mxu0
    %v1356 = vadd.f32 %v1179, %v1355
    %v1357 = vpop.f32.mrf.mxu0
    %1358 = vmatprep.mubr.f32.mxu0 0.0
    %v1359 = vand.u32 %v38, 4294901760
    %1360 = vmatmul.mubr.f32.gmra.mxu0 %v1359
    %v1361 = vpop.f32.mrf.mxu0
    %v1362 = vadd.f32 %v1185, %v1361
    %v1363 = vpop.f32.mrf.mxu0
    %1364 = vmatprep.mubr.f32.mxu0 0.0
    %v1365 = vand.u32 %v39, 4294901760
    %1366 = vmatmul.mubr.f32.gmra.mxu0 %v1365
    %v1367 = vpop.f32.mrf.mxu0
    %v1368 = vadd.f32 %v1191, %v1367
    %v1369 = vpop.f32.mrf.mxu0
    %1370 = vmatprep.mubr.f32.mxu0 0.0
    %v1371 = vand.u32 %v40, 4294901760
    %1372 = vmatmul.mubr.f32.gmra.mxu0 %v1371
    %v1373 = vpop.f32.mrf.mxu0
    %v1374 = vadd.f32 %v1197, %v1373
    %v1375 = vpop.f32.mrf.mxu0
    %1376 = vdwg.mxu0
    %v1377 = vlaneseq
    %v1378 = vshrl.u32 %v1377, 7
    %v1379 = vsub.s32 0, %v1378
    %v1380 = vrot.slane %v73, %v1379
    %1381 = vmatprep.subr.mxu0 0.0
    %v1382 = vand.u32 %v1374, 4294901760
    %1383 = vmatpush1.msra.mxu0 %v1382
    %1384 = vmatprep.subr.mxu0 0.0
    %v1385 = vand.u32 %v1368, 4294901760
    %1386 = vmatpush1.msra.mxu0 %v1385
    %1387 = vmatprep.subr.mxu0 0.0
    %v1388 = vand.u32 %v1362, 4294901760
    %1389 = vmatpush1.msra.mxu0 %v1388
    %1390 = vmatprep.subr.mxu0 0.0
    %v1391 = vand.u32 %v1356, 4294901760
    %1392 = vmatpush1.msra.mxu0 %v1391
    %1393 = vmatprep.subr.mxu0 0.0
    %v1394 = vand.u32 %v1350, 4294901760
    %1395 = vmatpush1.msra.mxu0 %v1394
    %1396 = vmatprep.subr.mxu0 0.0
    %v1397 = vand.u32 %v1344, 4294901760
    %1398 = vmatpush1.msra.mxu0 %v1397
    %1399 = vmatprep.subr.mxu0 0.0
    %v1400 = vand.u32 %v1338, 4294901760
    %1401 = vmatpush1.msra.mxu0 %v1400
    %1402 = vmatprep.subr.mxu0 0.0
    %v1403 = vand.u32 %v1332, 4294901760
    %1404 = vmatpush1.msra.mxu0 %v1403
    %1405 = vmatprep.subr.mxu0 0.0
    %v1406 = vand.u32 %v1326, 4294901760
    %1407 = vmatpush1.msra.mxu0 %v1406
    %1408 = vmatprep.subr.mxu0 0.0
    %v1409 = vand.u32 %v1320, 4294901760
    %1410 = vmatpush1.msra.mxu0 %v1409
    %1411 = vmatprep.subr.mxu0 0.0
    %v1412 = vand.u32 %v1314, 4294901760
    %1413 = vmatpush1.msra.mxu0 %v1412
    %1414 = vmatprep.subr.mxu0 0.0
    %v1415 = vand.u32 %v1308, 4294901760
    %1416 = vmatpush1.msra.mxu0 %v1415
    %1417 = vmatprep.subr.mxu0 0.0
    %v1418 = vand.u32 %v1302, 4294901760
    %1419 = vmatpush1.msra.mxu0 %v1418
    %1420 = vmatprep.subr.mxu0 0.0
    %v1421 = vand.u32 %v1296, 4294901760
    %1422 = vmatpush1.msra.mxu0 %v1421
    %1423 = vmatprep.subr.mxu0 0.0
    %v1424 = vand.u32 %v1290, 4294901760
    %1425 = vmatpush1.msra.mxu0 %v1424
    %1426 = vmatprep.subr.mxu0 0.0
    %v1427 = vand.u32 %v1284, 4294901760
    %1428 = vmatpush1.msra.mxu0 %v1427
    %1429 = vmatprep.subr.mxu0 0.0
    %1430 = vmatpush2.msra.mxu0 0.0
    %1431 = vmatprep.subr.mxu0 0.0
    %1432 = vmatpush2.msra.mxu0 0.0
    %1433 = vmatprep.subr.mxu0 0.0
    %1434 = vmatpush2.msra.mxu0 0.0
    %1435 = vmatprep.subr.mxu0 0.0
    %1436 = vmatpush2.msra.mxu0 0.0
    %1437 = vmatprep.subr.mxu0 0.0
    %1438 = vmatpush2.msra.mxu0 0.0
    %1439 = vmatprep.subr.mxu0 0.0
    %1440 = vmatpush2.msra.mxu0 0.0
    %1441 = vmatprep.subr.mxu0 0.0
    %1442 = vmatpush2.msra.mxu0 0.0
    %1443 = vmatprep.subr.mxu0 0.0
    %1444 = vmatpush2.msra.mxu0 0.0
    %1445 = vmatprep.subr.mxu0 0.0
    %1446 = vmatpush2.msra.mxu0 0.0
    %1447 = vmatprep.subr.mxu0 0.0
    %1448 = vmatpush2.msra.mxu0 0.0
    %1449 = vmatprep.subr.mxu0 0.0
    %1450 = vmatpush2.msra.mxu0 0.0
    %1451 = vmatprep.subr.mxu0 0.0
    %1452 = vmatpush2.msra.mxu0 0.0
    %1453 = vmatprep.subr.mxu0 0.0
    %1454 = vmatpush2.msra.mxu0 0.0
    %1455 = vmatprep.subr.mxu0 0.0
    %1456 = vmatpush2.msra.mxu0 0.0
    %1457 = vmatprep.subr.mxu0 0.0
    %1458 = vmatpush2.msra.mxu0 0.0
    %1459 = vmatprep.subr.mxu0 0.0
    %1460 = vmatpush2.msra.mxu0 0.0
    %1461 = vmatprep.mubr.f32.mxu0 0.0
    %v1462 = vand.u32 %v41, 4294901760
    %v1463 = vsub.f32 %v41, %v1462
    %v1464 = vand.u32 %v1463, 4294901760
    %v1465 = vsub.f32 %v1463, %v1464
    %v1466 = vand.u32 %v1465, 4294901760
    %1467 = vmatmul.mubr.f32.gmra.mxu0 %v1466
    %v1468 = vpop.f32.mrf.mxu0
    %v1469 = vadd.f32 %v1380, %v1468
    %v1470 = vpop.f32.mrf.mxu0
    %1471 = vmatprep.mubr.f32.mxu0 0.0
    %v1472 = vand.u32 %v42, 4294901760
    %v1473 = vsub.f32 %v42, %v1472
    %v1474 = vand.u32 %v1473, 4294901760
    %v1475 = vsub.f32 %v1473, %v1474
    %v1476 = vand.u32 %v1475, 4294901760
    %1477 = vmatmul.mubr.f32.gmra.mxu0 %v1476
    %v1478 = vpop.f32.mrf.mxu0
    %v1479 = vadd.f32 %v1380, %v1478
    %v1480 = vpop.f32.mrf.mxu0
    %1481 = vmatprep.mubr.f32.mxu0 0.0
    %v1482 = vand.u32 %v43, 4294901760
    %v1483 = vsub.f32 %v43, %v1482
    %v1484 = vand.u32 %v1483, 4294901760
    %v1485 = vsub.f32 %v1483, %v1484
    %v1486 = vand.u32 %v1485, 4294901760
    %1487 = vmatmul.mubr.f32.gmra.mxu0 %v1486
    %v1488 = vpop.f32.mrf.mxu0
    %v1489 = vadd.f32 %v1380, %v1488
    %v1490 = vpop.f32.mrf.mxu0
    %1491 = vmatprep.mubr.f32.mxu0 0.0
    %v1492 = vand.u32 %v44, 4294901760
    %v1493 = vsub.f32 %v44, %v1492
    %v1494 = vand.u32 %v1493, 4294901760
    %v1495 = vsub.f32 %v1493, %v1494
    %v1496 = vand.u32 %v1495, 4294901760
    %1497 = vmatmul.mubr.f32.gmra.mxu0 %v1496
    %v1498 = vpop.f32.mrf.mxu0
    %v1499 = vadd.f32 %v1380, %v1498
    %v1500 = vpop.f32.mrf.mxu0
    %1501 = vmatprep.mubr.f32.mxu0 0.0
    %v1502 = vand.u32 %v45, 4294901760
    %v1503 = vsub.f32 %v45, %v1502
    %v1504 = vand.u32 %v1503, 4294901760
    %v1505 = vsub.f32 %v1503, %v1504
    %v1506 = vand.u32 %v1505, 4294901760
    %1507 = vmatmul.mubr.f32.gmra.mxu0 %v1506
    %v1508 = vpop.f32.mrf.mxu0
    %v1509 = vadd.f32 %v1380, %v1508
    %v1510 = vpop.f32.mrf.mxu0
    %1511 = vmatprep.mubr.f32.mxu0 0.0
    %v1512 = vand.u32 %v46, 4294901760
    %v1513 = vsub.f32 %v46, %v1512
    %v1514 = vand.u32 %v1513, 4294901760
    %v1515 = vsub.f32 %v1513, %v1514
    %v1516 = vand.u32 %v1515, 4294901760
    %1517 = vmatmul.mubr.f32.gmra.mxu0 %v1516
    %v1518 = vpop.f32.mrf.mxu0
    %v1519 = vadd.f32 %v1380, %v1518
    %v1520 = vpop.f32.mrf.mxu0
    %1521 = vmatprep.mubr.f32.mxu0 0.0
    %v1522 = vand.u32 %v47, 4294901760
    %v1523 = vsub.f32 %v47, %v1522
    %v1524 = vand.u32 %v1523, 4294901760
    %v1525 = vsub.f32 %v1523, %v1524
    %v1526 = vand.u32 %v1525, 4294901760
    %1527 = vmatmul.mubr.f32.gmra.mxu0 %v1526
    %v1528 = vpop.f32.mrf.mxu0
    %v1529 = vadd.f32 %v1380, %v1528
    %v1530 = vpop.f32.mrf.mxu0
    %1531 = vmatprep.mubr.f32.mxu0 0.0
    %v1532 = vand.u32 %v48, 4294901760
    %v1533 = vsub.f32 %v48, %v1532
    %v1534 = vand.u32 %v1533, 4294901760
    %v1535 = vsub.f32 %v1533, %v1534
    %v1536 = vand.u32 %v1535, 4294901760
    %1537 = vmatmul.mubr.f32.gmra.mxu0 %v1536
    %v1538 = vpop.f32.mrf.mxu0
    %v1539 = vadd.f32 %v1380, %v1538
    %v1540 = vpop.f32.mrf.mxu0
    %1541 = vmatprep.mubr.f32.mxu0 0.0
    %v1542 = vand.u32 %v49, 4294901760
    %v1543 = vsub.f32 %v49, %v1542
    %v1544 = vand.u32 %v1543, 4294901760
    %v1545 = vsub.f32 %v1543, %v1544
    %v1546 = vand.u32 %v1545, 4294901760
    %1547 = vmatmul.mubr.f32.gmra.mxu0 %v1546
    %v1548 = vpop.f32.mrf.mxu0
    %v1549 = vadd.f32 %v1380, %v1548
    %v1550 = vpop.f32.mrf.mxu0
    %1551 = vmatprep.mubr.f32.mxu0 0.0
    %v1552 = vand.u32 %v50, 4294901760
    %v1553 = vsub.f32 %v50, %v1552
    %v1554 = vand.u32 %v1553, 4294901760
    %v1555 = vsub.f32 %v1553, %v1554
    %v1556 = vand.u32 %v1555, 4294901760
    %1557 = vmatmul.mubr.f32.gmra.mxu0 %v1556
    %v1558 = vpop.f32.mrf.mxu0
    %v1559 = vadd.f32 %v1380, %v1558
    %v1560 = vpop.f32.mrf.mxu0
    %1561 = vmatprep.mubr.f32.mxu0 0.0
    %v1562 = vand.u32 %v51, 4294901760
    %v1563 = vsub.f32 %v51, %v1562
    %v1564 = vand.u32 %v1563, 4294901760
    %v1565 = vsub.f32 %v1563, %v1564
    %v1566 = vand.u32 %v1565, 4294901760
    %1567 = vmatmul.mubr.f32.gmra.mxu0 %v1566
    %v1568 = vpop.f32.mrf.mxu0
    %v1569 = vadd.f32 %v1380, %v1568
    %v1570 = vpop.f32.mrf.mxu0
    %1571 = vmatprep.mubr.f32.mxu0 0.0
    %v1572 = vand.u32 %v52, 4294901760
    %v1573 = vsub.f32 %v52, %v1572
    %v1574 = vand.u32 %v1573, 4294901760
    %v1575 = vsub.f32 %v1573, %v1574
    %v1576 = vand.u32 %v1575, 4294901760
    %1577 = vmatmul.mubr.f32.gmra.mxu0 %v1576
    %v1578 = vpop.f32.mrf.mxu0
    %v1579 = vadd.f32 %v1380, %v1578
    %v1580 = vpop.f32.mrf.mxu0
    %1581 = vmatprep.mubr.f32.mxu0 0.0
    %v1582 = vand.u32 %v53, 4294901760
    %v1583 = vsub.f32 %v53, %v1582
    %v1584 = vand.u32 %v1583, 4294901760
    %v1585 = vsub.f32 %v1583, %v1584
    %v1586 = vand.u32 %v1585, 4294901760
    %1587 = vmatmul.mubr.f32.gmra.mxu0 %v1586
    %v1588 = vpop.f32.mrf.mxu0
    %v1589 = vadd.f32 %v1380, %v1588
    %v1590 = vpop.f32.mrf.mxu0
    %1591 = vmatprep.mubr.f32.mxu0 0.0
    %v1592 = vand.u32 %v54, 4294901760
    %v1593 = vsub.f32 %v54, %v1592
    %v1594 = vand.u32 %v1593, 4294901760
    %v1595 = vsub.f32 %v1593, %v1594
    %v1596 = vand.u32 %v1595, 4294901760
    %1597 = vmatmul.mubr.f32.gmra.mxu0 %v1596
    %v1598 = vpop.f32.mrf.mxu0
    %v1599 = vadd.f32 %v1380, %v1598
    %v1600 = vpop.f32.mrf.mxu0
    %1601 = vmatprep.mubr.f32.mxu0 0.0
    %v1602 = vand.u32 %v55, 4294901760
    %v1603 = vsub.f32 %v55, %v1602
    %v1604 = vand.u32 %v1603, 4294901760
    %v1605 = vsub.f32 %v1603, %v1604
    %v1606 = vand.u32 %v1605, 4294901760
    %1607 = vmatmul.mubr.f32.gmra.mxu0 %v1606
    %v1608 = vpop.f32.mrf.mxu0
    %v1609 = vadd.f32 %v1380, %v1608
    %v1610 = vpop.f32.mrf.mxu0
    %1611 = vmatprep.mubr.f32.mxu0 0.0
    %v1612 = vand.u32 %v56, 4294901760
    %v1613 = vsub.f32 %v56, %v1612
    %v1614 = vand.u32 %v1613, 4294901760
    %v1615 = vsub.f32 %v1613, %v1614
    %v1616 = vand.u32 %v1615, 4294901760
    %1617 = vmatmul.mubr.f32.gmra.mxu0 %v1616
    %v1618 = vpop.f32.mrf.mxu0
    %v1619 = vadd.f32 %v1380, %v1618
    %v1620 = vpop.f32.mrf.mxu0
    %1621 = vdwg.mxu0
    %1622 = vmatprep.subr.mxu0 0.0
    %v1623 = vand.u32 %v1374, 4294901760
    %v1624 = vsub.f32 %v1374, %v1623
    %v1625 = vand.u32 %v1624, 4294901760
    %v1626 = vsub.f32 %v1624, %v1625
    %v1627 = vand.u32 %v1626, 4294901760
    %1628 = vmatpush1.msra.mxu0 %v1627
    %1629 = vmatprep.subr.mxu0 0.0
    %v1630 = vand.u32 %v1368, 4294901760
    %v1631 = vsub.f32 %v1368, %v1630
    %v1632 = vand.u32 %v1631, 4294901760
    %v1633 = vsub.f32 %v1631, %v1632
    %v1634 = vand.u32 %v1633, 4294901760
    %1635 = vmatpush1.msra.mxu0 %v1634
    %1636 = vmatprep.subr.mxu0 0.0
    %v1637 = vand.u32 %v1362, 4294901760
    %v1638 = vsub.f32 %v1362, %v1637
    %v1639 = vand.u32 %v1638, 4294901760
    %v1640 = vsub.f32 %v1638, %v1639
    %v1641 = vand.u32 %v1640, 4294901760
    %1642 = vmatpush1.msra.mxu0 %v1641
    %1643 = vmatprep.subr.mxu0 0.0
    %v1644 = vand.u32 %v1356, 4294901760
    %v1645 = vsub.f32 %v1356, %v1644
    %v1646 = vand.u32 %v1645, 4294901760
    %v1647 = vsub.f32 %v1645, %v1646
    %v1648 = vand.u32 %v1647, 4294901760
    %1649 = vmatpush1.msra.mxu0 %v1648
    %1650 = vmatprep.subr.mxu0 0.0
    %v1651 = vand.u32 %v1350, 4294901760
    %v1652 = vsub.f32 %v1350, %v1651
    %v1653 = vand.u32 %v1652, 4294901760
    %v1654 = vsub.f32 %v1652, %v1653
    %v1655 = vand.u32 %v1654, 4294901760
    %1656 = vmatpush1.msra.mxu0 %v1655
    %1657 = vmatprep.subr.mxu0 0.0
    %v1658 = vand.u32 %v1344, 4294901760
    %v1659 = vsub.f32 %v1344, %v1658
    %v1660 = vand.u32 %v1659, 4294901760
    %v1661 = vsub.f32 %v1659, %v1660
    %v1662 = vand.u32 %v1661, 4294901760
    %1663 = vmatpush1.msra.mxu0 %v1662
    %1664 = vmatprep.subr.mxu0 0.0
    %v1665 = vand.u32 %v1338, 4294901760
    %v1666 = vsub.f32 %v1338, %v1665
    %v1667 = vand.u32 %v1666, 4294901760
    %v1668 = vsub.f32 %v1666, %v1667
    %v1669 = vand.u32 %v1668, 4294901760
    %1670 = vmatpush1.msra.mxu0 %v1669
    %1671 = vmatprep.subr.mxu0 0.0
    %v1672 = vand.u32 %v1332, 4294901760
    %v1673 = vsub.f32 %v1332, %v1672
    %v1674 = vand.u32 %v1673, 4294901760
    %v1675 = vsub.f32 %v1673, %v1674
    %v1676 = vand.u32 %v1675, 4294901760
    %1677 = vmatpush1.msra.mxu0 %v1676
    %1678 = vmatprep.subr.mxu0 0.0
    %v1679 = vand.u32 %v1326, 4294901760
    %v1680 = vsub.f32 %v1326, %v1679
    %v1681 = vand.u32 %v1680, 4294901760
    %v1682 = vsub.f32 %v1680, %v1681
    %v1683 = vand.u32 %v1682, 4294901760
    %1684 = vmatpush1.msra.mxu0 %v1683
    %1685 = vmatprep.subr.mxu0 0.0
    %v1686 = vand.u32 %v1320, 4294901760
    %v1687 = vsub.f32 %v1320, %v1686
    %v1688 = vand.u32 %v1687, 4294901760
    %v1689 = vsub.f32 %v1687, %v1688
    %v1690 = vand.u32 %v1689, 4294901760
    %1691 = vmatpush1.msra.mxu0 %v1690
    %1692 = vmatprep.subr.mxu0 0.0
    %v1693 = vand.u32 %v1314, 4294901760
    %v1694 = vsub.f32 %v1314, %v1693
    %v1695 = vand.u32 %v1694, 4294901760
    %v1696 = vsub.f32 %v1694, %v1695
    %v1697 = vand.u32 %v1696, 4294901760
    %1698 = vmatpush1.msra.mxu0 %v1697
    %1699 = vmatprep.subr.mxu0 0.0
    %v1700 = vand.u32 %v1308, 4294901760
    %v1701 = vsub.f32 %v1308, %v1700
    %v1702 = vand.u32 %v1701, 4294901760
    %v1703 = vsub.f32 %v1701, %v1702
    %v1704 = vand.u32 %v1703, 4294901760
    %1705 = vmatpush1.msra.mxu0 %v1704
    %1706 = vmatprep.subr.mxu0 0.0
    %v1707 = vand.u32 %v1302, 4294901760
    %v1708 = vsub.f32 %v1302, %v1707
    %v1709 = vand.u32 %v1708, 4294901760
    %v1710 = vsub.f32 %v1708, %v1709
    %v1711 = vand.u32 %v1710, 4294901760
    %1712 = vmatpush1.msra.mxu0 %v1711
    %1713 = vmatprep.subr.mxu0 0.0
    %v1714 = vand.u32 %v1296, 4294901760
    %v1715 = vsub.f32 %v1296, %v1714
    %v1716 = vand.u32 %v1715, 4294901760
    %v1717 = vsub.f32 %v1715, %v1716
    %v1718 = vand.u32 %v1717, 4294901760
    %1719 = vmatpush1.msra.mxu0 %v1718
    %1720 = vmatprep.subr.mxu0 0.0
    %v1721 = vand.u32 %v1290, 4294901760
    %v1722 = vsub.f32 %v1290, %v1721
    %v1723 = vand.u32 %v1722, 4294901760
    %v1724 = vsub.f32 %v1722, %v1723
    %v1725 = vand.u32 %v1724, 4294901760
    %1726 = vmatpush1.msra.mxu0 %v1725
    %1727 = vmatprep.subr.mxu0 0.0
    %v1728 = vand.u32 %v1284, 4294901760
    %v1729 = vsub.f32 %v1284, %v1728
    %v1730 = vand.u32 %v1729, 4294901760
    %v1731 = vsub.f32 %v1729, %v1730
    %v1732 = vand.u32 %v1731, 4294901760
    %1733 = vmatpush1.msra.mxu0 %v1732
    %1734 = vmatprep.subr.mxu0 0.0
    %1735 = vmatpush2.msra.mxu0 0.0
    %1736 = vmatprep.subr.mxu0 0.0
    %1737 = vmatpush2.msra.mxu0 0.0
    %1738 = vmatprep.subr.mxu0 0.0
    %1739 = vmatpush2.msra.mxu0 0.0
    %1740 = vmatprep.subr.mxu0 0.0
    %1741 = vmatpush2.msra.mxu0 0.0
    %1742 = vmatprep.subr.mxu0 0.0
    %1743 = vmatpush2.msra.mxu0 0.0
    %1744 = vmatprep.subr.mxu0 0.0
    %1745 = vmatpush2.msra.mxu0 0.0
    %1746 = vmatprep.subr.mxu0 0.0
    %1747 = vmatpush2.msra.mxu0 0.0
    %1748 = vmatprep.subr.mxu0 0.0
    %1749 = vmatpush2.msra.mxu0 0.0
    %1750 = vmatprep.subr.mxu0 0.0
    %1751 = vmatpush2.msra.mxu0 0.0
    %1752 = vmatprep.subr.mxu0 0.0
    %1753 = vmatpush2.msra.mxu0 0.0
    %1754 = vmatprep.subr.mxu0 0.0
    %1755 = vmatpush2.msra.mxu0 0.0
    %1756 = vmatprep.subr.mxu0 0.0
    %1757 = vmatpush2.msra.mxu0 0.0
    %1758 = vmatprep.subr.mxu0 0.0
    %1759 = vmatpush2.msra.mxu0 0.0
    %1760 = vmatprep.subr.mxu0 0.0
    %1761 = vmatpush2.msra.mxu0 0.0
    %1762 = vmatprep.subr.mxu0 0.0
    %1763 = vmatpush2.msra.mxu0 0.0
    %1764 = vmatprep.subr.mxu0 0.0
    %1765 = vmatpush2.msra.mxu0 0.0
    %1766 = vmatprep.mubr.f32.mxu0 0.0
    %v1767 = vand.u32 %v41, 4294901760
    %1768 = vmatmul.mubr.f32.gmra.mxu0 %v1767
    %v1769 = vpop.f32.mrf.mxu0
    %v1770 = vadd.f32 %v1469, %v1769
    %v1771 = vpop.f32.mrf.mxu0
    %1772 = vmatprep.mubr.f32.mxu0 0.0
    %v1773 = vand.u32 %v42, 4294901760
    %1774 = vmatmul.mubr.f32.gmra.mxu0 %v1773
    %v1775 = vpop.f32.mrf.mxu0
    %v1776 = vadd.f32 %v1479, %v1775
    %v1777 = vpop.f32.mrf.mxu0
    %1778 = vmatprep.mubr.f32.mxu0 0.0
    %v1779 = vand.u32 %v43, 4294901760
    %1780 = vmatmul.mubr.f32.gmra.mxu0 %v1779
    %v1781 = vpop.f32.mrf.mxu0
    %v1782 = vadd.f32 %v1489, %v1781
    %v1783 = vpop.f32.mrf.mxu0
    %1784 = vmatprep.mubr.f32.mxu0 0.0
    %v1785 = vand.u32 %v44, 4294901760
    %1786 = vmatmul.mubr.f32.gmra.mxu0 %v1785
    %v1787 = vpop.f32.mrf.mxu0
    %v1788 = vadd.f32 %v1499, %v1787
    %v1789 = vpop.f32.mrf.mxu0
    %1790 = vmatprep.mubr.f32.mxu0 0.0
    %v1791 = vand.u32 %v45, 4294901760
    %1792 = vmatmul.mubr.f32.gmra.mxu0 %v1791
    %v1793 = vpop.f32.mrf.mxu0
    %v1794 = vadd.f32 %v1509, %v1793
    %v1795 = vpop.f32.mrf.mxu0
    %1796 = vmatprep.mubr.f32.mxu0 0.0
    %v1797 = vand.u32 %v46, 4294901760
    %1798 = vmatmul.mubr.f32.gmra.mxu0 %v1797
    %v1799 = vpop.f32.mrf.mxu0
    %v1800 = vadd.f32 %v1519, %v1799
    %v1801 = vpop.f32.mrf.mxu0
    %1802 = vmatprep.mubr.f32.mxu0 0.0
    %v1803 = vand.u32 %v47, 4294901760
    %1804 = vmatmul.mubr.f32.gmra.mxu0 %v1803
    %v1805 = vpop.f32.mrf.mxu0
    %v1806 = vadd.f32 %v1529, %v1805
    %v1807 = vpop.f32.mrf.mxu0
    %1808 = vmatprep.mubr.f32.mxu0 0.0
    %v1809 = vand.u32 %v48, 4294901760
    %1810 = vmatmul.mubr.f32.gmra.mxu0 %v1809
    %v1811 = vpop.f32.mrf.mxu0
    %v1812 = vadd.f32 %v1539, %v1811
    %v1813 = vpop.f32.mrf.mxu0
    %1814 = vmatprep.mubr.f32.mxu0 0.0
    %v1815 = vand.u32 %v49, 4294901760
    %1816 = vmatmul.mubr.f32.gmra.mxu0 %v1815
    %v1817 = vpop.f32.mrf.mxu0
    %v1818 = vadd.f32 %v1549, %v1817
    %v1819 = vpop.f32.mrf.mxu0
    %1820 = vmatprep.mubr.f32.mxu0 0.0
    %v1821 = vand.u32 %v50, 4294901760
    %1822 = vmatmul.mubr.f32.gmra.mxu0 %v1821
    %v1823 = vpop.f32.mrf.mxu0
    %v1824 = vadd.f32 %v1559, %v1823
    %v1825 = vpop.f32.mrf.mxu0
    %1826 = vmatprep.mubr.f32.mxu0 0.0
    %v1827 = vand.u32 %v51, 4294901760
    %1828 = vmatmul.mubr.f32.gmra.mxu0 %v1827
    %v1829 = vpop.f32.mrf.mxu0
    %v1830 = vadd.f32 %v1569, %v1829
    %v1831 = vpop.f32.mrf.mxu0
    %1832 = vmatprep.mubr.f32.mxu0 0.0
    %v1833 = vand.u32 %v52, 4294901760
    %1834 = vmatmul.mubr.f32.gmra.mxu0 %v1833
    %v1835 = vpop.f32.mrf.mxu0
    %v1836 = vadd.f32 %v1579, %v1835
    %v1837 = vpop.f32.mrf.mxu0
    %1838 = vmatprep.mubr.f32.mxu0 0.0
    %v1839 = vand.u32 %v53, 4294901760
    %1840 = vmatmul.mubr.f32.gmra.mxu0 %v1839
    %v1841 = vpop.f32.mrf.mxu0
    %v1842 = vadd.f32 %v1589, %v1841
    %v1843 = vpop.f32.mrf.mxu0
    %1844 = vmatprep.mubr.f32.mxu0 0.0
    %v1845 = vand.u32 %v54, 4294901760
    %1846 = vmatmul.mubr.f32.gmra.mxu0 %v1845
    %v1847 = vpop.f32.mrf.mxu0
    %v1848 = vadd.f32 %v1599, %v1847
    %v1849 = vpop.f32.mrf.mxu0
    %1850 = vmatprep.mubr.f32.mxu0 0.0
    %v1851 = vand.u32 %v55, 4294901760
    %1852 = vmatmul.mubr.f32.gmra.mxu0 %v1851
    %v1853 = vpop.f32.mrf.mxu0
    %v1854 = vadd.f32 %v1609, %v1853
    %v1855 = vpop.f32.mrf.mxu0
    %1856 = vmatprep.mubr.f32.mxu0 0.0
    %v1857 = vand.u32 %v56, 4294901760
    %1858 = vmatmul.mubr.f32.gmra.mxu0 %v1857
    %v1859 = vpop.f32.mrf.mxu0
    %v1860 = vadd.f32 %v1619, %v1859
    %v1861 = vpop.f32.mrf.mxu0
    %1862 = vdwg.mxu0
    %1863 = vmatprep.subr.mxu0 0.0
    %v1864 = vand.u32 %v1374, 4294901760
    %v1865 = vsub.f32 %v1374, %v1864
    %1866 = vmatpush1.msra.mxu0 %v1865
    %1867 = vmatprep.subr.mxu0 0.0
    %v1868 = vand.u32 %v1368, 4294901760
    %v1869 = vsub.f32 %v1368, %v1868
    %1870 = vmatpush1.msra.mxu0 %v1869
    %1871 = vmatprep.subr.mxu0 0.0
    %v1872 = vand.u32 %v1362, 4294901760
    %v1873 = vsub.f32 %v1362, %v1872
    %1874 = vmatpush1.msra.mxu0 %v1873
    %1875 = vmatprep.subr.mxu0 0.0
    %v1876 = vand.u32 %v1356, 4294901760
    %v1877 = vsub.f32 %v1356, %v1876
    %1878 = vmatpush1.msra.mxu0 %v1877
    %1879 = vmatprep.subr.mxu0 0.0
    %v1880 = vand.u32 %v1350, 4294901760
    %v1881 = vsub.f32 %v1350, %v1880
    %1882 = vmatpush1.msra.mxu0 %v1881
    %1883 = vmatprep.subr.mxu0 0.0
    %v1884 = vand.u32 %v1344, 4294901760
    %v1885 = vsub.f32 %v1344, %v1884
    %1886 = vmatpush1.msra.mxu0 %v1885
    %1887 = vmatprep.subr.mxu0 0.0
    %v1888 = vand.u32 %v1338, 4294901760
    %v1889 = vsub.f32 %v1338, %v1888
    %1890 = vmatpush1.msra.mxu0 %v1889
    %1891 = vmatprep.subr.mxu0 0.0
    %v1892 = vand.u32 %v1332, 4294901760
    %v1893 = vsub.f32 %v1332, %v1892
    %1894 = vmatpush1.msra.mxu0 %v1893
    %1895 = vmatprep.subr.mxu0 0.0
    %v1896 = vand.u32 %v1326, 4294901760
    %v1897 = vsub.f32 %v1326, %v1896
    %1898 = vmatpush1.msra.mxu0 %v1897
    %1899 = vmatprep.subr.mxu0 0.0
    %v1900 = vand.u32 %v1320, 4294901760
    %v1901 = vsub.f32 %v1320, %v1900
    %1902 = vmatpush1.msra.mxu0 %v1901
    %1903 = vmatprep.subr.mxu0 0.0
    %v1904 = vand.u32 %v1314, 4294901760
    %v1905 = vsub.f32 %v1314, %v1904
    %1906 = vmatpush1.msra.mxu0 %v1905
    %1907 = vmatprep.subr.mxu0 0.0
    %v1908 = vand.u32 %v1308, 4294901760
    %v1909 = vsub.f32 %v1308, %v1908
    %1910 = vmatpush1.msra.mxu0 %v1909
    %1911 = vmatprep.subr.mxu0 0.0
    %v1912 = vand.u32 %v1302, 4294901760
    %v1913 = vsub.f32 %v1302, %v1912
    %1914 = vmatpush1.msra.mxu0 %v1913
    %1915 = vmatprep.subr.mxu0 0.0
    %v1916 = vand.u32 %v1296, 4294901760
    %v1917 = vsub.f32 %v1296, %v1916
    %1918 = vmatpush1.msra.mxu0 %v1917
    %1919 = vmatprep.subr.mxu0 0.0
    %v1920 = vand.u32 %v1290, 4294901760
    %v1921 = vsub.f32 %v1290, %v1920
    %1922 = vmatpush1.msra.mxu0 %v1921
    %1923 = vmatprep.subr.mxu0 0.0
    %v1924 = vand.u32 %v1284, 4294901760
    %v1925 = vsub.f32 %v1284, %v1924
    %1926 = vmatpush1.msra.mxu0 %v1925
    %1927 = vmatprep.subr.mxu0 0.0
    %1928 = vmatpush2.msra.mxu0 0.0
    %1929 = vmatprep.subr.mxu0 0.0
    %1930 = vmatpush2.msra.mxu0 0.0
    %1931 = vmatprep.subr.mxu0 0.0
    %1932 = vmatpush2.msra.mxu0 0.0
    %1933 = vmatprep.subr.mxu0 0.0
    %1934 = vmatpush2.msra.mxu0 0.0
    %1935 = vmatprep.subr.mxu0 0.0
    %1936 = vmatpush2.msra.mxu0 0.0
    %1937 = vmatprep.subr.mxu0 0.0
    %1938 = vmatpush2.msra.mxu0 0.0
    %1939 = vmatprep.subr.mxu0 0.0
    %1940 = vmatpush2.msra.mxu0 0.0
    %1941 = vmatprep.subr.mxu0 0.0
    %1942 = vmatpush2.msra.mxu0 0.0
    %1943 = vmatprep.subr.mxu0 0.0
    %1944 = vmatpush2.msra.mxu0 0.0
    %1945 = vmatprep.subr.mxu0 0.0
    %1946 = vmatpush2.msra.mxu0 0.0
    %1947 = vmatprep.subr.mxu0 0.0
    %1948 = vmatpush2.msra.mxu0 0.0
    %1949 = vmatprep.subr.mxu0 0.0
    %1950 = vmatpush2.msra.mxu0 0.0
    %1951 = vmatprep.subr.mxu0 0.0
    %1952 = vmatpush2.msra.mxu0 0.0
    %1953 = vmatprep.subr.mxu0 0.0
    %1954 = vmatpush2.msra.mxu0 0.0
    %1955 = vmatprep.subr.mxu0 0.0
    %1956 = vmatpush2.msra.mxu0 0.0
    %1957 = vmatprep.subr.mxu0 0.0
    %1958 = vmatpush2.msra.mxu0 0.0
    %1959 = vmatprep.mubr.f32.mxu0 0.0
    %v1960 = vand.u32 %v41, 4294901760
    %v1961 = vsub.f32 %v41, %v1960
    %1962 = vmatmul.mubr.f32.gmra.mxu0 %v1961
    %v1963 = vpop.f32.mrf.mxu0
    %v1964 = vadd.f32 %v1770, %v1963
    %v1965 = vpop.f32.mrf.mxu0
    %1966 = vmatprep.mubr.f32.mxu0 0.0
    %v1967 = vand.u32 %v42, 4294901760
    %v1968 = vsub.f32 %v42, %v1967
    %1969 = vmatmul.mubr.f32.gmra.mxu0 %v1968
    %v1970 = vpop.f32.mrf.mxu0
    %v1971 = vadd.f32 %v1776, %v1970
    %v1972 = vpop.f32.mrf.mxu0
    %1973 = vmatprep.mubr.f32.mxu0 0.0
    %v1974 = vand.u32 %v43, 4294901760
    %v1975 = vsub.f32 %v43, %v1974
    %1976 = vmatmul.mubr.f32.gmra.mxu0 %v1975
    %v1977 = vpop.f32.mrf.mxu0
    %v1978 = vadd.f32 %v1782, %v1977
    %v1979 = vpop.f32.mrf.mxu0
    %1980 = vmatprep.mubr.f32.mxu0 0.0
    %v1981 = vand.u32 %v44, 4294901760
    %v1982 = vsub.f32 %v44, %v1981
    %1983 = vmatmul.mubr.f32.gmra.mxu0 %v1982
    %v1984 = vpop.f32.mrf.mxu0
    %v1985 = vadd.f32 %v1788, %v1984
    %v1986 = vpop.f32.mrf.mxu0
    %1987 = vmatprep.mubr.f32.mxu0 0.0
    %v1988 = vand.u32 %v45, 4294901760
    %v1989 = vsub.f32 %v45, %v1988
    %1990 = vmatmul.mubr.f32.gmra.mxu0 %v1989
    %v1991 = vpop.f32.mrf.mxu0
    %v1992 = vadd.f32 %v1794, %v1991
    %v1993 = vpop.f32.mrf.mxu0
    %1994 = vmatprep.mubr.f32.mxu0 0.0
    %v1995 = vand.u32 %v46, 4294901760
    %v1996 = vsub.f32 %v46, %v1995
    %1997 = vmatmul.mubr.f32.gmra.mxu0 %v1996
    %v1998 = vpop.f32.mrf.mxu0
    %v1999 = vadd.f32 %v1800, %v1998
    %v2000 = vpop.f32.mrf.mxu0
    %2001 = vmatprep.mubr.f32.mxu0 0.0
    %v2002 = vand.u32 %v47, 4294901760
    %v2003 = vsub.f32 %v47, %v2002
    %2004 = vmatmul.mubr.f32.gmra.mxu0 %v2003
    %v2005 = vpop.f32.mrf.mxu0
    %v2006 = vadd.f32 %v1806, %v2005
    %v2007 = vpop.f32.mrf.mxu0
    %2008 = vmatprep.mubr.f32.mxu0 0.0
    %v2009 = vand.u32 %v48, 4294901760
    %v2010 = vsub.f32 %v48, %v2009
    %2011 = vmatmul.mubr.f32.gmra.mxu0 %v2010
    %v2012 = vpop.f32.mrf.mxu0
    %v2013 = vadd.f32 %v1812, %v2012
    %v2014 = vpop.f32.mrf.mxu0
    %2015 = vmatprep.mubr.f32.mxu0 0.0
    %v2016 = vand.u32 %v49, 4294901760
    %v2017 = vsub.f32 %v49, %v2016
    %2018 = vmatmul.mubr.f32.gmra.mxu0 %v2017
    %v2019 = vpop.f32.mrf.mxu0
    %v2020 = vadd.f32 %v1818, %v2019
    %v2021 = vpop.f32.mrf.mxu0
    %2022 = vmatprep.mubr.f32.mxu0 0.0
    %v2023 = vand.u32 %v50, 4294901760
    %v2024 = vsub.f32 %v50, %v2023
    %2025 = vmatmul.mubr.f32.gmra.mxu0 %v2024
    %v2026 = vpop.f32.mrf.mxu0
    %v2027 = vadd.f32 %v1824, %v2026
    %v2028 = vpop.f32.mrf.mxu0
    %2029 = vmatprep.mubr.f32.mxu0 0.0
    %v2030 = vand.u32 %v51, 4294901760
    %v2031 = vsub.f32 %v51, %v2030
    %2032 = vmatmul.mubr.f32.gmra.mxu0 %v2031
    %v2033 = vpop.f32.mrf.mxu0
    %v2034 = vadd.f32 %v1830, %v2033
    %v2035 = vpop.f32.mrf.mxu0
    %2036 = vmatprep.mubr.f32.mxu0 0.0
    %v2037 = vand.u32 %v52, 4294901760
    %v2038 = vsub.f32 %v52, %v2037
    %2039 = vmatmul.mubr.f32.gmra.mxu0 %v2038
    %v2040 = vpop.f32.mrf.mxu0
    %v2041 = vadd.f32 %v1836, %v2040
    %v2042 = vpop.f32.mrf.mxu0
    %2043 = vmatprep.mubr.f32.mxu0 0.0
    %v2044 = vand.u32 %v53, 4294901760
    %v2045 = vsub.f32 %v53, %v2044
    %2046 = vmatmul.mubr.f32.gmra.mxu0 %v2045
    %v2047 = vpop.f32.mrf.mxu0
    %v2048 = vadd.f32 %v1842, %v2047
    %v2049 = vpop.f32.mrf.mxu0
    %2050 = vmatprep.mubr.f32.mxu0 0.0
    %v2051 = vand.u32 %v54, 4294901760
    %v2052 = vsub.f32 %v54, %v2051
    %2053 = vmatmul.mubr.f32.gmra.mxu0 %v2052
    %v2054 = vpop.f32.mrf.mxu0
    %v2055 = vadd.f32 %v1848, %v2054
    %v2056 = vpop.f32.mrf.mxu0
    %2057 = vmatprep.mubr.f32.mxu0 0.0
    %v2058 = vand.u32 %v55, 4294901760
    %v2059 = vsub.f32 %v55, %v2058
    %2060 = vmatmul.mubr.f32.gmra.mxu0 %v2059
    %v2061 = vpop.f32.mrf.mxu0
    %v2062 = vadd.f32 %v1854, %v2061
    %v2063 = vpop.f32.mrf.mxu0
    %2064 = vmatprep.mubr.f32.mxu0 0.0
    %v2065 = vand.u32 %v56, 4294901760
    %v2066 = vsub.f32 %v56, %v2065
    %2067 = vmatmul.mubr.f32.gmra.mxu0 %v2066
    %v2068 = vpop.f32.mrf.mxu0
    %v2069 = vadd.f32 %v1860, %v2068
    %v2070 = vpop.f32.mrf.mxu0
    %2071 = vdwg.mxu0
    %2072 = vmatprep.subr.mxu0 0.0
    %v2073 = vand.u32 %v1374, 4294901760
    %2074 = vmatpush1.msra.mxu0 %v2073
    %2075 = vmatprep.subr.mxu0 0.0
    %v2076 = vand.u32 %v1368, 4294901760
    %2077 = vmatpush1.msra.mxu0 %v2076
    %2078 = vmatprep.subr.mxu0 0.0
    %v2079 = vand.u32 %v1362, 4294901760
    %2080 = vmatpush1.msra.mxu0 %v2079
    %2081 = vmatprep.subr.mxu0 0.0
    %v2082 = vand.u32 %v1356, 4294901760
    %2083 = vmatpush1.msra.mxu0 %v2082
    %2084 = vmatprep.subr.mxu0 0.0
    %v2085 = vand.u32 %v1350, 4294901760
    %2086 = vmatpush1.msra.mxu0 %v2085
    %2087 = vmatprep.subr.mxu0 0.0
    %v2088 = vand.u32 %v1344, 4294901760
    %2089 = vmatpush1.msra.mxu0 %v2088
    %2090 = vmatprep.subr.mxu0 0.0
    %v2091 = vand.u32 %v1338, 4294901760
    %2092 = vmatpush1.msra.mxu0 %v2091
    %2093 = vmatprep.subr.mxu0 0.0
    %v2094 = vand.u32 %v1332, 4294901760
    %2095 = vmatpush1.msra.mxu0 %v2094
    %2096 = vmatprep.subr.mxu0 0.0
    %v2097 = vand.u32 %v1326, 4294901760
    %2098 = vmatpush1.msra.mxu0 %v2097
    %2099 = vmatprep.subr.mxu0 0.0
    %v2100 = vand.u32 %v1320, 4294901760
    %2101 = vmatpush1.msra.mxu0 %v2100
    %2102 = vmatprep.subr.mxu0 0.0
    %v2103 = vand.u32 %v1314, 4294901760
    %2104 = vmatpush1.msra.mxu0 %v2103
    %2105 = vmatprep.subr.mxu0 0.0
    %v2106 = vand.u32 %v1308, 4294901760
    %2107 = vmatpush1.msra.mxu0 %v2106
    %2108 = vmatprep.subr.mxu0 0.0
    %v2109 = vand.u32 %v1302, 4294901760
    %2110 = vmatpush1.msra.mxu0 %v2109
    %2111 = vmatprep.subr.mxu0 0.0
    %v2112 = vand.u32 %v1296, 4294901760
    %2113 = vmatpush1.msra.mxu0 %v2112
    %2114 = vmatprep.subr.mxu0 0.0
    %v2115 = vand.u32 %v1290, 4294901760
    %2116 = vmatpush1.msra.mxu0 %v2115
    %2117 = vmatprep.subr.mxu0 0.0
    %v2118 = vand.u32 %v1284, 4294901760
    %2119 = vmatpush1.msra.mxu0 %v2118
    %2120 = vmatprep.subr.mxu0 0.0
    %2121 = vmatpush2.msra.mxu0 0.0
    %2122 = vmatprep.subr.mxu0 0.0
    %2123 = vmatpush2.msra.mxu0 0.0
    %2124 = vmatprep.subr.mxu0 0.0
    %2125 = vmatpush2.msra.mxu0 0.0
    %2126 = vmatprep.subr.mxu0 0.0
    %2127 = vmatpush2.msra.mxu0 0.0
    %2128 = vmatprep.subr.mxu0 0.0
    %2129 = vmatpush2.msra.mxu0 0.0
    %2130 = vmatprep.subr.mxu0 0.0
    %2131 = vmatpush2.msra.mxu0 0.0
    %2132 = vmatprep.subr.mxu0 0.0
    %2133 = vmatpush2.msra.mxu0 0.0
    %2134 = vmatprep.subr.mxu0 0.0
    %2135 = vmatpush2.msra.mxu0 0.0
    %2136 = vmatprep.subr.mxu0 0.0
    %2137 = vmatpush2.msra.mxu0 0.0
    %2138 = vmatprep.subr.mxu0 0.0
    %2139 = vmatpush2.msra.mxu0 0.0
    %2140 = vmatprep.subr.mxu0 0.0
    %2141 = vmatpush2.msra.mxu0 0.0
    %2142 = vmatprep.subr.mxu0 0.0
    %2143 = vmatpush2.msra.mxu0 0.0
    %2144 = vmatprep.subr.mxu0 0.0
    %2145 = vmatpush2.msra.mxu0 0.0
    %2146 = vmatprep.subr.mxu0 0.0
    %2147 = vmatpush2.msra.mxu0 0.0
    %2148 = vmatprep.subr.mxu0 0.0
    %2149 = vmatpush2.msra.mxu0 0.0
    %2150 = vmatprep.subr.mxu0 0.0
    %2151 = vmatpush2.msra.mxu0 0.0
    %2152 = vmatprep.mubr.f32.mxu0 0.0
    %v2153 = vand.u32 %v41, 4294901760
    %v2154 = vsub.f32 %v41, %v2153
    %v2155 = vand.u32 %v2154, 4294901760
    %2156 = vmatmul.mubr.f32.gmra.mxu0 %v2155
    %v2157 = vpop.f32.mrf.mxu0
    %v2158 = vadd.f32 %v1964, %v2157
    %v2159 = vpop.f32.mrf.mxu0
    %2160 = vmatprep.mubr.f32.mxu0 0.0
    %v2161 = vand.u32 %v42, 4294901760
    %v2162 = vsub.f32 %v42, %v2161
    %v2163 = vand.u32 %v2162, 4294901760
    %2164 = vmatmul.mubr.f32.gmra.mxu0 %v2163
    %v2165 = vpop.f32.mrf.mxu0
    %v2166 = vadd.f32 %v1971, %v2165
    %v2167 = vpop.f32.mrf.mxu0
    %2168 = vmatprep.mubr.f32.mxu0 0.0
    %v2169 = vand.u32 %v43, 4294901760
    %v2170 = vsub.f32 %v43, %v2169
    %v2171 = vand.u32 %v2170, 4294901760
    %2172 = vmatmul.mubr.f32.gmra.mxu0 %v2171
    %v2173 = vpop.f32.mrf.mxu0
    %v2174 = vadd.f32 %v1978, %v2173
    %v2175 = vpop.f32.mrf.mxu0
    %2176 = vmatprep.mubr.f32.mxu0 0.0
    %v2177 = vand.u32 %v44, 4294901760
    %v2178 = vsub.f32 %v44, %v2177
    %v2179 = vand.u32 %v2178, 4294901760
    %2180 = vmatmul.mubr.f32.gmra.mxu0 %v2179
    %v2181 = vpop.f32.mrf.mxu0
    %v2182 = vadd.f32 %v1985, %v2181
    %v2183 = vpop.f32.mrf.mxu0
    %2184 = vmatprep.mubr.f32.mxu0 0.0
    %v2185 = vand.u32 %v45, 4294901760
    %v2186 = vsub.f32 %v45, %v2185
    %v2187 = vand.u32 %v2186, 4294901760
    %2188 = vmatmul.mubr.f32.gmra.mxu0 %v2187
    %v2189 = vpop.f32.mrf.mxu0
    %v2190 = vadd.f32 %v1992, %v2189
    %v2191 = vpop.f32.mrf.mxu0
    %2192 = vmatprep.mubr.f32.mxu0 0.0
    %v2193 = vand.u32 %v46, 4294901760
    %v2194 = vsub.f32 %v46, %v2193
    %v2195 = vand.u32 %v2194, 4294901760
    %2196 = vmatmul.mubr.f32.gmra.mxu0 %v2195
    %v2197 = vpop.f32.mrf.mxu0
    %v2198 = vadd.f32 %v1999, %v2197
    %v2199 = vpop.f32.mrf.mxu0
    %2200 = vmatprep.mubr.f32.mxu0 0.0
    %v2201 = vand.u32 %v47, 4294901760
    %v2202 = vsub.f32 %v47, %v2201
    %v2203 = vand.u32 %v2202, 4294901760
    %2204 = vmatmul.mubr.f32.gmra.mxu0 %v2203
    %v2205 = vpop.f32.mrf.mxu0
    %v2206 = vadd.f32 %v2006, %v2205
    %v2207 = vpop.f32.mrf.mxu0
    %2208 = vmatprep.mubr.f32.mxu0 0.0
    %v2209 = vand.u32 %v48, 4294901760
    %v2210 = vsub.f32 %v48, %v2209
    %v2211 = vand.u32 %v2210, 4294901760
    %2212 = vmatmul.mubr.f32.gmra.mxu0 %v2211
    %v2213 = vpop.f32.mrf.mxu0
    %v2214 = vadd.f32 %v2013, %v2213
    %v2215 = vpop.f32.mrf.mxu0
    %2216 = vmatprep.mubr.f32.mxu0 0.0
    %v2217 = vand.u32 %v49, 4294901760
    %v2218 = vsub.f32 %v49, %v2217
    %v2219 = vand.u32 %v2218, 4294901760
    %2220 = vmatmul.mubr.f32.gmra.mxu0 %v2219
    %v2221 = vpop.f32.mrf.mxu0
    %v2222 = vadd.f32 %v2020, %v2221
    %v2223 = vpop.f32.mrf.mxu0
    %2224 = vmatprep.mubr.f32.mxu0 0.0
    %v2225 = vand.u32 %v50, 4294901760
    %v2226 = vsub.f32 %v50, %v2225
    %v2227 = vand.u32 %v2226, 4294901760
    %2228 = vmatmul.mubr.f32.gmra.mxu0 %v2227
    %v2229 = vpop.f32.mrf.mxu0
    %v2230 = vadd.f32 %v2027, %v2229
    %v2231 = vpop.f32.mrf.mxu0
    %2232 = vmatprep.mubr.f32.mxu0 0.0
    %v2233 = vand.u32 %v51, 4294901760
    %v2234 = vsub.f32 %v51, %v2233
    %v2235 = vand.u32 %v2234, 4294901760
    %2236 = vmatmul.mubr.f32.gmra.mxu0 %v2235
    %v2237 = vpop.f32.mrf.mxu0
    %v2238 = vadd.f32 %v2034, %v2237
    %v2239 = vpop.f32.mrf.mxu0
    %2240 = vmatprep.mubr.f32.mxu0 0.0
    %v2241 = vand.u32 %v52, 4294901760
    %v2242 = vsub.f32 %v52, %v2241
    %v2243 = vand.u32 %v2242, 4294901760
    %2244 = vmatmul.mubr.f32.gmra.mxu0 %v2243
    %v2245 = vpop.f32.mrf.mxu0
    %v2246 = vadd.f32 %v2041, %v2245
    %v2247 = vpop.f32.mrf.mxu0
    %2248 = vmatprep.mubr.f32.mxu0 0.0
    %v2249 = vand.u32 %v53, 4294901760
    %v2250 = vsub.f32 %v53, %v2249
    %v2251 = vand.u32 %v2250, 4294901760
    %2252 = vmatmul.mubr.f32.gmra.mxu0 %v2251
    %v2253 = vpop.f32.mrf.mxu0
    %v2254 = vadd.f32 %v2048, %v2253
    %v2255 = vpop.f32.mrf.mxu0
    %2256 = vmatprep.mubr.f32.mxu0 0.0
    %v2257 = vand.u32 %v54, 4294901760
    %v2258 = vsub.f32 %v54, %v2257
    %v2259 = vand.u32 %v2258, 4294901760
    %2260 = vmatmul.mubr.f32.gmra.mxu0 %v2259
    %v2261 = vpop.f32.mrf.mxu0
    %v2262 = vadd.f32 %v2055, %v2261
    %v2263 = vpop.f32.mrf.mxu0
    %2264 = vmatprep.mubr.f32.mxu0 0.0
    %v2265 = vand.u32 %v55, 4294901760
    %v2266 = vsub.f32 %v55, %v2265
    %v2267 = vand.u32 %v2266, 4294901760
    %2268 = vmatmul.mubr.f32.gmra.mxu0 %v2267
    %v2269 = vpop.f32.mrf.mxu0
    %v2270 = vadd.f32 %v2062, %v2269
    %v2271 = vpop.f32.mrf.mxu0
    %2272 = vmatprep.mubr.f32.mxu0 0.0
    %v2273 = vand.u32 %v56, 4294901760
    %v2274 = vsub.f32 %v56, %v2273
    %v2275 = vand.u32 %v2274, 4294901760
    %2276 = vmatmul.mubr.f32.gmra.mxu0 %v2275
    %v2277 = vpop.f32.mrf.mxu0
    %v2278 = vadd.f32 %v2069, %v2277
    %v2279 = vpop.f32.mrf.mxu0
    %2280 = vdwg.mxu0
    %2281 = vmatprep.subr.mxu0 0.0
    %v2282 = vand.u32 %v1374, 4294901760
    %v2283 = vsub.f32 %v1374, %v2282
    %v2284 = vand.u32 %v2283, 4294901760
    %2285 = vmatpush1.msra.mxu0 %v2284
    %2286 = vmatprep.subr.mxu0 0.0
    %v2287 = vand.u32 %v1368, 4294901760
    %v2288 = vsub.f32 %v1368, %v2287
    %v2289 = vand.u32 %v2288, 4294901760
    %2290 = vmatpush1.msra.mxu0 %v2289
    %2291 = vmatprep.subr.mxu0 0.0
    %v2292 = vand.u32 %v1362, 4294901760
    %v2293 = vsub.f32 %v1362, %v2292
    %v2294 = vand.u32 %v2293, 4294901760
    %2295 = vmatpush1.msra.mxu0 %v2294
    %2296 = vmatprep.subr.mxu0 0.0
    %v2297 = vand.u32 %v1356, 4294901760
    %v2298 = vsub.f32 %v1356, %v2297
    %v2299 = vand.u32 %v2298, 4294901760
    %2300 = vmatpush1.msra.mxu0 %v2299
    %2301 = vmatprep.subr.mxu0 0.0
    %v2302 = vand.u32 %v1350, 4294901760
    %v2303 = vsub.f32 %v1350, %v2302
    %v2304 = vand.u32 %v2303, 4294901760
    %2305 = vmatpush1.msra.mxu0 %v2304
    %2306 = vmatprep.subr.mxu0 0.0
    %v2307 = vand.u32 %v1344, 4294901760
    %v2308 = vsub.f32 %v1344, %v2307
    %v2309 = vand.u32 %v2308, 4294901760
    %2310 = vmatpush1.msra.mxu0 %v2309
    %2311 = vmatprep.subr.mxu0 0.0
    %v2312 = vand.u32 %v1338, 4294901760
    %v2313 = vsub.f32 %v1338, %v2312
    %v2314 = vand.u32 %v2313, 4294901760
    %2315 = vmatpush1.msra.mxu0 %v2314
    %2316 = vmatprep.subr.mxu0 0.0
    %v2317 = vand.u32 %v1332, 4294901760
    %v2318 = vsub.f32 %v1332, %v2317
    %v2319 = vand.u32 %v2318, 4294901760
    %2320 = vmatpush1.msra.mxu0 %v2319
    %2321 = vmatprep.subr.mxu0 0.0
    %v2322 = vand.u32 %v1326, 4294901760
    %v2323 = vsub.f32 %v1326, %v2322
    %v2324 = vand.u32 %v2323, 4294901760
    %2325 = vmatpush1.msra.mxu0 %v2324
    %2326 = vmatprep.subr.mxu0 0.0
    %v2327 = vand.u32 %v1320, 4294901760
    %v2328 = vsub.f32 %v1320, %v2327
    %v2329 = vand.u32 %v2328, 4294901760
    %2330 = vmatpush1.msra.mxu0 %v2329
    %2331 = vmatprep.subr.mxu0 0.0
    %v2332 = vand.u32 %v1314, 4294901760
    %v2333 = vsub.f32 %v1314, %v2332
    %v2334 = vand.u32 %v2333, 4294901760
    %2335 = vmatpush1.msra.mxu0 %v2334
    %2336 = vmatprep.subr.mxu0 0.0
    %v2337 = vand.u32 %v1308, 4294901760
    %v2338 = vsub.f32 %v1308, %v2337
    %v2339 = vand.u32 %v2338, 4294901760
    %2340 = vmatpush1.msra.mxu0 %v2339
    %2341 = vmatprep.subr.mxu0 0.0
    %v2342 = vand.u32 %v1302, 4294901760
    %v2343 = vsub.f32 %v1302, %v2342
    %v2344 = vand.u32 %v2343, 4294901760
    %2345 = vmatpush1.msra.mxu0 %v2344
    %2346 = vmatprep.subr.mxu0 0.0
    %v2347 = vand.u32 %v1296, 4294901760
    %v2348 = vsub.f32 %v1296, %v2347
    %v2349 = vand.u32 %v2348, 4294901760
    %2350 = vmatpush1.msra.mxu0 %v2349
    %2351 = vmatprep.subr.mxu0 0.0
    %v2352 = vand.u32 %v1290, 4294901760
    %v2353 = vsub.f32 %v1290, %v2352
    %v2354 = vand.u32 %v2353, 4294901760
    %2355 = vmatpush1.msra.mxu0 %v2354
    %2356 = vmatprep.subr.mxu0 0.0
    %v2357 = vand.u32 %v1284, 4294901760
    %v2358 = vsub.f32 %v1284, %v2357
    %v2359 = vand.u32 %v2358, 4294901760
    %2360 = vmatpush1.msra.mxu0 %v2359
    %2361 = vmatprep.subr.mxu0 0.0
    %2362 = vmatpush2.msra.mxu0 0.0
    %2363 = vmatprep.subr.mxu0 0.0
    %2364 = vmatpush2.msra.mxu0 0.0
    %2365 = vmatprep.subr.mxu0 0.0
    %2366 = vmatpush2.msra.mxu0 0.0
    %2367 = vmatprep.subr.mxu0 0.0
    %2368 = vmatpush2.msra.mxu0 0.0
    %2369 = vmatprep.subr.mxu0 0.0
    %2370 = vmatpush2.msra.mxu0 0.0
    %2371 = vmatprep.subr.mxu0 0.0
    %2372 = vmatpush2.msra.mxu0 0.0
    %2373 = vmatprep.subr.mxu0 0.0
    %2374 = vmatpush2.msra.mxu0 0.0
    %2375 = vmatprep.subr.mxu0 0.0
    %2376 = vmatpush2.msra.mxu0 0.0
    %2377 = vmatprep.subr.mxu0 0.0
    %2378 = vmatpush2.msra.mxu0 0.0
    %2379 = vmatprep.subr.mxu0 0.0
    %2380 = vmatpush2.msra.mxu0 0.0
    %2381 = vmatprep.subr.mxu0 0.0
    %2382 = vmatpush2.msra.mxu0 0.0
    %2383 = vmatprep.subr.mxu0 0.0
    %2384 = vmatpush2.msra.mxu0 0.0
    %2385 = vmatprep.subr.mxu0 0.0
    %2386 = vmatpush2.msra.mxu0 0.0
    %2387 = vmatprep.subr.mxu0 0.0
    %2388 = vmatpush2.msra.mxu0 0.0
    %2389 = vmatprep.subr.mxu0 0.0
    %2390 = vmatpush2.msra.mxu0 0.0
    %2391 = vmatprep.subr.mxu0 0.0
    %2392 = vmatpush2.msra.mxu0 0.0
    %2393 = vmatprep.mubr.f32.mxu0 0.0
    %v2394 = vand.u32 %v41, 4294901760
    %2395 = vmatmul.mubr.f32.gmra.mxu0 %v2394
    %v2396 = vpop.f32.mrf.mxu0
    %v2397 = vadd.f32 %v2158, %v2396
    %v2398 = vpop.f32.mrf.mxu0
    %2399 = vmatprep.mubr.f32.mxu0 0.0
    %v2400 = vand.u32 %v42, 4294901760
    %2401 = vmatmul.mubr.f32.gmra.mxu0 %v2400
    %v2402 = vpop.f32.mrf.mxu0
    %v2403 = vadd.f32 %v2166, %v2402
    %v2404 = vpop.f32.mrf.mxu0
    %2405 = vmatprep.mubr.f32.mxu0 0.0
    %v2406 = vand.u32 %v43, 4294901760
    %2407 = vmatmul.mubr.f32.gmra.mxu0 %v2406
    %v2408 = vpop.f32.mrf.mxu0
    %v2409 = vadd.f32 %v2174, %v2408
    %v2410 = vpop.f32.mrf.mxu0
    %2411 = vmatprep.mubr.f32.mxu0 0.0
    %v2412 = vand.u32 %v44, 4294901760
    %2413 = vmatmul.mubr.f32.gmra.mxu0 %v2412
    %v2414 = vpop.f32.mrf.mxu0
    %v2415 = vadd.f32 %v2182, %v2414
    %v2416 = vpop.f32.mrf.mxu0
    %2417 = vmatprep.mubr.f32.mxu0 0.0
    %v2418 = vand.u32 %v45, 4294901760
    %2419 = vmatmul.mubr.f32.gmra.mxu0 %v2418
    %v2420 = vpop.f32.mrf.mxu0
    %v2421 = vadd.f32 %v2190, %v2420
    %v2422 = vpop.f32.mrf.mxu0
    %2423 = vmatprep.mubr.f32.mxu0 0.0
    %v2424 = vand.u32 %v46, 4294901760
    %2425 = vmatmul.mubr.f32.gmra.mxu0 %v2424
    %v2426 = vpop.f32.mrf.mxu0
    %v2427 = vadd.f32 %v2198, %v2426
    %v2428 = vpop.f32.mrf.mxu0
    %2429 = vmatprep.mubr.f32.mxu0 0.0
    %v2430 = vand.u32 %v47, 4294901760
    %2431 = vmatmul.mubr.f32.gmra.mxu0 %v2430
    %v2432 = vpop.f32.mrf.mxu0
    %v2433 = vadd.f32 %v2206, %v2432
    %v2434 = vpop.f32.mrf.mxu0
    %2435 = vmatprep.mubr.f32.mxu0 0.0
    %v2436 = vand.u32 %v48, 4294901760
    %2437 = vmatmul.mubr.f32.gmra.mxu0 %v2436
    %v2438 = vpop.f32.mrf.mxu0
    %v2439 = vadd.f32 %v2214, %v2438
    %v2440 = vpop.f32.mrf.mxu0
    %2441 = vmatprep.mubr.f32.mxu0 0.0
    %v2442 = vand.u32 %v49, 4294901760
    %2443 = vmatmul.mubr.f32.gmra.mxu0 %v2442
    %v2444 = vpop.f32.mrf.mxu0
    %v2445 = vadd.f32 %v2222, %v2444
    %v2446 = vpop.f32.mrf.mxu0
    %2447 = vmatprep.mubr.f32.mxu0 0.0
    %v2448 = vand.u32 %v50, 4294901760
    %2449 = vmatmul.mubr.f32.gmra.mxu0 %v2448
    %v2450 = vpop.f32.mrf.mxu0
    %v2451 = vadd.f32 %v2230, %v2450
    %v2452 = vpop.f32.mrf.mxu0
    %2453 = vmatprep.mubr.f32.mxu0 0.0
    %v2454 = vand.u32 %v51, 4294901760
    %2455 = vmatmul.mubr.f32.gmra.mxu0 %v2454
    %v2456 = vpop.f32.mrf.mxu0
    %v2457 = vadd.f32 %v2238, %v2456
    %v2458 = vpop.f32.mrf.mxu0
    %2459 = vmatprep.mubr.f32.mxu0 0.0
    %v2460 = vand.u32 %v52, 4294901760
    %2461 = vmatmul.mubr.f32.gmra.mxu0 %v2460
    %v2462 = vpop.f32.mrf.mxu0
    %v2463 = vadd.f32 %v2246, %v2462
    %v2464 = vpop.f32.mrf.mxu0
    %2465 = vmatprep.mubr.f32.mxu0 0.0
    %v2466 = vand.u32 %v53, 4294901760
    %2467 = vmatmul.mubr.f32.gmra.mxu0 %v2466
    %v2468 = vpop.f32.mrf.mxu0
    %v2469 = vadd.f32 %v2254, %v2468
    %v2470 = vpop.f32.mrf.mxu0
    %2471 = vmatprep.mubr.f32.mxu0 0.0
    %v2472 = vand.u32 %v54, 4294901760
    %2473 = vmatmul.mubr.f32.gmra.mxu0 %v2472
    %v2474 = vpop.f32.mrf.mxu0
    %v2475 = vadd.f32 %v2262, %v2474
    %v2476 = vpop.f32.mrf.mxu0
    %2477 = vmatprep.mubr.f32.mxu0 0.0
    %v2478 = vand.u32 %v55, 4294901760
    %2479 = vmatmul.mubr.f32.gmra.mxu0 %v2478
    %v2480 = vpop.f32.mrf.mxu0
    %v2481 = vadd.f32 %v2270, %v2480
    %v2482 = vpop.f32.mrf.mxu0
    %2483 = vmatprep.mubr.f32.mxu0 0.0
    %v2484 = vand.u32 %v56, 4294901760
    %2485 = vmatmul.mubr.f32.gmra.mxu0 %v2484
    %v2486 = vpop.f32.mrf.mxu0
    %v2487 = vadd.f32 %v2278, %v2486
    %v2488 = vpop.f32.mrf.mxu0
    %2489 = vdwg.mxu0
    %2490 = vmatprep.subr.mxu0 0.0
    %v2491 = vand.u32 %v1374, 4294901760
    %2492 = vmatpush1.msra.mxu0 %v2491
    %2493 = vmatprep.subr.mxu0 0.0
    %v2494 = vand.u32 %v1368, 4294901760
    %2495 = vmatpush1.msra.mxu0 %v2494
    %2496 = vmatprep.subr.mxu0 0.0
    %v2497 = vand.u32 %v1362, 4294901760
    %2498 = vmatpush1.msra.mxu0 %v2497
    %2499 = vmatprep.subr.mxu0 0.0
    %v2500 = vand.u32 %v1356, 4294901760
    %2501 = vmatpush1.msra.mxu0 %v2500
    %2502 = vmatprep.subr.mxu0 0.0
    %v2503 = vand.u32 %v1350, 4294901760
    %2504 = vmatpush1.msra.mxu0 %v2503
    %2505 = vmatprep.subr.mxu0 0.0
    %v2506 = vand.u32 %v1344, 4294901760
    %2507 = vmatpush1.msra.mxu0 %v2506
    %2508 = vmatprep.subr.mxu0 0.0
    %v2509 = vand.u32 %v1338, 4294901760
    %2510 = vmatpush1.msra.mxu0 %v2509
    %2511 = vmatprep.subr.mxu0 0.0
    %v2512 = vand.u32 %v1332, 4294901760
    %2513 = vmatpush1.msra.mxu0 %v2512
    %2514 = vmatprep.subr.mxu0 0.0
    %v2515 = vand.u32 %v1326, 4294901760
    %2516 = vmatpush1.msra.mxu0 %v2515
    %2517 = vmatprep.subr.mxu0 0.0
    %v2518 = vand.u32 %v1320, 4294901760
    %2519 = vmatpush1.msra.mxu0 %v2518
    %2520 = vmatprep.subr.mxu0 0.0
    %v2521 = vand.u32 %v1314, 4294901760
    %2522 = vmatpush1.msra.mxu0 %v2521
    %2523 = vmatprep.subr.mxu0 0.0
    %v2524 = vand.u32 %v1308, 4294901760
    %2525 = vmatpush1.msra.mxu0 %v2524
    %2526 = vmatprep.subr.mxu0 0.0
    %v2527 = vand.u32 %v1302, 4294901760
    %2528 = vmatpush1.msra.mxu0 %v2527
    %2529 = vmatprep.subr.mxu0 0.0
    %v2530 = vand.u32 %v1296, 4294901760
    %2531 = vmatpush1.msra.mxu0 %v2530
    %2532 = vmatprep.subr.mxu0 0.0
    %v2533 = vand.u32 %v1290, 4294901760
    %2534 = vmatpush1.msra.mxu0 %v2533
    %2535 = vmatprep.subr.mxu0 0.0
    %v2536 = vand.u32 %v1284, 4294901760
    %2537 = vmatpush1.msra.mxu0 %v2536
    %2538 = vmatprep.subr.mxu0 0.0
    %2539 = vmatpush2.msra.mxu0 0.0
    %2540 = vmatprep.subr.mxu0 0.0
    %2541 = vmatpush2.msra.mxu0 0.0
    %2542 = vmatprep.subr.mxu0 0.0
    %2543 = vmatpush2.msra.mxu0 0.0
    %2544 = vmatprep.subr.mxu0 0.0
    %2545 = vmatpush2.msra.mxu0 0.0
    %2546 = vmatprep.subr.mxu0 0.0
    %2547 = vmatpush2.msra.mxu0 0.0
    %2548 = vmatprep.subr.mxu0 0.0
    %2549 = vmatpush2.msra.mxu0 0.0
    %2550 = vmatprep.subr.mxu0 0.0
    %2551 = vmatpush2.msra.mxu0 0.0
    %2552 = vmatprep.subr.mxu0 0.0
    %2553 = vmatpush2.msra.mxu0 0.0
    %2554 = vmatprep.subr.mxu0 0.0
    %2555 = vmatpush2.msra.mxu0 0.0
    %2556 = vmatprep.subr.mxu0 0.0
    %2557 = vmatpush2.msra.mxu0 0.0
    %2558 = vmatprep.subr.mxu0 0.0
    %2559 = vmatpush2.msra.mxu0 0.0
    %2560 = vmatprep.subr.mxu0 0.0
    %2561 = vmatpush2.msra.mxu0 0.0
    %2562 = vmatprep.subr.mxu0 0.0
    %2563 = vmatpush2.msra.mxu0 0.0
    %2564 = vmatprep.subr.mxu0 0.0
    %2565 = vmatpush2.msra.mxu0 0.0
    %2566 = vmatprep.subr.mxu0 0.0
    %2567 = vmatpush2.msra.mxu0 0.0
    %2568 = vmatprep.subr.mxu0 0.0
    %2569 = vmatpush2.msra.mxu0 0.0
    %2570 = vmatprep.mubr.f32.mxu0 0.0
    %v2571 = vand.u32 %v41, 4294901760
    %2572 = vmatmul.mubr.f32.gmra.mxu0 %v2571
    %v2573 = vpop.f32.mrf.mxu0
    %v2574 = vadd.f32 %v2397, %v2573
    %v2575 = vpop.f32.mrf.mxu0
    %2576 = vmatprep.mubr.f32.mxu0 0.0
    %v2577 = vand.u32 %v42, 4294901760
    %2578 = vmatmul.mubr.f32.gmra.mxu0 %v2577
    %v2579 = vpop.f32.mrf.mxu0
    %v2580 = vadd.f32 %v2403, %v2579
    %v2581 = vpop.f32.mrf.mxu0
    %2582 = vmatprep.mubr.f32.mxu0 0.0
    %v2583 = vand.u32 %v43, 4294901760
    %2584 = vmatmul.mubr.f32.gmra.mxu0 %v2583
    %v2585 = vpop.f32.mrf.mxu0
    %v2586 = vadd.f32 %v2409, %v2585
    %v2587 = vpop.f32.mrf.mxu0
    %2588 = vmatprep.mubr.f32.mxu0 0.0
    %v2589 = vand.u32 %v44, 4294901760
    %2590 = vmatmul.mubr.f32.gmra.mxu0 %v2589
    %v2591 = vpop.f32.mrf.mxu0
    %v2592 = vadd.f32 %v2415, %v2591
    %v2593 = vpop.f32.mrf.mxu0
    %2594 = vmatprep.mubr.f32.mxu0 0.0
    %v2595 = vand.u32 %v45, 4294901760
    %2596 = vmatmul.mubr.f32.gmra.mxu0 %v2595
    %v2597 = vpop.f32.mrf.mxu0
    %v2598 = vadd.f32 %v2421, %v2597
    %v2599 = vpop.f32.mrf.mxu0
    %2600 = vmatprep.mubr.f32.mxu0 0.0
    %v2601 = vand.u32 %v46, 4294901760
    %2602 = vmatmul.mubr.f32.gmra.mxu0 %v2601
    %v2603 = vpop.f32.mrf.mxu0
    %v2604 = vadd.f32 %v2427, %v2603
    %v2605 = vpop.f32.mrf.mxu0
    %2606 = vmatprep.mubr.f32.mxu0 0.0
    %v2607 = vand.u32 %v47, 4294901760
    %2608 = vmatmul.mubr.f32.gmra.mxu0 %v2607
    %v2609 = vpop.f32.mrf.mxu0
    %v2610 = vadd.f32 %v2433, %v2609
    %v2611 = vpop.f32.mrf.mxu0
    %2612 = vmatprep.mubr.f32.mxu0 0.0
    %v2613 = vand.u32 %v48, 4294901760
    %2614 = vmatmul.mubr.f32.gmra.mxu0 %v2613
    %v2615 = vpop.f32.mrf.mxu0
    %v2616 = vadd.f32 %v2439, %v2615
    %v2617 = vpop.f32.mrf.mxu0
    %2618 = vmatprep.mubr.f32.mxu0 0.0
    %v2619 = vand.u32 %v49, 4294901760
    %2620 = vmatmul.mubr.f32.gmra.mxu0 %v2619
    %v2621 = vpop.f32.mrf.mxu0
    %v2622 = vadd.f32 %v2445, %v2621
    %v2623 = vpop.f32.mrf.mxu0
    %2624 = vmatprep.mubr.f32.mxu0 0.0
    %v2625 = vand.u32 %v50, 4294901760
    %2626 = vmatmul.mubr.f32.gmra.mxu0 %v2625
    %v2627 = vpop.f32.mrf.mxu0
    %v2628 = vadd.f32 %v2451, %v2627
    %v2629 = vpop.f32.mrf.mxu0
    %2630 = vmatprep.mubr.f32.mxu0 0.0
    %v2631 = vand.u32 %v51, 4294901760
    %2632 = vmatmul.mubr.f32.gmra.mxu0 %v2631
    %v2633 = vpop.f32.mrf.mxu0
    %v2634 = vadd.f32 %v2457, %v2633
    %v2635 = vpop.f32.mrf.mxu0
    %2636 = vmatprep.mubr.f32.mxu0 0.0
    %v2637 = vand.u32 %v52, 4294901760
    %2638 = vmatmul.mubr.f32.gmra.mxu0 %v2637
    %v2639 = vpop.f32.mrf.mxu0
    %v2640 = vadd.f32 %v2463, %v2639
    %v2641 = vpop.f32.mrf.mxu0
    %2642 = vmatprep.mubr.f32.mxu0 0.0
    %v2643 = vand.u32 %v53, 4294901760
    %2644 = vmatmul.mubr.f32.gmra.mxu0 %v2643
    %v2645 = vpop.f32.mrf.mxu0
    %v2646 = vadd.f32 %v2469, %v2645
    %v2647 = vpop.f32.mrf.mxu0
    %2648 = vmatprep.mubr.f32.mxu0 0.0
    %v2649 = vand.u32 %v54, 4294901760
    %2650 = vmatmul.mubr.f32.gmra.mxu0 %v2649
    %v2651 = vpop.f32.mrf.mxu0
    %v2652 = vadd.f32 %v2475, %v2651
    %v2653 = vpop.f32.mrf.mxu0
    %2654 = vmatprep.mubr.f32.mxu0 0.0
    %v2655 = vand.u32 %v55, 4294901760
    %2656 = vmatmul.mubr.f32.gmra.mxu0 %v2655
    %v2657 = vpop.f32.mrf.mxu0
    %v2658 = vadd.f32 %v2481, %v2657
    %v2659 = vpop.f32.mrf.mxu0
    %2660 = vmatprep.mubr.f32.mxu0 0.0
    %v2661 = vand.u32 %v56, 4294901760
    %2662 = vmatmul.mubr.f32.gmra.mxu0 %v2661
    %v2663 = vpop.f32.mrf.mxu0
    %v2664 = vadd.f32 %v2487, %v2663
    %v2665 = vpop.f32.mrf.mxu0
    %2666 = vdwg.mxu0
    %v2667 = vmax.f32 %v2574, 0.0
    %v2668 = vmax.f32 %v2580, 0.0
    %v2669 = vmax.f32 %v2586, 0.0
    %v2670 = vmax.f32 %v2592, 0.0
    %v2671 = vmax.f32 %v2598, 0.0
    %v2672 = vmax.f32 %v2604, 0.0
    %v2673 = vmax.f32 %v2610, 0.0
    %v2674 = vmax.f32 %v2616, 0.0
    %v2675 = vmax.f32 %v2622, 0.0
    %v2676 = vmax.f32 %v2628, 0.0
    %v2677 = vmax.f32 %v2634, 0.0
    %v2678 = vmax.f32 %v2640, 0.0
    %v2679 = vmax.f32 %v2646, 0.0
    %v2680 = vmax.f32 %v2652, 0.0
    %v2681 = vmax.f32 %v2658, 0.0
    %v2682 = vmax.f32 %v2664, 0.0
    %2683 = vmatprep.subr.mxu0 0.0
    %v2684 = vand.u32 %v89, 4294901760
    %2685 = vmatpush1.msra.mxu0 %v2684
    %2686 = vmatprep.subr.mxu0 0.0
    %v2687 = vand.u32 %v88, 4294901760
    %2688 = vmatpush1.msra.mxu0 %v2687
    %2689 = vmatprep.subr.mxu0 0.0
    %v2690 = vand.u32 %v87, 4294901760
    %2691 = vmatpush1.msra.mxu0 %v2690
    %2692 = vmatprep.subr.mxu0 0.0
    %v2693 = vand.u32 %v86, 4294901760
    %2694 = vmatpush1.msra.mxu0 %v2693
    %2695 = vmatprep.subr.mxu0 0.0
    %v2696 = vand.u32 %v85, 4294901760
    %2697 = vmatpush1.msra.mxu0 %v2696
    %2698 = vmatprep.subr.mxu0 0.0
    %v2699 = vand.u32 %v84, 4294901760
    %2700 = vmatpush1.msra.mxu0 %v2699
    %2701 = vmatprep.subr.mxu0 0.0
    %v2702 = vand.u32 %v83, 4294901760
    %2703 = vmatpush1.msra.mxu0 %v2702
    %2704 = vmatprep.subr.mxu0 0.0
    %v2705 = vand.u32 %v82, 4294901760
    %2706 = vmatpush1.msra.mxu0 %v2705
    %2707 = vmatprep.subr.mxu0 0.0
    %v2708 = vand.u32 %v81, 4294901760
    %2709 = vmatpush1.msra.mxu0 %v2708
    %2710 = vmatprep.subr.mxu0 0.0
    %v2711 = vand.u32 %v80, 4294901760
    %2712 = vmatpush1.msra.mxu0 %v2711
    %2713 = vmatprep.subr.mxu0 0.0
    %v2714 = vand.u32 %v79, 4294901760
    %2715 = vmatpush1.msra.mxu0 %v2714
    %2716 = vmatprep.subr.mxu0 0.0
    %v2717 = vand.u32 %v78, 4294901760
    %2718 = vmatpush1.msra.mxu0 %v2717
    %2719 = vmatprep.subr.mxu0 0.0
    %v2720 = vand.u32 %v77, 4294901760
    %2721 = vmatpush1.msra.mxu0 %v2720
    %2722 = vmatprep.subr.mxu0 0.0
    %v2723 = vand.u32 %v76, 4294901760
    %2724 = vmatpush1.msra.mxu0 %v2723
    %2725 = vmatprep.subr.mxu0 0.0
    %v2726 = vand.u32 %v75, 4294901760
    %2727 = vmatpush1.msra.mxu0 %v2726
    %2728 = vmatprep.subr.mxu0 0.0
    %v2729 = vand.u32 %v74, 4294901760
    %2730 = vmatpush1.msra.mxu0 %v2729
    %2731 = vmatprep.subr.mxu0 0.0
    %2732 = vmatpush2.msra.mxu0 0.0
    %2733 = vmatprep.subr.mxu0 0.0
    %2734 = vmatpush2.msra.mxu0 0.0
    %2735 = vmatprep.subr.mxu0 0.0
    %2736 = vmatpush2.msra.mxu0 0.0
    %2737 = vmatprep.subr.mxu0 0.0
    %2738 = vmatpush2.msra.mxu0 0.0
    %2739 = vmatprep.subr.mxu0 0.0
    %2740 = vmatpush2.msra.mxu0 0.0
    %2741 = vmatprep.subr.mxu0 0.0
    %2742 = vmatpush2.msra.mxu0 0.0
    %2743 = vmatprep.subr.mxu0 0.0
    %2744 = vmatpush2.msra.mxu0 0.0
    %2745 = vmatprep.subr.mxu0 0.0
    %2746 = vmatpush2.msra.mxu0 0.0
    %2747 = vmatprep.subr.mxu0 0.0
    %2748 = vmatpush2.msra.mxu0 0.0
    %2749 = vmatprep.subr.mxu0 0.0
    %2750 = vmatpush2.msra.mxu0 0.0
    %2751 = vmatprep.subr.mxu0 0.0
    %2752 = vmatpush2.msra.mxu0 0.0
    %2753 = vmatprep.subr.mxu0 0.0
    %2754 = vmatpush2.msra.mxu0 0.0
    %2755 = vmatprep.subr.mxu0 0.0
    %2756 = vmatpush2.msra.mxu0 0.0
    %2757 = vmatprep.subr.mxu0 0.0
    %2758 = vmatpush2.msra.mxu0 0.0
    %2759 = vmatprep.subr.mxu0 0.0
    %2760 = vmatpush2.msra.mxu0 0.0
    %2761 = vmatprep.subr.mxu0 0.0
    %2762 = vmatpush2.msra.mxu0 0.0
    %2763 = vmatprep.mubr.f32.mxu0 0.0
    %v2764 = vand.u32 %v2667, 4294901760
    %v2765 = vsub.f32 %v2667, %v2764
    %v2766 = vand.u32 %v2765, 4294901760
    %v2767 = vsub.f32 %v2765, %v2766
    %v2768 = vand.u32 %v2767, 4294901760
    %2769 = vmatmul.mubr.f32.gmra.mxu0 %v2768
    %v2770 = vpop.f32.mrf.mxu0
    %v2771 = vadd.f32 0.0, %v2770
    %v2772 = vpop.f32.mrf.mxu0
    %2773 = vmatprep.mubr.f32.mxu0 0.0
    %v2774 = vand.u32 %v2668, 4294901760
    %v2775 = vsub.f32 %v2668, %v2774
    %v2776 = vand.u32 %v2775, 4294901760
    %v2777 = vsub.f32 %v2775, %v2776
    %v2778 = vand.u32 %v2777, 4294901760
    %2779 = vmatmul.mubr.f32.gmra.mxu0 %v2778
    %v2780 = vpop.f32.mrf.mxu0
    %v2781 = vadd.f32 0.0, %v2780
    %v2782 = vpop.f32.mrf.mxu0
    %2783 = vmatprep.mubr.f32.mxu0 0.0
    %v2784 = vand.u32 %v2669, 4294901760
    %v2785 = vsub.f32 %v2669, %v2784
    %v2786 = vand.u32 %v2785, 4294901760
    %v2787 = vsub.f32 %v2785, %v2786
    %v2788 = vand.u32 %v2787, 4294901760
    %2789 = vmatmul.mubr.f32.gmra.mxu0 %v2788
    %v2790 = vpop.f32.mrf.mxu0
    %v2791 = vadd.f32 0.0, %v2790
    %v2792 = vpop.f32.mrf.mxu0
    %2793 = vmatprep.mubr.f32.mxu0 0.0
    %v2794 = vand.u32 %v2670, 4294901760
    %v2795 = vsub.f32 %v2670, %v2794
    %v2796 = vand.u32 %v2795, 4294901760
    %v2797 = vsub.f32 %v2795, %v2796
    %v2798 = vand.u32 %v2797, 4294901760
    %2799 = vmatmul.mubr.f32.gmra.mxu0 %v2798
    %v2800 = vpop.f32.mrf.mxu0
    %v2801 = vadd.f32 0.0, %v2800
    %v2802 = vpop.f32.mrf.mxu0
    %2803 = vmatprep.mubr.f32.mxu0 0.0
    %v2804 = vand.u32 %v2671, 4294901760
    %v2805 = vsub.f32 %v2671, %v2804
    %v2806 = vand.u32 %v2805, 4294901760
    %v2807 = vsub.f32 %v2805, %v2806
    %v2808 = vand.u32 %v2807, 4294901760
    %2809 = vmatmul.mubr.f32.gmra.mxu0 %v2808
    %v2810 = vpop.f32.mrf.mxu0
    %v2811 = vadd.f32 0.0, %v2810
    %v2812 = vpop.f32.mrf.mxu0
    %2813 = vmatprep.mubr.f32.mxu0 0.0
    %v2814 = vand.u32 %v2672, 4294901760
    %v2815 = vsub.f32 %v2672, %v2814
    %v2816 = vand.u32 %v2815, 4294901760
    %v2817 = vsub.f32 %v2815, %v2816
    %v2818 = vand.u32 %v2817, 4294901760
    %2819 = vmatmul.mubr.f32.gmra.mxu0 %v2818
    %v2820 = vpop.f32.mrf.mxu0
    %v2821 = vadd.f32 0.0, %v2820
    %v2822 = vpop.f32.mrf.mxu0
    %2823 = vmatprep.mubr.f32.mxu0 0.0
    %v2824 = vand.u32 %v2673, 4294901760
    %v2825 = vsub.f32 %v2673, %v2824
    %v2826 = vand.u32 %v2825, 4294901760
    %v2827 = vsub.f32 %v2825, %v2826
    %v2828 = vand.u32 %v2827, 4294901760
    %2829 = vmatmul.mubr.f32.gmra.mxu0 %v2828
    %v2830 = vpop.f32.mrf.mxu0
    %v2831 = vadd.f32 0.0, %v2830
    %v2832 = vpop.f32.mrf.mxu0
    %2833 = vmatprep.mubr.f32.mxu0 0.0
    %v2834 = vand.u32 %v2674, 4294901760
    %v2835 = vsub.f32 %v2674, %v2834
    %v2836 = vand.u32 %v2835, 4294901760
    %v2837 = vsub.f32 %v2835, %v2836
    %v2838 = vand.u32 %v2837, 4294901760
    %2839 = vmatmul.mubr.f32.gmra.mxu0 %v2838
    %v2840 = vpop.f32.mrf.mxu0
    %v2841 = vadd.f32 0.0, %v2840
    %v2842 = vpop.f32.mrf.mxu0
    %2843 = vmatprep.mubr.f32.mxu0 0.0
    %v2844 = vand.u32 %v2675, 4294901760
    %v2845 = vsub.f32 %v2675, %v2844
    %v2846 = vand.u32 %v2845, 4294901760
    %v2847 = vsub.f32 %v2845, %v2846
    %v2848 = vand.u32 %v2847, 4294901760
    %2849 = vmatmul.mubr.f32.gmra.mxu0 %v2848
    %v2850 = vpop.f32.mrf.mxu0
    %v2851 = vadd.f32 0.0, %v2850
    %v2852 = vpop.f32.mrf.mxu0
    %2853 = vmatprep.mubr.f32.mxu0 0.0
    %v2854 = vand.u32 %v2676, 4294901760
    %v2855 = vsub.f32 %v2676, %v2854
    %v2856 = vand.u32 %v2855, 4294901760
    %v2857 = vsub.f32 %v2855, %v2856
    %v2858 = vand.u32 %v2857, 4294901760
    %2859 = vmatmul.mubr.f32.gmra.mxu0 %v2858
    %v2860 = vpop.f32.mrf.mxu0
    %v2861 = vadd.f32 0.0, %v2860
    %v2862 = vpop.f32.mrf.mxu0
    %2863 = vmatprep.mubr.f32.mxu0 0.0
    %v2864 = vand.u32 %v2677, 4294901760
    %v2865 = vsub.f32 %v2677, %v2864
    %v2866 = vand.u32 %v2865, 4294901760
    %v2867 = vsub.f32 %v2865, %v2866
    %v2868 = vand.u32 %v2867, 4294901760
    %2869 = vmatmul.mubr.f32.gmra.mxu0 %v2868
    %v2870 = vpop.f32.mrf.mxu0
    %v2871 = vadd.f32 0.0, %v2870
    %v2872 = vpop.f32.mrf.mxu0
    %2873 = vmatprep.mubr.f32.mxu0 0.0
    %v2874 = vand.u32 %v2678, 4294901760
    %v2875 = vsub.f32 %v2678, %v2874
    %v2876 = vand.u32 %v2875, 4294901760
    %v2877 = vsub.f32 %v2875, %v2876
    %v2878 = vand.u32 %v2877, 4294901760
    %2879 = vmatmul.mubr.f32.gmra.mxu0 %v2878
    %v2880 = vpop.f32.mrf.mxu0
    %v2881 = vadd.f32 0.0, %v2880
    %v2882 = vpop.f32.mrf.mxu0
    %2883 = vmatprep.mubr.f32.mxu0 0.0
    %v2884 = vand.u32 %v2679, 4294901760
    %v2885 = vsub.f32 %v2679, %v2884
    %v2886 = vand.u32 %v2885, 4294901760
    %v2887 = vsub.f32 %v2885, %v2886
    %v2888 = vand.u32 %v2887, 4294901760
    %2889 = vmatmul.mubr.f32.gmra.mxu0 %v2888
    %v2890 = vpop.f32.mrf.mxu0
    %v2891 = vadd.f32 0.0, %v2890
    %v2892 = vpop.f32.mrf.mxu0
    %2893 = vmatprep.mubr.f32.mxu0 0.0
    %v2894 = vand.u32 %v2680, 4294901760
    %v2895 = vsub.f32 %v2680, %v2894
    %v2896 = vand.u32 %v2895, 4294901760
    %v2897 = vsub.f32 %v2895, %v2896
    %v2898 = vand.u32 %v2897, 4294901760
    %2899 = vmatmul.mubr.f32.gmra.mxu0 %v2898
    %v2900 = vpop.f32.mrf.mxu0
    %v2901 = vadd.f32 0.0, %v2900
    %v2902 = vpop.f32.mrf.mxu0
    %2903 = vmatprep.mubr.f32.mxu0 0.0
    %v2904 = vand.u32 %v2681, 4294901760
    %v2905 = vsub.f32 %v2681, %v2904
    %v2906 = vand.u32 %v2905, 4294901760
    %v2907 = vsub.f32 %v2905, %v2906
    %v2908 = vand.u32 %v2907, 4294901760
    %2909 = vmatmul.mubr.f32.gmra.mxu0 %v2908
    %v2910 = vpop.f32.mrf.mxu0
    %v2911 = vadd.f32 0.0, %v2910
    %v2912 = vpop.f32.mrf.mxu0
    %2913 = vmatprep.mubr.f32.mxu0 0.0
    %v2914 = vand.u32 %v2682, 4294901760
    %v2915 = vsub.f32 %v2682, %v2914
    %v2916 = vand.u32 %v2915, 4294901760
    %v2917 = vsub.f32 %v2915, %v2916
    %v2918 = vand.u32 %v2917, 4294901760
    %2919 = vmatmul.mubr.f32.gmra.mxu0 %v2918
    %v2920 = vpop.f32.mrf.mxu0
    %v2921 = vadd.f32 0.0, %v2920
    %v2922 = vpop.f32.mrf.mxu0
    %2923 = vdwg.mxu0
    %2924 = vmatprep.subr.mxu0 0.0
    %v2925 = vand.u32 %v89, 4294901760
    %v2926 = vsub.f32 %v89, %v2925
    %v2927 = vand.u32 %v2926, 4294901760
    %v2928 = vsub.f32 %v2926, %v2927
    %v2929 = vand.u32 %v2928, 4294901760
    %2930 = vmatpush1.msra.mxu0 %v2929
    %2931 = vmatprep.subr.mxu0 0.0
    %v2932 = vand.u32 %v88, 4294901760
    %v2933 = vsub.f32 %v88, %v2932
    %v2934 = vand.u32 %v2933, 4294901760
    %v2935 = vsub.f32 %v2933, %v2934
    %v2936 = vand.u32 %v2935, 4294901760
    %2937 = vmatpush1.msra.mxu0 %v2936
    %2938 = vmatprep.subr.mxu0 0.0
    %v2939 = vand.u32 %v87, 4294901760
    %v2940 = vsub.f32 %v87, %v2939
    %v2941 = vand.u32 %v2940, 4294901760
    %v2942 = vsub.f32 %v2940, %v2941
    %v2943 = vand.u32 %v2942, 4294901760
    %2944 = vmatpush1.msra.mxu0 %v2943
    %2945 = vmatprep.subr.mxu0 0.0
    %v2946 = vand.u32 %v86, 4294901760
    %v2947 = vsub.f32 %v86, %v2946
    %v2948 = vand.u32 %v2947, 4294901760
    %v2949 = vsub.f32 %v2947, %v2948
    %v2950 = vand.u32 %v2949, 4294901760
    %2951 = vmatpush1.msra.mxu0 %v2950
    %2952 = vmatprep.subr.mxu0 0.0
    %v2953 = vand.u32 %v85, 4294901760
    %v2954 = vsub.f32 %v85, %v2953
    %v2955 = vand.u32 %v2954, 4294901760
    %v2956 = vsub.f32 %v2954, %v2955
    %v2957 = vand.u32 %v2956, 4294901760
    %2958 = vmatpush1.msra.mxu0 %v2957
    %2959 = vmatprep.subr.mxu0 0.0
    %v2960 = vand.u32 %v84, 4294901760
    %v2961 = vsub.f32 %v84, %v2960
    %v2962 = vand.u32 %v2961, 4294901760
    %v2963 = vsub.f32 %v2961, %v2962
    %v2964 = vand.u32 %v2963, 4294901760
    %2965 = vmatpush1.msra.mxu0 %v2964
    %2966 = vmatprep.subr.mxu0 0.0
    %v2967 = vand.u32 %v83, 4294901760
    %v2968 = vsub.f32 %v83, %v2967
    %v2969 = vand.u32 %v2968, 4294901760
    %v2970 = vsub.f32 %v2968, %v2969
    %v2971 = vand.u32 %v2970, 4294901760
    %2972 = vmatpush1.msra.mxu0 %v2971
    %2973 = vmatprep.subr.mxu0 0.0
    %v2974 = vand.u32 %v82, 4294901760
    %v2975 = vsub.f32 %v82, %v2974
    %v2976 = vand.u32 %v2975, 4294901760
    %v2977 = vsub.f32 %v2975, %v2976
    %v2978 = vand.u32 %v2977, 4294901760
    %2979 = vmatpush1.msra.mxu0 %v2978
    %2980 = vmatprep.subr.mxu0 0.0
    %v2981 = vand.u32 %v81, 4294901760
    %v2982 = vsub.f32 %v81, %v2981
    %v2983 = vand.u32 %v2982, 4294901760
    %v2984 = vsub.f32 %v2982, %v2983
    %v2985 = vand.u32 %v2984, 4294901760
    %2986 = vmatpush1.msra.mxu0 %v2985
    %2987 = vmatprep.subr.mxu0 0.0
    %v2988 = vand.u32 %v80, 4294901760
    %v2989 = vsub.f32 %v80, %v2988
    %v2990 = vand.u32 %v2989, 4294901760
    %v2991 = vsub.f32 %v2989, %v2990
    %v2992 = vand.u32 %v2991, 4294901760
    %2993 = vmatpush1.msra.mxu0 %v2992
    %2994 = vmatprep.subr.mxu0 0.0
    %v2995 = vand.u32 %v79, 4294901760
    %v2996 = vsub.f32 %v79, %v2995
    %v2997 = vand.u32 %v2996, 4294901760
    %v2998 = vsub.f32 %v2996, %v2997
    %v2999 = vand.u32 %v2998, 4294901760
    %3000 = vmatpush1.msra.mxu0 %v2999
    %3001 = vmatprep.subr.mxu0 0.0
    %v3002 = vand.u32 %v78, 4294901760
    %v3003 = vsub.f32 %v78, %v3002
    %v3004 = vand.u32 %v3003, 4294901760
    %v3005 = vsub.f32 %v3003, %v3004
    %v3006 = vand.u32 %v3005, 4294901760
    %3007 = vmatpush1.msra.mxu0 %v3006
    %3008 = vmatprep.subr.mxu0 0.0
    %v3009 = vand.u32 %v77, 4294901760
    %v3010 = vsub.f32 %v77, %v3009
    %v3011 = vand.u32 %v3010, 4294901760
    %v3012 = vsub.f32 %v3010, %v3011
    %v3013 = vand.u32 %v3012, 4294901760
    %3014 = vmatpush1.msra.mxu0 %v3013
    %3015 = vmatprep.subr.mxu0 0.0
    %v3016 = vand.u32 %v76, 4294901760
    %v3017 = vsub.f32 %v76, %v3016
    %v3018 = vand.u32 %v3017, 4294901760
    %v3019 = vsub.f32 %v3017, %v3018
    %v3020 = vand.u32 %v3019, 4294901760
    %3021 = vmatpush1.msra.mxu0 %v3020
    %3022 = vmatprep.subr.mxu0 0.0
    %v3023 = vand.u32 %v75, 4294901760
    %v3024 = vsub.f32 %v75, %v3023
    %v3025 = vand.u32 %v3024, 4294901760
    %v3026 = vsub.f32 %v3024, %v3025
    %v3027 = vand.u32 %v3026, 4294901760
    %3028 = vmatpush1.msra.mxu0 %v3027
    %3029 = vmatprep.subr.mxu0 0.0
    %v3030 = vand.u32 %v74, 4294901760
    %v3031 = vsub.f32 %v74, %v3030
    %v3032 = vand.u32 %v3031, 4294901760
    %v3033 = vsub.f32 %v3031, %v3032
    %v3034 = vand.u32 %v3033, 4294901760
    %3035 = vmatpush1.msra.mxu0 %v3034
    %3036 = vmatprep.subr.mxu0 0.0
    %3037 = vmatpush2.msra.mxu0 0.0
    %3038 = vmatprep.subr.mxu0 0.0
    %3039 = vmatpush2.msra.mxu0 0.0
    %3040 = vmatprep.subr.mxu0 0.0
    %3041 = vmatpush2.msra.mxu0 0.0
    %3042 = vmatprep.subr.mxu0 0.0
    %3043 = vmatpush2.msra.mxu0 0.0
    %3044 = vmatprep.subr.mxu0 0.0
    %3045 = vmatpush2.msra.mxu0 0.0
    %3046 = vmatprep.subr.mxu0 0.0
    %3047 = vmatpush2.msra.mxu0 0.0
    %3048 = vmatprep.subr.mxu0 0.0
    %3049 = vmatpush2.msra.mxu0 0.0
    %3050 = vmatprep.subr.mxu0 0.0
    %3051 = vmatpush2.msra.mxu0 0.0
    %3052 = vmatprep.subr.mxu0 0.0
    %3053 = vmatpush2.msra.mxu0 0.0
    %3054 = vmatprep.subr.mxu0 0.0
    %3055 = vmatpush2.msra.mxu0 0.0
    %3056 = vmatprep.subr.mxu0 0.0
    %3057 = vmatpush2.msra.mxu0 0.0
    %3058 = vmatprep.subr.mxu0 0.0
    %3059 = vmatpush2.msra.mxu0 0.0
    %3060 = vmatprep.subr.mxu0 0.0
    %3061 = vmatpush2.msra.mxu0 0.0
    %3062 = vmatprep.subr.mxu0 0.0
    %3063 = vmatpush2.msra.mxu0 0.0
    %3064 = vmatprep.subr.mxu0 0.0
    %3065 = vmatpush2.msra.mxu0 0.0
    %3066 = vmatprep.subr.mxu0 0.0
    %3067 = vmatpush2.msra.mxu0 0.0
    %3068 = vmatprep.mubr.f32.mxu0 0.0
    %v3069 = vand.u32 %v2667, 4294901760
    %3070 = vmatmul.mubr.f32.gmra.mxu0 %v3069
    %v3071 = vpop.f32.mrf.mxu0
    %v3072 = vadd.f32 %v2771, %v3071
    %v3073 = vpop.f32.mrf.mxu0
    %3074 = vmatprep.mubr.f32.mxu0 0.0
    %v3075 = vand.u32 %v2668, 4294901760
    %3076 = vmatmul.mubr.f32.gmra.mxu0 %v3075
    %v3077 = vpop.f32.mrf.mxu0
    %v3078 = vadd.f32 %v2781, %v3077
    %v3079 = vpop.f32.mrf.mxu0
    %3080 = vmatprep.mubr.f32.mxu0 0.0
    %v3081 = vand.u32 %v2669, 4294901760
    %3082 = vmatmul.mubr.f32.gmra.mxu0 %v3081
    %v3083 = vpop.f32.mrf.mxu0
    %v3084 = vadd.f32 %v2791, %v3083
    %v3085 = vpop.f32.mrf.mxu0
    %3086 = vmatprep.mubr.f32.mxu0 0.0
    %v3087 = vand.u32 %v2670, 4294901760
    %3088 = vmatmul.mubr.f32.gmra.mxu0 %v3087
    %v3089 = vpop.f32.mrf.mxu0
    %v3090 = vadd.f32 %v2801, %v3089
    %v3091 = vpop.f32.mrf.mxu0
    %3092 = vmatprep.mubr.f32.mxu0 0.0
    %v3093 = vand.u32 %v2671, 4294901760
    %3094 = vmatmul.mubr.f32.gmra.mxu0 %v3093
    %v3095 = vpop.f32.mrf.mxu0
    %v3096 = vadd.f32 %v2811, %v3095
    %v3097 = vpop.f32.mrf.mxu0
    %3098 = vmatprep.mubr.f32.mxu0 0.0
    %v3099 = vand.u32 %v2672, 4294901760
    %3100 = vmatmul.mubr.f32.gmra.mxu0 %v3099
    %v3101 = vpop.f32.mrf.mxu0
    %v3102 = vadd.f32 %v2821, %v3101
    %v3103 = vpop.f32.mrf.mxu0
    %3104 = vmatprep.mubr.f32.mxu0 0.0
    %v3105 = vand.u32 %v2673, 4294901760
    %3106 = vmatmul.mubr.f32.gmra.mxu0 %v3105
    %v3107 = vpop.f32.mrf.mxu0
    %v3108 = vadd.f32 %v2831, %v3107
    %v3109 = vpop.f32.mrf.mxu0
    %3110 = vmatprep.mubr.f32.mxu0 0.0
    %v3111 = vand.u32 %v2674, 4294901760
    %3112 = vmatmul.mubr.f32.gmra.mxu0 %v3111
    %v3113 = vpop.f32.mrf.mxu0
    %v3114 = vadd.f32 %v2841, %v3113
    %v3115 = vpop.f32.mrf.mxu0
    %3116 = vmatprep.mubr.f32.mxu0 0.0
    %v3117 = vand.u32 %v2675, 4294901760
    %3118 = vmatmul.mubr.f32.gmra.mxu0 %v3117
    %v3119 = vpop.f32.mrf.mxu0
    %v3120 = vadd.f32 %v2851, %v3119
    %v3121 = vpop.f32.mrf.mxu0
    %3122 = vmatprep.mubr.f32.mxu0 0.0
    %v3123 = vand.u32 %v2676, 4294901760
    %3124 = vmatmul.mubr.f32.gmra.mxu0 %v3123
    %v3125 = vpop.f32.mrf.mxu0
    %v3126 = vadd.f32 %v2861, %v3125
    %v3127 = vpop.f32.mrf.mxu0
    %3128 = vmatprep.mubr.f32.mxu0 0.0
    %v3129 = vand.u32 %v2677, 4294901760
    %3130 = vmatmul.mubr.f32.gmra.mxu0 %v3129
    %v3131 = vpop.f32.mrf.mxu0
    %v3132 = vadd.f32 %v2871, %v3131
    %v3133 = vpop.f32.mrf.mxu0
    %3134 = vmatprep.mubr.f32.mxu0 0.0
    %v3135 = vand.u32 %v2678, 4294901760
    %3136 = vmatmul.mubr.f32.gmra.mxu0 %v3135
    %v3137 = vpop.f32.mrf.mxu0
    %v3138 = vadd.f32 %v2881, %v3137
    %v3139 = vpop.f32.mrf.mxu0
    %3140 = vmatprep.mubr.f32.mxu0 0.0
    %v3141 = vand.u32 %v2679, 4294901760
    %3142 = vmatmul.mubr.f32.gmra.mxu0 %v3141
    %v3143 = vpop.f32.mrf.mxu0
    %v3144 = vadd.f32 %v2891, %v3143
    %v3145 = vpop.f32.mrf.mxu0
    %3146 = vmatprep.mubr.f32.mxu0 0.0
    %v3147 = vand.u32 %v2680, 4294901760
    %3148 = vmatmul.mubr.f32.gmra.mxu0 %v3147
    %v3149 = vpop.f32.mrf.mxu0
    %v3150 = vadd.f32 %v2901, %v3149
    %v3151 = vpop.f32.mrf.mxu0
    %3152 = vmatprep.mubr.f32.mxu0 0.0
    %v3153 = vand.u32 %v2681, 4294901760
    %3154 = vmatmul.mubr.f32.gmra.mxu0 %v3153
    %v3155 = vpop.f32.mrf.mxu0
    %v3156 = vadd.f32 %v2911, %v3155
    %v3157 = vpop.f32.mrf.mxu0
    %3158 = vmatprep.mubr.f32.mxu0 0.0
    %v3159 = vand.u32 %v2682, 4294901760
    %3160 = vmatmul.mubr.f32.gmra.mxu0 %v3159
    %v3161 = vpop.f32.mrf.mxu0
    %v3162 = vadd.f32 %v2921, %v3161
    %v3163 = vpop.f32.mrf.mxu0
    %3164 = vdwg.mxu0
    %3165 = vmatprep.subr.mxu0 0.0
    %v3166 = vand.u32 %v89, 4294901760
    %v3167 = vsub.f32 %v89, %v3166
    %3168 = vmatpush1.msra.mxu0 %v3167
    %3169 = vmatprep.subr.mxu0 0.0
    %v3170 = vand.u32 %v88, 4294901760
    %v3171 = vsub.f32 %v88, %v3170
    %3172 = vmatpush1.msra.mxu0 %v3171
    %3173 = vmatprep.subr.mxu0 0.0
    %v3174 = vand.u32 %v87, 4294901760
    %v3175 = vsub.f32 %v87, %v3174
    %3176 = vmatpush1.msra.mxu0 %v3175
    %3177 = vmatprep.subr.mxu0 0.0
    %v3178 = vand.u32 %v86, 4294901760
    %v3179 = vsub.f32 %v86, %v3178
    %3180 = vmatpush1.msra.mxu0 %v3179
    %3181 = vmatprep.subr.mxu0 0.0
    %v3182 = vand.u32 %v85, 4294901760
    %v3183 = vsub.f32 %v85, %v3182
    %3184 = vmatpush1.msra.mxu0 %v3183
    %3185 = vmatprep.subr.mxu0 0.0
    %v3186 = vand.u32 %v84, 4294901760
    %v3187 = vsub.f32 %v84, %v3186
    %3188 = vmatpush1.msra.mxu0 %v3187
    %3189 = vmatprep.subr.mxu0 0.0
    %v3190 = vand.u32 %v83, 4294901760
    %v3191 = vsub.f32 %v83, %v3190
    %3192 = vmatpush1.msra.mxu0 %v3191
    %3193 = vmatprep.subr.mxu0 0.0
    %v3194 = vand.u32 %v82, 4294901760
    %v3195 = vsub.f32 %v82, %v3194
    %3196 = vmatpush1.msra.mxu0 %v3195
    %3197 = vmatprep.subr.mxu0 0.0
    %v3198 = vand.u32 %v81, 4294901760
    %v3199 = vsub.f32 %v81, %v3198
    %3200 = vmatpush1.msra.mxu0 %v3199
    %3201 = vmatprep.subr.mxu0 0.0
    %v3202 = vand.u32 %v80, 4294901760
    %v3203 = vsub.f32 %v80, %v3202
    %3204 = vmatpush1.msra.mxu0 %v3203
    %3205 = vmatprep.subr.mxu0 0.0
    %v3206 = vand.u32 %v79, 4294901760
    %v3207 = vsub.f32 %v79, %v3206
    %3208 = vmatpush1.msra.mxu0 %v3207
    %3209 = vmatprep.subr.mxu0 0.0
    %v3210 = vand.u32 %v78, 4294901760
    %v3211 = vsub.f32 %v78, %v3210
    %3212 = vmatpush1.msra.mxu0 %v3211
    %3213 = vmatprep.subr.mxu0 0.0
    %v3214 = vand.u32 %v77, 4294901760
    %v3215 = vsub.f32 %v77, %v3214
    %3216 = vmatpush1.msra.mxu0 %v3215
    %3217 = vmatprep.subr.mxu0 0.0
    %v3218 = vand.u32 %v76, 4294901760
    %v3219 = vsub.f32 %v76, %v3218
    %3220 = vmatpush1.msra.mxu0 %v3219
    %3221 = vmatprep.subr.mxu0 0.0
    %v3222 = vand.u32 %v75, 4294901760
    %v3223 = vsub.f32 %v75, %v3222
    %3224 = vmatpush1.msra.mxu0 %v3223
    %3225 = vmatprep.subr.mxu0 0.0
    %v3226 = vand.u32 %v74, 4294901760
    %v3227 = vsub.f32 %v74, %v3226
    %3228 = vmatpush1.msra.mxu0 %v3227
    %3229 = vmatprep.subr.mxu0 0.0
    %3230 = vmatpush2.msra.mxu0 0.0
    %3231 = vmatprep.subr.mxu0 0.0
    %3232 = vmatpush2.msra.mxu0 0.0
    %3233 = vmatprep.subr.mxu0 0.0
    %3234 = vmatpush2.msra.mxu0 0.0
    %3235 = vmatprep.subr.mxu0 0.0
    %3236 = vmatpush2.msra.mxu0 0.0
    %3237 = vmatprep.subr.mxu0 0.0
    %3238 = vmatpush2.msra.mxu0 0.0
    %3239 = vmatprep.subr.mxu0 0.0
    %3240 = vmatpush2.msra.mxu0 0.0
    %3241 = vmatprep.subr.mxu0 0.0
    %3242 = vmatpush2.msra.mxu0 0.0
    %3243 = vmatprep.subr.mxu0 0.0
    %3244 = vmatpush2.msra.mxu0 0.0
    %3245 = vmatprep.subr.mxu0 0.0
    %3246 = vmatpush2.msra.mxu0 0.0
    %3247 = vmatprep.subr.mxu0 0.0
    %3248 = vmatpush2.msra.mxu0 0.0
    %3249 = vmatprep.subr.mxu0 0.0
    %3250 = vmatpush2.msra.mxu0 0.0
    %3251 = vmatprep.subr.mxu0 0.0
    %3252 = vmatpush2.msra.mxu0 0.0
    %3253 = vmatprep.subr.mxu0 0.0
    %3254 = vmatpush2.msra.mxu0 0.0
    %3255 = vmatprep.subr.mxu0 0.0
    %3256 = vmatpush2.msra.mxu0 0.0
    %3257 = vmatprep.subr.mxu0 0.0
    %3258 = vmatpush2.msra.mxu0 0.0
    %3259 = vmatprep.subr.mxu0 0.0
    %3260 = vmatpush2.msra.mxu0 0.0
    %3261 = vmatprep.mubr.f32.mxu0 0.0
    %v3262 = vand.u32 %v2667, 4294901760
    %v3263 = vsub.f32 %v2667, %v3262
    %3264 = vmatmul.mubr.f32.gmra.mxu0 %v3263
    %v3265 = vpop.f32.mrf.mxu0
    %v3266 = vadd.f32 %v3072, %v3265
    %v3267 = vpop.f32.mrf.mxu0
    %3268 = vmatprep.mubr.f32.mxu0 0.0
    %v3269 = vand.u32 %v2668, 4294901760
    %v3270 = vsub.f32 %v2668, %v3269
    %3271 = vmatmul.mubr.f32.gmra.mxu0 %v3270
    %v3272 = vpop.f32.mrf.mxu0
    %v3273 = vadd.f32 %v3078, %v3272
    %v3274 = vpop.f32.mrf.mxu0
    %3275 = vmatprep.mubr.f32.mxu0 0.0
    %v3276 = vand.u32 %v2669, 4294901760
    %v3277 = vsub.f32 %v2669, %v3276
    %3278 = vmatmul.mubr.f32.gmra.mxu0 %v3277
    %v3279 = vpop.f32.mrf.mxu0
    %v3280 = vadd.f32 %v3084, %v3279
    %v3281 = vpop.f32.mrf.mxu0
    %3282 = vmatprep.mubr.f32.mxu0 0.0
    %v3283 = vand.u32 %v2670, 4294901760
    %v3284 = vsub.f32 %v2670, %v3283
    %3285 = vmatmul.mubr.f32.gmra.mxu0 %v3284
    %v3286 = vpop.f32.mrf.mxu0
    %v3287 = vadd.f32 %v3090, %v3286
    %v3288 = vpop.f32.mrf.mxu0
    %3289 = vmatprep.mubr.f32.mxu0 0.0
    %v3290 = vand.u32 %v2671, 4294901760
    %v3291 = vsub.f32 %v2671, %v3290
    %3292 = vmatmul.mubr.f32.gmra.mxu0 %v3291
    %v3293 = vpop.f32.mrf.mxu0
    %v3294 = vadd.f32 %v3096, %v3293
    %v3295 = vpop.f32.mrf.mxu0
    %3296 = vmatprep.mubr.f32.mxu0 0.0
    %v3297 = vand.u32 %v2672, 4294901760
    %v3298 = vsub.f32 %v2672, %v3297
    %3299 = vmatmul.mubr.f32.gmra.mxu0 %v3298
    %v3300 = vpop.f32.mrf.mxu0
    %v3301 = vadd.f32 %v3102, %v3300
    %v3302 = vpop.f32.mrf.mxu0
    %3303 = vmatprep.mubr.f32.mxu0 0.0
    %v3304 = vand.u32 %v2673, 4294901760
    %v3305 = vsub.f32 %v2673, %v3304
    %3306 = vmatmul.mubr.f32.gmra.mxu0 %v3305
    %v3307 = vpop.f32.mrf.mxu0
    %v3308 = vadd.f32 %v3108, %v3307
    %v3309 = vpop.f32.mrf.mxu0
    %3310 = vmatprep.mubr.f32.mxu0 0.0
    %v3311 = vand.u32 %v2674, 4294901760
    %v3312 = vsub.f32 %v2674, %v3311
    %3313 = vmatmul.mubr.f32.gmra.mxu0 %v3312
    %v3314 = vpop.f32.mrf.mxu0
    %v3315 = vadd.f32 %v3114, %v3314
    %v3316 = vpop.f32.mrf.mxu0
    %3317 = vmatprep.mubr.f32.mxu0 0.0
    %v3318 = vand.u32 %v2675, 4294901760
    %v3319 = vsub.f32 %v2675, %v3318
    %3320 = vmatmul.mubr.f32.gmra.mxu0 %v3319
    %v3321 = vpop.f32.mrf.mxu0
    %v3322 = vadd.f32 %v3120, %v3321
    %v3323 = vpop.f32.mrf.mxu0
    %3324 = vmatprep.mubr.f32.mxu0 0.0
    %v3325 = vand.u32 %v2676, 4294901760
    %v3326 = vsub.f32 %v2676, %v3325
    %3327 = vmatmul.mubr.f32.gmra.mxu0 %v3326
    %v3328 = vpop.f32.mrf.mxu0
    %v3329 = vadd.f32 %v3126, %v3328
    %v3330 = vpop.f32.mrf.mxu0
    %3331 = vmatprep.mubr.f32.mxu0 0.0
    %v3332 = vand.u32 %v2677, 4294901760
    %v3333 = vsub.f32 %v2677, %v3332
    %3334 = vmatmul.mubr.f32.gmra.mxu0 %v3333
    %v3335 = vpop.f32.mrf.mxu0
    %v3336 = vadd.f32 %v3132, %v3335
    %v3337 = vpop.f32.mrf.mxu0
    %3338 = vmatprep.mubr.f32.mxu0 0.0
    %v3339 = vand.u32 %v2678, 4294901760
    %v3340 = vsub.f32 %v2678, %v3339
    %3341 = vmatmul.mubr.f32.gmra.mxu0 %v3340
    %v3342 = vpop.f32.mrf.mxu0
    %v3343 = vadd.f32 %v3138, %v3342
    %v3344 = vpop.f32.mrf.mxu0
    %3345 = vmatprep.mubr.f32.mxu0 0.0
    %v3346 = vand.u32 %v2679, 4294901760
    %v3347 = vsub.f32 %v2679, %v3346
    %3348 = vmatmul.mubr.f32.gmra.mxu0 %v3347
    %v3349 = vpop.f32.mrf.mxu0
    %v3350 = vadd.f32 %v3144, %v3349
    %v3351 = vpop.f32.mrf.mxu0
    %3352 = vmatprep.mubr.f32.mxu0 0.0
    %v3353 = vand.u32 %v2680, 4294901760
    %v3354 = vsub.f32 %v2680, %v3353
    %3355 = vmatmul.mubr.f32.gmra.mxu0 %v3354
    %v3356 = vpop.f32.mrf.mxu0
    %v3357 = vadd.f32 %v3150, %v3356
    %v3358 = vpop.f32.mrf.mxu0
    %3359 = vmatprep.mubr.f32.mxu0 0.0
    %v3360 = vand.u32 %v2681, 4294901760
    %v3361 = vsub.f32 %v2681, %v3360
    %3362 = vmatmul.mubr.f32.gmra.mxu0 %v3361
    %v3363 = vpop.f32.mrf.mxu0
    %v3364 = vadd.f32 %v3156, %v3363
    %v3365 = vpop.f32.mrf.mxu0
    %3366 = vmatprep.mubr.f32.mxu0 0.0
    %v3367 = vand.u32 %v2682, 4294901760
    %v3368 = vsub.f32 %v2682, %v3367
    %3369 = vmatmul.mubr.f32.gmra.mxu0 %v3368
    %v3370 = vpop.f32.mrf.mxu0
    %v3371 = vadd.f32 %v3162, %v3370
    %v3372 = vpop.f32.mrf.mxu0
    %3373 = vdwg.mxu0
    %3374 = vmatprep.subr.mxu0 0.0
    %v3375 = vand.u32 %v89, 4294901760
    %3376 = vmatpush1.msra.mxu0 %v3375
    %3377 = vmatprep.subr.mxu0 0.0
    %v3378 = vand.u32 %v88, 4294901760
    %3379 = vmatpush1.msra.mxu0 %v3378
    %3380 = vmatprep.subr.mxu0 0.0
    %v3381 = vand.u32 %v87, 4294901760
    %3382 = vmatpush1.msra.mxu0 %v3381
    %3383 = vmatprep.subr.mxu0 0.0
    %v3384 = vand.u32 %v86, 4294901760
    %3385 = vmatpush1.msra.mxu0 %v3384
    %3386 = vmatprep.subr.mxu0 0.0
    %v3387 = vand.u32 %v85, 4294901760
    %3388 = vmatpush1.msra.mxu0 %v3387
    %3389 = vmatprep.subr.mxu0 0.0
    %v3390 = vand.u32 %v84, 4294901760
    %3391 = vmatpush1.msra.mxu0 %v3390
    %3392 = vmatprep.subr.mxu0 0.0
    %v3393 = vand.u32 %v83, 4294901760
    %3394 = vmatpush1.msra.mxu0 %v3393
    %3395 = vmatprep.subr.mxu0 0.0
    %v3396 = vand.u32 %v82, 4294901760
    %3397 = vmatpush1.msra.mxu0 %v3396
    %3398 = vmatprep.subr.mxu0 0.0
    %v3399 = vand.u32 %v81, 4294901760
    %3400 = vmatpush1.msra.mxu0 %v3399
    %3401 = vmatprep.subr.mxu0 0.0
    %v3402 = vand.u32 %v80, 4294901760
    %3403 = vmatpush1.msra.mxu0 %v3402
    %3404 = vmatprep.subr.mxu0 0.0
    %v3405 = vand.u32 %v79, 4294901760
    %3406 = vmatpush1.msra.mxu0 %v3405
    %3407 = vmatprep.subr.mxu0 0.0
    %v3408 = vand.u32 %v78, 4294901760
    %3409 = vmatpush1.msra.mxu0 %v3408
    %3410 = vmatprep.subr.mxu0 0.0
    %v3411 = vand.u32 %v77, 4294901760
    %3412 = vmatpush1.msra.mxu0 %v3411
    %3413 = vmatprep.subr.mxu0 0.0
    %v3414 = vand.u32 %v76, 4294901760
    %3415 = vmatpush1.msra.mxu0 %v3414
    %3416 = vmatprep.subr.mxu0 0.0
    %v3417 = vand.u32 %v75, 4294901760
    %3418 = vmatpush1.msra.mxu0 %v3417
    %3419 = vmatprep.subr.mxu0 0.0
    %v3420 = vand.u32 %v74, 4294901760
    %3421 = vmatpush1.msra.mxu0 %v3420
    %3422 = vmatprep.subr.mxu0 0.0
    %3423 = vmatpush2.msra.mxu0 0.0
    %3424 = vmatprep.subr.mxu0 0.0
    %3425 = vmatpush2.msra.mxu0 0.0
    %3426 = vmatprep.subr.mxu0 0.0
    %3427 = vmatpush2.msra.mxu0 0.0
    %3428 = vmatprep.subr.mxu0 0.0
    %3429 = vmatpush2.msra.mxu0 0.0
    %3430 = vmatprep.subr.mxu0 0.0
    %3431 = vmatpush2.msra.mxu0 0.0
    %3432 = vmatprep.subr.mxu0 0.0
    %3433 = vmatpush2.msra.mxu0 0.0
    %3434 = vmatprep.subr.mxu0 0.0
    %3435 = vmatpush2.msra.mxu0 0.0
    %3436 = vmatprep.subr.mxu0 0.0
    %3437 = vmatpush2.msra.mxu0 0.0
    %3438 = vmatprep.subr.mxu0 0.0
    %3439 = vmatpush2.msra.mxu0 0.0
    %3440 = vmatprep.subr.mxu0 0.0
    %3441 = vmatpush2.msra.mxu0 0.0
    %3442 = vmatprep.subr.mxu0 0.0
    %3443 = vmatpush2.msra.mxu0 0.0
    %3444 = vmatprep.subr.mxu0 0.0
    %3445 = vmatpush2.msra.mxu0 0.0
    %3446 = vmatprep.subr.mxu0 0.0
    %3447 = vmatpush2.msra.mxu0 0.0
    %3448 = vmatprep.subr.mxu0 0.0
    %3449 = vmatpush2.msra.mxu0 0.0
    %3450 = vmatprep.subr.mxu0 0.0
    %3451 = vmatpush2.msra.mxu0 0.0
    %3452 = vmatprep.subr.mxu0 0.0
    %3453 = vmatpush2.msra.mxu0 0.0
    %3454 = vmatprep.mubr.f32.mxu0 0.0
    %v3455 = vand.u32 %v2667, 4294901760
    %v3456 = vsub.f32 %v2667, %v3455
    %v3457 = vand.u32 %v3456, 4294901760
    %3458 = vmatmul.mubr.f32.gmra.mxu0 %v3457
    %v3459 = vpop.f32.mrf.mxu0
    %v3460 = vadd.f32 %v3266, %v3459
    %v3461 = vpop.f32.mrf.mxu0
    %3462 = vmatprep.mubr.f32.mxu0 0.0
    %v3463 = vand.u32 %v2668, 4294901760
    %v3464 = vsub.f32 %v2668, %v3463
    %v3465 = vand.u32 %v3464, 4294901760
    %3466 = vmatmul.mubr.f32.gmra.mxu0 %v3465
    %v3467 = vpop.f32.mrf.mxu0
    %v3468 = vadd.f32 %v3273, %v3467
    %v3469 = vpop.f32.mrf.mxu0
    %3470 = vmatprep.mubr.f32.mxu0 0.0
    %v3471 = vand.u32 %v2669, 4294901760
    %v3472 = vsub.f32 %v2669, %v3471
    %v3473 = vand.u32 %v3472, 4294901760
    %3474 = vmatmul.mubr.f32.gmra.mxu0 %v3473
    %v3475 = vpop.f32.mrf.mxu0
    %v3476 = vadd.f32 %v3280, %v3475
    %v3477 = vpop.f32.mrf.mxu0
    %3478 = vmatprep.mubr.f32.mxu0 0.0
    %v3479 = vand.u32 %v2670, 4294901760
    %v3480 = vsub.f32 %v2670, %v3479
    %v3481 = vand.u32 %v3480, 4294901760
    %3482 = vmatmul.mubr.f32.gmra.mxu0 %v3481
    %v3483 = vpop.f32.mrf.mxu0
    %v3484 = vadd.f32 %v3287, %v3483
    %v3485 = vpop.f32.mrf.mxu0
    %3486 = vmatprep.mubr.f32.mxu0 0.0
    %v3487 = vand.u32 %v2671, 4294901760
    %v3488 = vsub.f32 %v2671, %v3487
    %v3489 = vand.u32 %v3488, 4294901760
    %3490 = vmatmul.mubr.f32.gmra.mxu0 %v3489
    %v3491 = vpop.f32.mrf.mxu0
    %v3492 = vadd.f32 %v3294, %v3491
    %v3493 = vpop.f32.mrf.mxu0
    %3494 = vmatprep.mubr.f32.mxu0 0.0
    %v3495 = vand.u32 %v2672, 4294901760
    %v3496 = vsub.f32 %v2672, %v3495
    %v3497 = vand.u32 %v3496, 4294901760
    %3498 = vmatmul.mubr.f32.gmra.mxu0 %v3497
    %v3499 = vpop.f32.mrf.mxu0
    %v3500 = vadd.f32 %v3301, %v3499
    %v3501 = vpop.f32.mrf.mxu0
    %3502 = vmatprep.mubr.f32.mxu0 0.0
    %v3503 = vand.u32 %v2673, 4294901760
    %v3504 = vsub.f32 %v2673, %v3503
    %v3505 = vand.u32 %v3504, 4294901760
    %3506 = vmatmul.mubr.f32.gmra.mxu0 %v3505
    %v3507 = vpop.f32.mrf.mxu0
    %v3508 = vadd.f32 %v3308, %v3507
    %v3509 = vpop.f32.mrf.mxu0
    %3510 = vmatprep.mubr.f32.mxu0 0.0
    %v3511 = vand.u32 %v2674, 4294901760
    %v3512 = vsub.f32 %v2674, %v3511
    %v3513 = vand.u32 %v3512, 4294901760
    %3514 = vmatmul.mubr.f32.gmra.mxu0 %v3513
    %v3515 = vpop.f32.mrf.mxu0
    %v3516 = vadd.f32 %v3315, %v3515
    %v3517 = vpop.f32.mrf.mxu0
    %3518 = vmatprep.mubr.f32.mxu0 0.0
    %v3519 = vand.u32 %v2675, 4294901760
    %v3520 = vsub.f32 %v2675, %v3519
    %v3521 = vand.u32 %v3520, 4294901760
    %3522 = vmatmul.mubr.f32.gmra.mxu0 %v3521
    %v3523 = vpop.f32.mrf.mxu0
    %v3524 = vadd.f32 %v3322, %v3523
    %v3525 = vpop.f32.mrf.mxu0
    %3526 = vmatprep.mubr.f32.mxu0 0.0
    %v3527 = vand.u32 %v2676, 4294901760
    %v3528 = vsub.f32 %v2676, %v3527
    %v3529 = vand.u32 %v3528, 4294901760
    %3530 = vmatmul.mubr.f32.gmra.mxu0 %v3529
    %v3531 = vpop.f32.mrf.mxu0
    %v3532 = vadd.f32 %v3329, %v3531
    %v3533 = vpop.f32.mrf.mxu0
    %3534 = vmatprep.mubr.f32.mxu0 0.0
    %v3535 = vand.u32 %v2677, 4294901760
    %v3536 = vsub.f32 %v2677, %v3535
    %v3537 = vand.u32 %v3536, 4294901760
    %3538 = vmatmul.mubr.f32.gmra.mxu0 %v3537
    %v3539 = vpop.f32.mrf.mxu0
    %v3540 = vadd.f32 %v3336, %v3539
    %v3541 = vpop.f32.mrf.mxu0
    %3542 = vmatprep.mubr.f32.mxu0 0.0
    %v3543 = vand.u32 %v2678, 4294901760
    %v3544 = vsub.f32 %v2678, %v3543
    %v3545 = vand.u32 %v3544, 4294901760
    %3546 = vmatmul.mubr.f32.gmra.mxu0 %v3545
    %v3547 = vpop.f32.mrf.mxu0
    %v3548 = vadd.f32 %v3343, %v3547
    %v3549 = vpop.f32.mrf.mxu0
    %3550 = vmatprep.mubr.f32.mxu0 0.0
    %v3551 = vand.u32 %v2679, 4294901760
    %v3552 = vsub.f32 %v2679, %v3551
    %v3553 = vand.u32 %v3552, 4294901760
    %3554 = vmatmul.mubr.f32.gmra.mxu0 %v3553
    %v3555 = vpop.f32.mrf.mxu0
    %v3556 = vadd.f32 %v3350, %v3555
    %v3557 = vpop.f32.mrf.mxu0
    %3558 = vmatprep.mubr.f32.mxu0 0.0
    %v3559 = vand.u32 %v2680, 4294901760
    %v3560 = vsub.f32 %v2680, %v3559
    %v3561 = vand.u32 %v3560, 4294901760
    %3562 = vmatmul.mubr.f32.gmra.mxu0 %v3561
    %v3563 = vpop.f32.mrf.mxu0
    %v3564 = vadd.f32 %v3357, %v3563
    %v3565 = vpop.f32.mrf.mxu0
    %3566 = vmatprep.mubr.f32.mxu0 0.0
    %v3567 = vand.u32 %v2681, 4294901760
    %v3568 = vsub.f32 %v2681, %v3567
    %v3569 = vand.u32 %v3568, 4294901760
    %3570 = vmatmul.mubr.f32.gmra.mxu0 %v3569
    %v3571 = vpop.f32.mrf.mxu0
    %v3572 = vadd.f32 %v3364, %v3571
    %v3573 = vpop.f32.mrf.mxu0
    %3574 = vmatprep.mubr.f32.mxu0 0.0
    %v3575 = vand.u32 %v2682, 4294901760
    %v3576 = vsub.f32 %v2682, %v3575
    %v3577 = vand.u32 %v3576, 4294901760
    %3578 = vmatmul.mubr.f32.gmra.mxu0 %v3577
    %v3579 = vpop.f32.mrf.mxu0
    %v3580 = vadd.f32 %v3371, %v3579
    %v3581 = vpop.f32.mrf.mxu0
    %3582 = vdwg.mxu0
    %3583 = vmatprep.subr.mxu0 0.0
    %v3584 = vand.u32 %v89, 4294901760
    %v3585 = vsub.f32 %v89, %v3584
    %v3586 = vand.u32 %v3585, 4294901760
    %3587 = vmatpush1.msra.mxu0 %v3586
    %3588 = vmatprep.subr.mxu0 0.0
    %v3589 = vand.u32 %v88, 4294901760
    %v3590 = vsub.f32 %v88, %v3589
    %v3591 = vand.u32 %v3590, 4294901760
    %3592 = vmatpush1.msra.mxu0 %v3591
    %3593 = vmatprep.subr.mxu0 0.0
    %v3594 = vand.u32 %v87, 4294901760
    %v3595 = vsub.f32 %v87, %v3594
    %v3596 = vand.u32 %v3595, 4294901760
    %3597 = vmatpush1.msra.mxu0 %v3596
    %3598 = vmatprep.subr.mxu0 0.0
    %v3599 = vand.u32 %v86, 4294901760
    %v3600 = vsub.f32 %v86, %v3599
    %v3601 = vand.u32 %v3600, 4294901760
    %3602 = vmatpush1.msra.mxu0 %v3601
    %3603 = vmatprep.subr.mxu0 0.0
    %v3604 = vand.u32 %v85, 4294901760
    %v3605 = vsub.f32 %v85, %v3604
    %v3606 = vand.u32 %v3605, 4294901760
    %3607 = vmatpush1.msra.mxu0 %v3606
    %3608 = vmatprep.subr.mxu0 0.0
    %v3609 = vand.u32 %v84, 4294901760
    %v3610 = vsub.f32 %v84, %v3609
    %v3611 = vand.u32 %v3610, 4294901760
    %3612 = vmatpush1.msra.mxu0 %v3611
    %3613 = vmatprep.subr.mxu0 0.0
    %v3614 = vand.u32 %v83, 4294901760
    %v3615 = vsub.f32 %v83, %v3614
    %v3616 = vand.u32 %v3615, 4294901760
    %3617 = vmatpush1.msra.mxu0 %v3616
    %3618 = vmatprep.subr.mxu0 0.0
    %v3619 = vand.u32 %v82, 4294901760
    %v3620 = vsub.f32 %v82, %v3619
    %v3621 = vand.u32 %v3620, 4294901760
    %3622 = vmatpush1.msra.mxu0 %v3621
    %3623 = vmatprep.subr.mxu0 0.0
    %v3624 = vand.u32 %v81, 4294901760
    %v3625 = vsub.f32 %v81, %v3624
    %v3626 = vand.u32 %v3625, 4294901760
    %3627 = vmatpush1.msra.mxu0 %v3626
    %3628 = vmatprep.subr.mxu0 0.0
    %v3629 = vand.u32 %v80, 4294901760
    %v3630 = vsub.f32 %v80, %v3629
    %v3631 = vand.u32 %v3630, 4294901760
    %3632 = vmatpush1.msra.mxu0 %v3631
    %3633 = vmatprep.subr.mxu0 0.0
    %v3634 = vand.u32 %v79, 4294901760
    %v3635 = vsub.f32 %v79, %v3634
    %v3636 = vand.u32 %v3635, 4294901760
    %3637 = vmatpush1.msra.mxu0 %v3636
    %3638 = vmatprep.subr.mxu0 0.0
    %v3639 = vand.u32 %v78, 4294901760
    %v3640 = vsub.f32 %v78, %v3639
    %v3641 = vand.u32 %v3640, 4294901760
    %3642 = vmatpush1.msra.mxu0 %v3641
    %3643 = vmatprep.subr.mxu0 0.0
    %v3644 = vand.u32 %v77, 4294901760
    %v3645 = vsub.f32 %v77, %v3644
    %v3646 = vand.u32 %v3645, 4294901760
    %3647 = vmatpush1.msra.mxu0 %v3646
    %3648 = vmatprep.subr.mxu0 0.0
    %v3649 = vand.u32 %v76, 4294901760
    %v3650 = vsub.f32 %v76, %v3649
    %v3651 = vand.u32 %v3650, 4294901760
    %3652 = vmatpush1.msra.mxu0 %v3651
    %3653 = vmatprep.subr.mxu0 0.0
    %v3654 = vand.u32 %v75, 4294901760
    %v3655 = vsub.f32 %v75, %v3654
    %v3656 = vand.u32 %v3655, 4294901760
    %3657 = vmatpush1.msra.mxu0 %v3656
    %3658 = vmatprep.subr.mxu0 0.0
    %v3659 = vand.u32 %v74, 4294901760
    %v3660 = vsub.f32 %v74, %v3659
    %v3661 = vand.u32 %v3660, 4294901760
    %3662 = vmatpush1.msra.mxu0 %v3661
    %3663 = vmatprep.subr.mxu0 0.0
    %3664 = vmatpush2.msra.mxu0 0.0
    %3665 = vmatprep.subr.mxu0 0.0
    %3666 = vmatpush2.msra.mxu0 0.0
    %3667 = vmatprep.subr.mxu0 0.0
    %3668 = vmatpush2.msra.mxu0 0.0
    %3669 = vmatprep.subr.mxu0 0.0
    %3670 = vmatpush2.msra.mxu0 0.0
    %3671 = vmatprep.subr.mxu0 0.0
    %3672 = vmatpush2.msra.mxu0 0.0
    %3673 = vmatprep.subr.mxu0 0.0
    %3674 = vmatpush2.msra.mxu0 0.0
    %3675 = vmatprep.subr.mxu0 0.0
    %3676 = vmatpush2.msra.mxu0 0.0
    %3677 = vmatprep.subr.mxu0 0.0
    %3678 = vmatpush2.msra.mxu0 0.0
    %3679 = vmatprep.subr.mxu0 0.0
    %3680 = vmatpush2.msra.mxu0 0.0
    %3681 = vmatprep.subr.mxu0 0.0
    %3682 = vmatpush2.msra.mxu0 0.0
    %3683 = vmatprep.subr.mxu0 0.0
    %3684 = vmatpush2.msra.mxu0 0.0
    %3685 = vmatprep.subr.mxu0 0.0
    %3686 = vmatpush2.msra.mxu0 0.0
    %3687 = vmatprep.subr.mxu0 0.0
    %3688 = vmatpush2.msra.mxu0 0.0
    %3689 = vmatprep.subr.mxu0 0.0
    %3690 = vmatpush2.msra.mxu0 0.0
    %3691 = vmatprep.subr.mxu0 0.0
    %3692 = vmatpush2.msra.mxu0 0.0
    %3693 = vmatprep.subr.mxu0 0.0
    %3694 = vmatpush2.msra.mxu0 0.0
    %3695 = vmatprep.mubr.f32.mxu0 0.0
    %v3696 = vand.u32 %v2667, 4294901760
    %3697 = vmatmul.mubr.f32.gmra.mxu0 %v3696
    %v3698 = vpop.f32.mrf.mxu0
    %v3699 = vadd.f32 %v3460, %v3698
    %v3700 = vpop.f32.mrf.mxu0
    %3701 = vmatprep.mubr.f32.mxu0 0.0
    %v3702 = vand.u32 %v2668, 4294901760
    %3703 = vmatmul.mubr.f32.gmra.mxu0 %v3702
    %v3704 = vpop.f32.mrf.mxu0
    %v3705 = vadd.f32 %v3468, %v3704
    %v3706 = vpop.f32.mrf.mxu0
    %3707 = vmatprep.mubr.f32.mxu0 0.0
    %v3708 = vand.u32 %v2669, 4294901760
    %3709 = vmatmul.mubr.f32.gmra.mxu0 %v3708
    %v3710 = vpop.f32.mrf.mxu0
    %v3711 = vadd.f32 %v3476, %v3710
    %v3712 = vpop.f32.mrf.mxu0
    %3713 = vmatprep.mubr.f32.mxu0 0.0
    %v3714 = vand.u32 %v2670, 4294901760
    %3715 = vmatmul.mubr.f32.gmra.mxu0 %v3714
    %v3716 = vpop.f32.mrf.mxu0
    %v3717 = vadd.f32 %v3484, %v3716
    %v3718 = vpop.f32.mrf.mxu0
    %3719 = vmatprep.mubr.f32.mxu0 0.0
    %v3720 = vand.u32 %v2671, 4294901760
    %3721 = vmatmul.mubr.f32.gmra.mxu0 %v3720
    %v3722 = vpop.f32.mrf.mxu0
    %v3723 = vadd.f32 %v3492, %v3722
    %v3724 = vpop.f32.mrf.mxu0
    %3725 = vmatprep.mubr.f32.mxu0 0.0
    %v3726 = vand.u32 %v2672, 4294901760
    %3727 = vmatmul.mubr.f32.gmra.mxu0 %v3726
    %v3728 = vpop.f32.mrf.mxu0
    %v3729 = vadd.f32 %v3500, %v3728
    %v3730 = vpop.f32.mrf.mxu0
    %3731 = vmatprep.mubr.f32.mxu0 0.0
    %v3732 = vand.u32 %v2673, 4294901760
    %3733 = vmatmul.mubr.f32.gmra.mxu0 %v3732
    %v3734 = vpop.f32.mrf.mxu0
    %v3735 = vadd.f32 %v3508, %v3734
    %v3736 = vpop.f32.mrf.mxu0
    %3737 = vmatprep.mubr.f32.mxu0 0.0
    %v3738 = vand.u32 %v2674, 4294901760
    %3739 = vmatmul.mubr.f32.gmra.mxu0 %v3738
    %v3740 = vpop.f32.mrf.mxu0
    %v3741 = vadd.f32 %v3516, %v3740
    %v3742 = vpop.f32.mrf.mxu0
    %3743 = vmatprep.mubr.f32.mxu0 0.0
    %v3744 = vand.u32 %v2675, 4294901760
    %3745 = vmatmul.mubr.f32.gmra.mxu0 %v3744
    %v3746 = vpop.f32.mrf.mxu0
    %v3747 = vadd.f32 %v3524, %v3746
    %v3748 = vpop.f32.mrf.mxu0
    %3749 = vmatprep.mubr.f32.mxu0 0.0
    %v3750 = vand.u32 %v2676, 4294901760
    %3751 = vmatmul.mubr.f32.gmra.mxu0 %v3750
    %v3752 = vpop.f32.mrf.mxu0
    %v3753 = vadd.f32 %v3532, %v3752
    %v3754 = vpop.f32.mrf.mxu0
    %3755 = vmatprep.mubr.f32.mxu0 0.0
    %v3756 = vand.u32 %v2677, 4294901760
    %3757 = vmatmul.mubr.f32.gmra.mxu0 %v3756
    %v3758 = vpop.f32.mrf.mxu0
    %v3759 = vadd.f32 %v3540, %v3758
    %v3760 = vpop.f32.mrf.mxu0
    %3761 = vmatprep.mubr.f32.mxu0 0.0
    %v3762 = vand.u32 %v2678, 4294901760
    %3763 = vmatmul.mubr.f32.gmra.mxu0 %v3762
    %v3764 = vpop.f32.mrf.mxu0
    %v3765 = vadd.f32 %v3548, %v3764
    %v3766 = vpop.f32.mrf.mxu0
    %3767 = vmatprep.mubr.f32.mxu0 0.0
    %v3768 = vand.u32 %v2679, 4294901760
    %3769 = vmatmul.mubr.f32.gmra.mxu0 %v3768
    %v3770 = vpop.f32.mrf.mxu0
    %v3771 = vadd.f32 %v3556, %v3770
    %v3772 = vpop.f32.mrf.mxu0
    %3773 = vmatprep.mubr.f32.mxu0 0.0
    %v3774 = vand.u32 %v2680, 4294901760
    %3775 = vmatmul.mubr.f32.gmra.mxu0 %v3774
    %v3776 = vpop.f32.mrf.mxu0
    %v3777 = vadd.f32 %v3564, %v3776
    %v3778 = vpop.f32.mrf.mxu0
    %3779 = vmatprep.mubr.f32.mxu0 0.0
    %v3780 = vand.u32 %v2681, 4294901760
    %3781 = vmatmul.mubr.f32.gmra.mxu0 %v3780
    %v3782 = vpop.f32.mrf.mxu0
    %v3783 = vadd.f32 %v3572, %v3782
    %v3784 = vpop.f32.mrf.mxu0
    %3785 = vmatprep.mubr.f32.mxu0 0.0
    %v3786 = vand.u32 %v2682, 4294901760
    %3787 = vmatmul.mubr.f32.gmra.mxu0 %v3786
    %v3788 = vpop.f32.mrf.mxu0
    %v3789 = vadd.f32 %v3580, %v3788
    %v3790 = vpop.f32.mrf.mxu0
    %3791 = vdwg.mxu0
    %3792 = vmatprep.subr.mxu0 0.0
    %v3793 = vand.u32 %v89, 4294901760
    %3794 = vmatpush1.msra.mxu0 %v3793
    %3795 = vmatprep.subr.mxu0 0.0
    %v3796 = vand.u32 %v88, 4294901760
    %3797 = vmatpush1.msra.mxu0 %v3796
    %3798 = vmatprep.subr.mxu0 0.0
    %v3799 = vand.u32 %v87, 4294901760
    %3800 = vmatpush1.msra.mxu0 %v3799
    %3801 = vmatprep.subr.mxu0 0.0
    %v3802 = vand.u32 %v86, 4294901760
    %3803 = vmatpush1.msra.mxu0 %v3802
    %3804 = vmatprep.subr.mxu0 0.0
    %v3805 = vand.u32 %v85, 4294901760
    %3806 = vmatpush1.msra.mxu0 %v3805
    %3807 = vmatprep.subr.mxu0 0.0
    %v3808 = vand.u32 %v84, 4294901760
    %3809 = vmatpush1.msra.mxu0 %v3808
    %3810 = vmatprep.subr.mxu0 0.0
    %v3811 = vand.u32 %v83, 4294901760
    %3812 = vmatpush1.msra.mxu0 %v3811
    %3813 = vmatprep.subr.mxu0 0.0
    %v3814 = vand.u32 %v82, 4294901760
    %3815 = vmatpush1.msra.mxu0 %v3814
    %3816 = vmatprep.subr.mxu0 0.0
    %v3817 = vand.u32 %v81, 4294901760
    %3818 = vmatpush1.msra.mxu0 %v3817
    %3819 = vmatprep.subr.mxu0 0.0
    %v3820 = vand.u32 %v80, 4294901760
    %3821 = vmatpush1.msra.mxu0 %v3820
    %3822 = vmatprep.subr.mxu0 0.0
    %v3823 = vand.u32 %v79, 4294901760
    %3824 = vmatpush1.msra.mxu0 %v3823
    %3825 = vmatprep.subr.mxu0 0.0
    %v3826 = vand.u32 %v78, 4294901760
    %3827 = vmatpush1.msra.mxu0 %v3826
    %3828 = vmatprep.subr.mxu0 0.0
    %v3829 = vand.u32 %v77, 4294901760
    %3830 = vmatpush1.msra.mxu0 %v3829
    %3831 = vmatprep.subr.mxu0 0.0
    %v3832 = vand.u32 %v76, 4294901760
    %3833 = vmatpush1.msra.mxu0 %v3832
    %3834 = vmatprep.subr.mxu0 0.0
    %v3835 = vand.u32 %v75, 4294901760
    %3836 = vmatpush1.msra.mxu0 %v3835
    %3837 = vmatprep.subr.mxu0 0.0
    %v3838 = vand.u32 %v74, 4294901760
    %3839 = vmatpush1.msra.mxu0 %v3838
    %3840 = vmatprep.subr.mxu0 0.0
    %3841 = vmatpush2.msra.mxu0 0.0
    %3842 = vmatprep.subr.mxu0 0.0
    %3843 = vmatpush2.msra.mxu0 0.0
    %3844 = vmatprep.subr.mxu0 0.0
    %3845 = vmatpush2.msra.mxu0 0.0
    %3846 = vmatprep.subr.mxu0 0.0
    %3847 = vmatpush2.msra.mxu0 0.0
    %3848 = vmatprep.subr.mxu0 0.0
    %3849 = vmatpush2.msra.mxu0 0.0
    %3850 = vmatprep.subr.mxu0 0.0
    %3851 = vmatpush2.msra.mxu0 0.0
    %3852 = vmatprep.subr.mxu0 0.0
    %3853 = vmatpush2.msra.mxu0 0.0
    %3854 = vmatprep.subr.mxu0 0.0
    %3855 = vmatpush2.msra.mxu0 0.0
    %3856 = vmatprep.subr.mxu0 0.0
    %3857 = vmatpush2.msra.mxu0 0.0
    %3858 = vmatprep.subr.mxu0 0.0
    %3859 = vmatpush2.msra.mxu0 0.0
    %3860 = vmatprep.subr.mxu0 0.0
    %3861 = vmatpush2.msra.mxu0 0.0
    %3862 = vmatprep.subr.mxu0 0.0
    %3863 = vmatpush2.msra.mxu0 0.0
    %3864 = vmatprep.subr.mxu0 0.0
    %3865 = vmatpush2.msra.mxu0 0.0
    %3866 = vmatprep.subr.mxu0 0.0
    %3867 = vmatpush2.msra.mxu0 0.0
    %3868 = vmatprep.subr.mxu0 0.0
    %3869 = vmatpush2.msra.mxu0 0.0
    %3870 = vmatprep.subr.mxu0 0.0
    %3871 = vmatpush2.msra.mxu0 0.0
    %3872 = vmatprep.mubr.f32.mxu0 0.0
    %v3873 = vand.u32 %v2667, 4294901760
    %3874 = vmatmul.mubr.f32.gmra.mxu0 %v3873
    %v3875 = vpop.f32.mrf.mxu0
    %v3876 = vadd.f32 %v3699, %v3875
    %v3877 = vpop.f32.mrf.mxu0
    %3878 = vmatprep.mubr.f32.mxu0 0.0
    %v3879 = vand.u32 %v2668, 4294901760
    %3880 = vmatmul.mubr.f32.gmra.mxu0 %v3879
    %v3881 = vpop.f32.mrf.mxu0
    %v3882 = vadd.f32 %v3705, %v3881
    %v3883 = vpop.f32.mrf.mxu0
    %3884 = vmatprep.mubr.f32.mxu0 0.0
    %v3885 = vand.u32 %v2669, 4294901760
    %3886 = vmatmul.mubr.f32.gmra.mxu0 %v3885
    %v3887 = vpop.f32.mrf.mxu0
    %v3888 = vadd.f32 %v3711, %v3887
    %v3889 = vpop.f32.mrf.mxu0
    %3890 = vmatprep.mubr.f32.mxu0 0.0
    %v3891 = vand.u32 %v2670, 4294901760
    %3892 = vmatmul.mubr.f32.gmra.mxu0 %v3891
    %v3893 = vpop.f32.mrf.mxu0
    %v3894 = vadd.f32 %v3717, %v3893
    %v3895 = vpop.f32.mrf.mxu0
    %3896 = vmatprep.mubr.f32.mxu0 0.0
    %v3897 = vand.u32 %v2671, 4294901760
    %3898 = vmatmul.mubr.f32.gmra.mxu0 %v3897
    %v3899 = vpop.f32.mrf.mxu0
    %v3900 = vadd.f32 %v3723, %v3899
    %v3901 = vpop.f32.mrf.mxu0
    %3902 = vmatprep.mubr.f32.mxu0 0.0
    %v3903 = vand.u32 %v2672, 4294901760
    %3904 = vmatmul.mubr.f32.gmra.mxu0 %v3903
    %v3905 = vpop.f32.mrf.mxu0
    %v3906 = vadd.f32 %v3729, %v3905
    %v3907 = vpop.f32.mrf.mxu0
    %3908 = vmatprep.mubr.f32.mxu0 0.0
    %v3909 = vand.u32 %v2673, 4294901760
    %3910 = vmatmul.mubr.f32.gmra.mxu0 %v3909
    %v3911 = vpop.f32.mrf.mxu0
    %v3912 = vadd.f32 %v3735, %v3911
    %v3913 = vpop.f32.mrf.mxu0
    %3914 = vmatprep.mubr.f32.mxu0 0.0
    %v3915 = vand.u32 %v2674, 4294901760
    %3916 = vmatmul.mubr.f32.gmra.mxu0 %v3915
    %v3917 = vpop.f32.mrf.mxu0
    %v3918 = vadd.f32 %v3741, %v3917
    %v3919 = vpop.f32.mrf.mxu0
    %3920 = vmatprep.mubr.f32.mxu0 0.0
    %v3921 = vand.u32 %v2675, 4294901760
    %3922 = vmatmul.mubr.f32.gmra.mxu0 %v3921
    %v3923 = vpop.f32.mrf.mxu0
    %v3924 = vadd.f32 %v3747, %v3923
    %v3925 = vpop.f32.mrf.mxu0
    %3926 = vmatprep.mubr.f32.mxu0 0.0
    %v3927 = vand.u32 %v2676, 4294901760
    %3928 = vmatmul.mubr.f32.gmra.mxu0 %v3927
    %v3929 = vpop.f32.mrf.mxu0
    %v3930 = vadd.f32 %v3753, %v3929
    %v3931 = vpop.f32.mrf.mxu0
    %3932 = vmatprep.mubr.f32.mxu0 0.0
    %v3933 = vand.u32 %v2677, 4294901760
    %3934 = vmatmul.mubr.f32.gmra.mxu0 %v3933
    %v3935 = vpop.f32.mrf.mxu0
    %v3936 = vadd.f32 %v3759, %v3935
    %v3937 = vpop.f32.mrf.mxu0
    %3938 = vmatprep.mubr.f32.mxu0 0.0
    %v3939 = vand.u32 %v2678, 4294901760
    %3940 = vmatmul.mubr.f32.gmra.mxu0 %v3939
    %v3941 = vpop.f32.mrf.mxu0
    %v3942 = vadd.f32 %v3765, %v3941
    %v3943 = vpop.f32.mrf.mxu0
    %3944 = vmatprep.mubr.f32.mxu0 0.0
    %v3945 = vand.u32 %v2679, 4294901760
    %3946 = vmatmul.mubr.f32.gmra.mxu0 %v3945
    %v3947 = vpop.f32.mrf.mxu0
    %v3948 = vadd.f32 %v3771, %v3947
    %v3949 = vpop.f32.mrf.mxu0
    %3950 = vmatprep.mubr.f32.mxu0 0.0
    %v3951 = vand.u32 %v2680, 4294901760
    %3952 = vmatmul.mubr.f32.gmra.mxu0 %v3951
    %v3953 = vpop.f32.mrf.mxu0
    %v3954 = vadd.f32 %v3777, %v3953
    %v3955 = vpop.f32.mrf.mxu0
    %3956 = vmatprep.mubr.f32.mxu0 0.0
    %v3957 = vand.u32 %v2681, 4294901760
    %3958 = vmatmul.mubr.f32.gmra.mxu0 %v3957
    %v3959 = vpop.f32.mrf.mxu0
    %v3960 = vadd.f32 %v3783, %v3959
    %v3961 = vpop.f32.mrf.mxu0
    %3962 = vmatprep.mubr.f32.mxu0 0.0
    %v3963 = vand.u32 %v2682, 4294901760
    %3964 = vmatmul.mubr.f32.gmra.mxu0 %v3963
    %v3965 = vpop.f32.mrf.mxu0
    %v3966 = vadd.f32 %v3789, %v3965
    %v3967 = vpop.f32.mrf.mxu0
    %3968 = vdwg.mxu0
    %v3969 = vlaneseq
    %v3970 = vshrl.u32 %v3969, 7
    %v3971 = vsub.s32 0, %v3970
    %v3972 = vrot.slane %v90, %v3971
    %3973 = vmatprep.subr.mxu0 0.0
    %v3974 = vand.u32 %v3966, 4294901760
    %3975 = vmatpush1.msra.mxu0 %v3974
    %3976 = vmatprep.subr.mxu0 0.0
    %v3977 = vand.u32 %v3960, 4294901760
    %3978 = vmatpush1.msra.mxu0 %v3977
    %3979 = vmatprep.subr.mxu0 0.0
    %v3980 = vand.u32 %v3954, 4294901760
    %3981 = vmatpush1.msra.mxu0 %v3980
    %3982 = vmatprep.subr.mxu0 0.0
    %v3983 = vand.u32 %v3948, 4294901760
    %3984 = vmatpush1.msra.mxu0 %v3983
    %3985 = vmatprep.subr.mxu0 0.0
    %v3986 = vand.u32 %v3942, 4294901760
    %3987 = vmatpush1.msra.mxu0 %v3986
    %3988 = vmatprep.subr.mxu0 0.0
    %v3989 = vand.u32 %v3936, 4294901760
    %3990 = vmatpush1.msra.mxu0 %v3989
    %3991 = vmatprep.subr.mxu0 0.0
    %v3992 = vand.u32 %v3930, 4294901760
    %3993 = vmatpush1.msra.mxu0 %v3992
    %3994 = vmatprep.subr.mxu0 0.0
    %v3995 = vand.u32 %v3924, 4294901760
    %3996 = vmatpush1.msra.mxu0 %v3995
    %3997 = vmatprep.subr.mxu0 0.0
    %v3998 = vand.u32 %v3918, 4294901760
    %3999 = vmatpush1.msra.mxu0 %v3998
    %4000 = vmatprep.subr.mxu0 0.0
    %v4001 = vand.u32 %v3912, 4294901760
    %4002 = vmatpush1.msra.mxu0 %v4001
    %4003 = vmatprep.subr.mxu0 0.0
    %v4004 = vand.u32 %v3906, 4294901760
    %4005 = vmatpush1.msra.mxu0 %v4004
    %4006 = vmatprep.subr.mxu0 0.0
    %v4007 = vand.u32 %v3900, 4294901760
    %4008 = vmatpush1.msra.mxu0 %v4007
    %4009 = vmatprep.subr.mxu0 0.0
    %v4010 = vand.u32 %v3894, 4294901760
    %4011 = vmatpush1.msra.mxu0 %v4010
    %4012 = vmatprep.subr.mxu0 0.0
    %v4013 = vand.u32 %v3888, 4294901760
    %4014 = vmatpush1.msra.mxu0 %v4013
    %4015 = vmatprep.subr.mxu0 0.0
    %v4016 = vand.u32 %v3882, 4294901760
    %4017 = vmatpush1.msra.mxu0 %v4016
    %4018 = vmatprep.subr.mxu0 0.0
    %v4019 = vand.u32 %v3876, 4294901760
    %4020 = vmatpush1.msra.mxu0 %v4019
    %4021 = vmatprep.subr.mxu0 0.0
    %4022 = vmatpush2.msra.mxu0 0.0
    %4023 = vmatprep.subr.mxu0 0.0
    %4024 = vmatpush2.msra.mxu0 0.0
    %4025 = vmatprep.subr.mxu0 0.0
    %4026 = vmatpush2.msra.mxu0 0.0
    %4027 = vmatprep.subr.mxu0 0.0
    %4028 = vmatpush2.msra.mxu0 0.0
    %4029 = vmatprep.subr.mxu0 0.0
    %4030 = vmatpush2.msra.mxu0 0.0
    %4031 = vmatprep.subr.mxu0 0.0
    %4032 = vmatpush2.msra.mxu0 0.0
    %4033 = vmatprep.subr.mxu0 0.0
    %4034 = vmatpush2.msra.mxu0 0.0
    %4035 = vmatprep.subr.mxu0 0.0
    %4036 = vmatpush2.msra.mxu0 0.0
    %4037 = vmatprep.subr.mxu0 0.0
    %4038 = vmatpush2.msra.mxu0 0.0
    %4039 = vmatprep.subr.mxu0 0.0
    %4040 = vmatpush2.msra.mxu0 0.0
    %4041 = vmatprep.subr.mxu0 0.0
    %4042 = vmatpush2.msra.mxu0 0.0
    %4043 = vmatprep.subr.mxu0 0.0
    %4044 = vmatpush2.msra.mxu0 0.0
    %4045 = vmatprep.subr.mxu0 0.0
    %4046 = vmatpush2.msra.mxu0 0.0
    %4047 = vmatprep.subr.mxu0 0.0
    %4048 = vmatpush2.msra.mxu0 0.0
    %4049 = vmatprep.subr.mxu0 0.0
    %4050 = vmatpush2.msra.mxu0 0.0
    %4051 = vmatprep.subr.mxu0 0.0
    %4052 = vmatpush2.msra.mxu0 0.0
    %4053 = vmatprep.mubr.f32.mxu0 0.0
    %v4054 = vand.u32 %v41, 4294901760
    %v4055 = vsub.f32 %v41, %v4054
    %v4056 = vand.u32 %v4055, 4294901760
    %v4057 = vsub.f32 %v4055, %v4056
    %v4058 = vand.u32 %v4057, 4294901760
    %4059 = vmatmul.mubr.f32.gmra.mxu0 %v4058
    %v4060 = vpop.f32.mrf.mxu0
    %v4061 = vadd.f32 %v3972, %v4060
    %v4062 = vpop.f32.mrf.mxu0
    %4063 = vmatprep.mubr.f32.mxu0 0.0
    %v4064 = vand.u32 %v42, 4294901760
    %v4065 = vsub.f32 %v42, %v4064
    %v4066 = vand.u32 %v4065, 4294901760
    %v4067 = vsub.f32 %v4065, %v4066
    %v4068 = vand.u32 %v4067, 4294901760
    %4069 = vmatmul.mubr.f32.gmra.mxu0 %v4068
    %v4070 = vpop.f32.mrf.mxu0
    %v4071 = vadd.f32 %v3972, %v4070
    %v4072 = vpop.f32.mrf.mxu0
    %4073 = vmatprep.mubr.f32.mxu0 0.0
    %v4074 = vand.u32 %v43, 4294901760
    %v4075 = vsub.f32 %v43, %v4074
    %v4076 = vand.u32 %v4075, 4294901760
    %v4077 = vsub.f32 %v4075, %v4076
    %v4078 = vand.u32 %v4077, 4294901760
    %4079 = vmatmul.mubr.f32.gmra.mxu0 %v4078
    %v4080 = vpop.f32.mrf.mxu0
    %v4081 = vadd.f32 %v3972, %v4080
    %v4082 = vpop.f32.mrf.mxu0
    %4083 = vmatprep.mubr.f32.mxu0 0.0
    %v4084 = vand.u32 %v44, 4294901760
    %v4085 = vsub.f32 %v44, %v4084
    %v4086 = vand.u32 %v4085, 4294901760
    %v4087 = vsub.f32 %v4085, %v4086
    %v4088 = vand.u32 %v4087, 4294901760
    %4089 = vmatmul.mubr.f32.gmra.mxu0 %v4088
    %v4090 = vpop.f32.mrf.mxu0
    %v4091 = vadd.f32 %v3972, %v4090
    %v4092 = vpop.f32.mrf.mxu0
    %4093 = vmatprep.mubr.f32.mxu0 0.0
    %v4094 = vand.u32 %v45, 4294901760
    %v4095 = vsub.f32 %v45, %v4094
    %v4096 = vand.u32 %v4095, 4294901760
    %v4097 = vsub.f32 %v4095, %v4096
    %v4098 = vand.u32 %v4097, 4294901760
    %4099 = vmatmul.mubr.f32.gmra.mxu0 %v4098
    %v4100 = vpop.f32.mrf.mxu0
    %v4101 = vadd.f32 %v3972, %v4100
    %v4102 = vpop.f32.mrf.mxu0
    %4103 = vmatprep.mubr.f32.mxu0 0.0
    %v4104 = vand.u32 %v46, 4294901760
    %v4105 = vsub.f32 %v46, %v4104
    %v4106 = vand.u32 %v4105, 4294901760
    %v4107 = vsub.f32 %v4105, %v4106
    %v4108 = vand.u32 %v4107, 4294901760
    %4109 = vmatmul.mubr.f32.gmra.mxu0 %v4108
    %v4110 = vpop.f32.mrf.mxu0
    %v4111 = vadd.f32 %v3972, %v4110
    %v4112 = vpop.f32.mrf.mxu0
    %4113 = vmatprep.mubr.f32.mxu0 0.0
    %v4114 = vand.u32 %v47, 4294901760
    %v4115 = vsub.f32 %v47, %v4114
    %v4116 = vand.u32 %v4115, 4294901760
    %v4117 = vsub.f32 %v4115, %v4116
    %v4118 = vand.u32 %v4117, 4294901760
    %4119 = vmatmul.mubr.f32.gmra.mxu0 %v4118
    %v4120 = vpop.f32.mrf.mxu0
    %v4121 = vadd.f32 %v3972, %v4120
    %v4122 = vpop.f32.mrf.mxu0
    %4123 = vmatprep.mubr.f32.mxu0 0.0
    %v4124 = vand.u32 %v48, 4294901760
    %v4125 = vsub.f32 %v48, %v4124
    %v4126 = vand.u32 %v4125, 4294901760
    %v4127 = vsub.f32 %v4125, %v4126
    %v4128 = vand.u32 %v4127, 4294901760
    %4129 = vmatmul.mubr.f32.gmra.mxu0 %v4128
    %v4130 = vpop.f32.mrf.mxu0
    %v4131 = vadd.f32 %v3972, %v4130
    %v4132 = vpop.f32.mrf.mxu0
    %4133 = vmatprep.mubr.f32.mxu0 0.0
    %v4134 = vand.u32 %v49, 4294901760
    %v4135 = vsub.f32 %v49, %v4134
    %v4136 = vand.u32 %v4135, 4294901760
    %v4137 = vsub.f32 %v4135, %v4136
    %v4138 = vand.u32 %v4137, 4294901760
    %4139 = vmatmul.mubr.f32.gmra.mxu0 %v4138
    %v4140 = vpop.f32.mrf.mxu0
    %v4141 = vadd.f32 %v3972, %v4140
    %v4142 = vpop.f32.mrf.mxu0
    %4143 = vmatprep.mubr.f32.mxu0 0.0
    %v4144 = vand.u32 %v50, 4294901760
    %v4145 = vsub.f32 %v50, %v4144
    %v4146 = vand.u32 %v4145, 4294901760
    %v4147 = vsub.f32 %v4145, %v4146
    %v4148 = vand.u32 %v4147, 4294901760
    %4149 = vmatmul.mubr.f32.gmra.mxu0 %v4148
    %v4150 = vpop.f32.mrf.mxu0
    %v4151 = vadd.f32 %v3972, %v4150
    %v4152 = vpop.f32.mrf.mxu0
    %4153 = vmatprep.mubr.f32.mxu0 0.0
    %v4154 = vand.u32 %v51, 4294901760
    %v4155 = vsub.f32 %v51, %v4154
    %v4156 = vand.u32 %v4155, 4294901760
    %v4157 = vsub.f32 %v4155, %v4156
    %v4158 = vand.u32 %v4157, 4294901760
    %4159 = vmatmul.mubr.f32.gmra.mxu0 %v4158
    %v4160 = vpop.f32.mrf.mxu0
    %v4161 = vadd.f32 %v3972, %v4160
    %v4162 = vpop.f32.mrf.mxu0
    %4163 = vmatprep.mubr.f32.mxu0 0.0
    %v4164 = vand.u32 %v52, 4294901760
    %v4165 = vsub.f32 %v52, %v4164
    %v4166 = vand.u32 %v4165, 4294901760
    %v4167 = vsub.f32 %v4165, %v4166
    %v4168 = vand.u32 %v4167, 4294901760
    %4169 = vmatmul.mubr.f32.gmra.mxu0 %v4168
    %v4170 = vpop.f32.mrf.mxu0
    %v4171 = vadd.f32 %v3972, %v4170
    %v4172 = vpop.f32.mrf.mxu0
    %4173 = vmatprep.mubr.f32.mxu0 0.0
    %v4174 = vand.u32 %v53, 4294901760
    %v4175 = vsub.f32 %v53, %v4174
    %v4176 = vand.u32 %v4175, 4294901760
    %v4177 = vsub.f32 %v4175, %v4176
    %v4178 = vand.u32 %v4177, 4294901760
    %4179 = vmatmul.mubr.f32.gmra.mxu0 %v4178
    %v4180 = vpop.f32.mrf.mxu0
    %v4181 = vadd.f32 %v3972, %v4180
    %v4182 = vpop.f32.mrf.mxu0
    %4183 = vmatprep.mubr.f32.mxu0 0.0
    %v4184 = vand.u32 %v54, 4294901760
    %v4185 = vsub.f32 %v54, %v4184
    %v4186 = vand.u32 %v4185, 4294901760
    %v4187 = vsub.f32 %v4185, %v4186
    %v4188 = vand.u32 %v4187, 4294901760
    %4189 = vmatmul.mubr.f32.gmra.mxu0 %v4188
    %v4190 = vpop.f32.mrf.mxu0
    %v4191 = vadd.f32 %v3972, %v4190
    %v4192 = vpop.f32.mrf.mxu0
    %4193 = vmatprep.mubr.f32.mxu0 0.0
    %v4194 = vand.u32 %v55, 4294901760
    %v4195 = vsub.f32 %v55, %v4194
    %v4196 = vand.u32 %v4195, 4294901760
    %v4197 = vsub.f32 %v4195, %v4196
    %v4198 = vand.u32 %v4197, 4294901760
    %4199 = vmatmul.mubr.f32.gmra.mxu0 %v4198
    %v4200 = vpop.f32.mrf.mxu0
    %v4201 = vadd.f32 %v3972, %v4200
    %v4202 = vpop.f32.mrf.mxu0
    %4203 = vmatprep.mubr.f32.mxu0 0.0
    %v4204 = vand.u32 %v56, 4294901760
    %v4205 = vsub.f32 %v56, %v4204
    %v4206 = vand.u32 %v4205, 4294901760
    %v4207 = vsub.f32 %v4205, %v4206
    %v4208 = vand.u32 %v4207, 4294901760
    %4209 = vmatmul.mubr.f32.gmra.mxu0 %v4208
    %v4210 = vpop.f32.mrf.mxu0
    %v4211 = vadd.f32 %v3972, %v4210
    %v4212 = vpop.f32.mrf.mxu0
    %4213 = vdwg.mxu0
    %4214 = vmatprep.subr.mxu0 0.0
    %v4215 = vand.u32 %v3966, 4294901760
    %v4216 = vsub.f32 %v3966, %v4215
    %v4217 = vand.u32 %v4216, 4294901760
    %v4218 = vsub.f32 %v4216, %v4217
    %v4219 = vand.u32 %v4218, 4294901760
    %4220 = vmatpush1.msra.mxu0 %v4219
    %4221 = vmatprep.subr.mxu0 0.0
    %v4222 = vand.u32 %v3960, 4294901760
    %v4223 = vsub.f32 %v3960, %v4222
    %v4224 = vand.u32 %v4223, 4294901760
    %v4225 = vsub.f32 %v4223, %v4224
    %v4226 = vand.u32 %v4225, 4294901760
    %4227 = vmatpush1.msra.mxu0 %v4226
    %4228 = vmatprep.subr.mxu0 0.0
    %v4229 = vand.u32 %v3954, 4294901760
    %v4230 = vsub.f32 %v3954, %v4229
    %v4231 = vand.u32 %v4230, 4294901760
    %v4232 = vsub.f32 %v4230, %v4231
    %v4233 = vand.u32 %v4232, 4294901760
    %4234 = vmatpush1.msra.mxu0 %v4233
    %4235 = vmatprep.subr.mxu0 0.0
    %v4236 = vand.u32 %v3948, 4294901760
    %v4237 = vsub.f32 %v3948, %v4236
    %v4238 = vand.u32 %v4237, 4294901760
    %v4239 = vsub.f32 %v4237, %v4238
    %v4240 = vand.u32 %v4239, 4294901760
    %4241 = vmatpush1.msra.mxu0 %v4240
    %4242 = vmatprep.subr.mxu0 0.0
    %v4243 = vand.u32 %v3942, 4294901760
    %v4244 = vsub.f32 %v3942, %v4243
    %v4245 = vand.u32 %v4244, 4294901760
    %v4246 = vsub.f32 %v4244, %v4245
    %v4247 = vand.u32 %v4246, 4294901760
    %4248 = vmatpush1.msra.mxu0 %v4247
    %4249 = vmatprep.subr.mxu0 0.0
    %v4250 = vand.u32 %v3936, 4294901760
    %v4251 = vsub.f32 %v3936, %v4250
    %v4252 = vand.u32 %v4251, 4294901760
    %v4253 = vsub.f32 %v4251, %v4252
    %v4254 = vand.u32 %v4253, 4294901760
    %4255 = vmatpush1.msra.mxu0 %v4254
    %4256 = vmatprep.subr.mxu0 0.0
    %v4257 = vand.u32 %v3930, 4294901760
    %v4258 = vsub.f32 %v3930, %v4257
    %v4259 = vand.u32 %v4258, 4294901760
    %v4260 = vsub.f32 %v4258, %v4259
    %v4261 = vand.u32 %v4260, 4294901760
    %4262 = vmatpush1.msra.mxu0 %v4261
    %4263 = vmatprep.subr.mxu0 0.0
    %v4264 = vand.u32 %v3924, 4294901760
    %v4265 = vsub.f32 %v3924, %v4264
    %v4266 = vand.u32 %v4265, 4294901760
    %v4267 = vsub.f32 %v4265, %v4266
    %v4268 = vand.u32 %v4267, 4294901760
    %4269 = vmatpush1.msra.mxu0 %v4268
    %4270 = vmatprep.subr.mxu0 0.0
    %v4271 = vand.u32 %v3918, 4294901760
    %v4272 = vsub.f32 %v3918, %v4271
    %v4273 = vand.u32 %v4272, 4294901760
    %v4274 = vsub.f32 %v4272, %v4273
    %v4275 = vand.u32 %v4274, 4294901760
    %4276 = vmatpush1.msra.mxu0 %v4275
    %4277 = vmatprep.subr.mxu0 0.0
    %v4278 = vand.u32 %v3912, 4294901760
    %v4279 = vsub.f32 %v3912, %v4278
    %v4280 = vand.u32 %v4279, 4294901760
    %v4281 = vsub.f32 %v4279, %v4280
    %v4282 = vand.u32 %v4281, 4294901760
    %4283 = vmatpush1.msra.mxu0 %v4282
    %4284 = vmatprep.subr.mxu0 0.0
    %v4285 = vand.u32 %v3906, 4294901760
    %v4286 = vsub.f32 %v3906, %v4285
    %v4287 = vand.u32 %v4286, 4294901760
    %v4288 = vsub.f32 %v4286, %v4287
    %v4289 = vand.u32 %v4288, 4294901760
    %4290 = vmatpush1.msra.mxu0 %v4289
    %4291 = vmatprep.subr.mxu0 0.0
    %v4292 = vand.u32 %v3900, 4294901760
    %v4293 = vsub.f32 %v3900, %v4292
    %v4294 = vand.u32 %v4293, 4294901760
    %v4295 = vsub.f32 %v4293, %v4294
    %v4296 = vand.u32 %v4295, 4294901760
    %4297 = vmatpush1.msra.mxu0 %v4296
    %4298 = vmatprep.subr.mxu0 0.0
    %v4299 = vand.u32 %v3894, 4294901760
    %v4300 = vsub.f32 %v3894, %v4299
    %v4301 = vand.u32 %v4300, 4294901760
    %v4302 = vsub.f32 %v4300, %v4301
    %v4303 = vand.u32 %v4302, 4294901760
    %4304 = vmatpush1.msra.mxu0 %v4303
    %4305 = vmatprep.subr.mxu0 0.0
    %v4306 = vand.u32 %v3888, 4294901760
    %v4307 = vsub.f32 %v3888, %v4306
    %v4308 = vand.u32 %v4307, 4294901760
    %v4309 = vsub.f32 %v4307, %v4308
    %v4310 = vand.u32 %v4309, 4294901760
    %4311 = vmatpush1.msra.mxu0 %v4310
    %4312 = vmatprep.subr.mxu0 0.0
    %v4313 = vand.u32 %v3882, 4294901760
    %v4314 = vsub.f32 %v3882, %v4313
    %v4315 = vand.u32 %v4314, 4294901760
    %v4316 = vsub.f32 %v4314, %v4315
    %v4317 = vand.u32 %v4316, 4294901760
    %4318 = vmatpush1.msra.mxu0 %v4317
    %4319 = vmatprep.subr.mxu0 0.0
    %v4320 = vand.u32 %v3876, 4294901760
    %v4321 = vsub.f32 %v3876, %v4320
    %v4322 = vand.u32 %v4321, 4294901760
    %v4323 = vsub.f32 %v4321, %v4322
    %v4324 = vand.u32 %v4323, 4294901760
    %4325 = vmatpush1.msra.mxu0 %v4324
    %4326 = vmatprep.subr.mxu0 0.0
    %4327 = vmatpush2.msra.mxu0 0.0
    %4328 = vmatprep.subr.mxu0 0.0
    %4329 = vmatpush2.msra.mxu0 0.0
    %4330 = vmatprep.subr.mxu0 0.0
    %4331 = vmatpush2.msra.mxu0 0.0
    %4332 = vmatprep.subr.mxu0 0.0
    %4333 = vmatpush2.msra.mxu0 0.0
    %4334 = vmatprep.subr.mxu0 0.0
    %4335 = vmatpush2.msra.mxu0 0.0
    %4336 = vmatprep.subr.mxu0 0.0
    %4337 = vmatpush2.msra.mxu0 0.0
    %4338 = vmatprep.subr.mxu0 0.0
    %4339 = vmatpush2.msra.mxu0 0.0
    %4340 = vmatprep.subr.mxu0 0.0
    %4341 = vmatpush2.msra.mxu0 0.0
    %4342 = vmatprep.subr.mxu0 0.0
    %4343 = vmatpush2.msra.mxu0 0.0
    %4344 = vmatprep.subr.mxu0 0.0
    %4345 = vmatpush2.msra.mxu0 0.0
    %4346 = vmatprep.subr.mxu0 0.0
    %4347 = vmatpush2.msra.mxu0 0.0
    %4348 = vmatprep.subr.mxu0 0.0
    %4349 = vmatpush2.msra.mxu0 0.0
    %4350 = vmatprep.subr.mxu0 0.0
    %4351 = vmatpush2.msra.mxu0 0.0
    %4352 = vmatprep.subr.mxu0 0.0
    %4353 = vmatpush2.msra.mxu0 0.0
    %4354 = vmatprep.subr.mxu0 0.0
    %4355 = vmatpush2.msra.mxu0 0.0
    %4356 = vmatprep.subr.mxu0 0.0
    %4357 = vmatpush2.msra.mxu0 0.0
    %4358 = vmatprep.mubr.f32.mxu0 0.0
    %v4359 = vand.u32 %v41, 4294901760
    %4360 = vmatmul.mubr.f32.gmra.mxu0 %v4359
    %v4361 = vpop.f32.mrf.mxu0
    %v4362 = vadd.f32 %v4061, %v4361
    %v4363 = vpop.f32.mrf.mxu0
    %4364 = vmatprep.mubr.f32.mxu0 0.0
    %v4365 = vand.u32 %v42, 4294901760
    %4366 = vmatmul.mubr.f32.gmra.mxu0 %v4365
    %v4367 = vpop.f32.mrf.mxu0
    %v4368 = vadd.f32 %v4071, %v4367
    %v4369 = vpop.f32.mrf.mxu0
    %4370 = vmatprep.mubr.f32.mxu0 0.0
    %v4371 = vand.u32 %v43, 4294901760
    %4372 = vmatmul.mubr.f32.gmra.mxu0 %v4371
    %v4373 = vpop.f32.mrf.mxu0
    %v4374 = vadd.f32 %v4081, %v4373
    %v4375 = vpop.f32.mrf.mxu0
    %4376 = vmatprep.mubr.f32.mxu0 0.0
    %v4377 = vand.u32 %v44, 4294901760
    %4378 = vmatmul.mubr.f32.gmra.mxu0 %v4377
    %v4379 = vpop.f32.mrf.mxu0
    %v4380 = vadd.f32 %v4091, %v4379
    %v4381 = vpop.f32.mrf.mxu0
    %4382 = vmatprep.mubr.f32.mxu0 0.0
    %v4383 = vand.u32 %v45, 4294901760
    %4384 = vmatmul.mubr.f32.gmra.mxu0 %v4383
    %v4385 = vpop.f32.mrf.mxu0
    %v4386 = vadd.f32 %v4101, %v4385
    %v4387 = vpop.f32.mrf.mxu0
    %4388 = vmatprep.mubr.f32.mxu0 0.0
    %v4389 = vand.u32 %v46, 4294901760
    %4390 = vmatmul.mubr.f32.gmra.mxu0 %v4389
    %v4391 = vpop.f32.mrf.mxu0
    %v4392 = vadd.f32 %v4111, %v4391
    %v4393 = vpop.f32.mrf.mxu0
    %4394 = vmatprep.mubr.f32.mxu0 0.0
    %v4395 = vand.u32 %v47, 4294901760
    %4396 = vmatmul.mubr.f32.gmra.mxu0 %v4395
    %v4397 = vpop.f32.mrf.mxu0
    %v4398 = vadd.f32 %v4121, %v4397
    %v4399 = vpop.f32.mrf.mxu0
    %4400 = vmatprep.mubr.f32.mxu0 0.0
    %v4401 = vand.u32 %v48, 4294901760
    %4402 = vmatmul.mubr.f32.gmra.mxu0 %v4401
    %v4403 = vpop.f32.mrf.mxu0
    %v4404 = vadd.f32 %v4131, %v4403
    %v4405 = vpop.f32.mrf.mxu0
    %4406 = vmatprep.mubr.f32.mxu0 0.0
    %v4407 = vand.u32 %v49, 4294901760
    %4408 = vmatmul.mubr.f32.gmra.mxu0 %v4407
    %v4409 = vpop.f32.mrf.mxu0
    %v4410 = vadd.f32 %v4141, %v4409
    %v4411 = vpop.f32.mrf.mxu0
    %4412 = vmatprep.mubr.f32.mxu0 0.0
    %v4413 = vand.u32 %v50, 4294901760
    %4414 = vmatmul.mubr.f32.gmra.mxu0 %v4413
    %v4415 = vpop.f32.mrf.mxu0
    %v4416 = vadd.f32 %v4151, %v4415
    %v4417 = vpop.f32.mrf.mxu0
    %4418 = vmatprep.mubr.f32.mxu0 0.0
    %v4419 = vand.u32 %v51, 4294901760
    %4420 = vmatmul.mubr.f32.gmra.mxu0 %v4419
    %v4421 = vpop.f32.mrf.mxu0
    %v4422 = vadd.f32 %v4161, %v4421
    %v4423 = vpop.f32.mrf.mxu0
    %4424 = vmatprep.mubr.f32.mxu0 0.0
    %v4425 = vand.u32 %v52, 4294901760
    %4426 = vmatmul.mubr.f32.gmra.mxu0 %v4425
    %v4427 = vpop.f32.mrf.mxu0
    %v4428 = vadd.f32 %v4171, %v4427
    %v4429 = vpop.f32.mrf.mxu0
    %4430 = vmatprep.mubr.f32.mxu0 0.0
    %v4431 = vand.u32 %v53, 4294901760
    %4432 = vmatmul.mubr.f32.gmra.mxu0 %v4431
    %v4433 = vpop.f32.mrf.mxu0
    %v4434 = vadd.f32 %v4181, %v4433
    %v4435 = vpop.f32.mrf.mxu0
    %4436 = vmatprep.mubr.f32.mxu0 0.0
    %v4437 = vand.u32 %v54, 4294901760
    %4438 = vmatmul.mubr.f32.gmra.mxu0 %v4437
    %v4439 = vpop.f32.mrf.mxu0
    %v4440 = vadd.f32 %v4191, %v4439
    %v4441 = vpop.f32.mrf.mxu0
    %4442 = vmatprep.mubr.f32.mxu0 0.0
    %v4443 = vand.u32 %v55, 4294901760
    %4444 = vmatmul.mubr.f32.gmra.mxu0 %v4443
    %v4445 = vpop.f32.mrf.mxu0
    %v4446 = vadd.f32 %v4201, %v4445
    %v4447 = vpop.f32.mrf.mxu0
    %4448 = vmatprep.mubr.f32.mxu0 0.0
    %v4449 = vand.u32 %v56, 4294901760
    %4450 = vmatmul.mubr.f32.gmra.mxu0 %v4449
    %v4451 = vpop.f32.mrf.mxu0
    %v4452 = vadd.f32 %v4211, %v4451
    %v4453 = vpop.f32.mrf.mxu0
    %4454 = vdwg.mxu0
    %4455 = vmatprep.subr.mxu0 0.0
    %v4456 = vand.u32 %v3966, 4294901760
    %v4457 = vsub.f32 %v3966, %v4456
    %4458 = vmatpush1.msra.mxu0 %v4457
    %4459 = vmatprep.subr.mxu0 0.0
    %v4460 = vand.u32 %v3960, 4294901760
    %v4461 = vsub.f32 %v3960, %v4460
    %4462 = vmatpush1.msra.mxu0 %v4461
    %4463 = vmatprep.subr.mxu0 0.0
    %v4464 = vand.u32 %v3954, 4294901760
    %v4465 = vsub.f32 %v3954, %v4464
    %4466 = vmatpush1.msra.mxu0 %v4465
    %4467 = vmatprep.subr.mxu0 0.0
    %v4468 = vand.u32 %v3948, 4294901760
    %v4469 = vsub.f32 %v3948, %v4468
    %4470 = vmatpush1.msra.mxu0 %v4469
    %4471 = vmatprep.subr.mxu0 0.0
    %v4472 = vand.u32 %v3942, 4294901760
    %v4473 = vsub.f32 %v3942, %v4472
    %4474 = vmatpush1.msra.mxu0 %v4473
    %4475 = vmatprep.subr.mxu0 0.0
    %v4476 = vand.u32 %v3936, 4294901760
    %v4477 = vsub.f32 %v3936, %v4476
    %4478 = vmatpush1.msra.mxu0 %v4477
    %4479 = vmatprep.subr.mxu0 0.0
    %v4480 = vand.u32 %v3930, 4294901760
    %v4481 = vsub.f32 %v3930, %v4480
    %4482 = vmatpush1.msra.mxu0 %v4481
    %4483 = vmatprep.subr.mxu0 0.0
    %v4484 = vand.u32 %v3924, 4294901760
    %v4485 = vsub.f32 %v3924, %v4484
    %4486 = vmatpush1.msra.mxu0 %v4485
    %4487 = vmatprep.subr.mxu0 0.0
    %v4488 = vand.u32 %v3918, 4294901760
    %v4489 = vsub.f32 %v3918, %v4488
    %4490 = vmatpush1.msra.mxu0 %v4489
    %4491 = vmatprep.subr.mxu0 0.0
    %v4492 = vand.u32 %v3912, 4294901760
    %v4493 = vsub.f32 %v3912, %v4492
    %4494 = vmatpush1.msra.mxu0 %v4493
    %4495 = vmatprep.subr.mxu0 0.0
    %v4496 = vand.u32 %v3906, 4294901760
    %v4497 = vsub.f32 %v3906, %v4496
    %4498 = vmatpush1.msra.mxu0 %v4497
    %4499 = vmatprep.subr.mxu0 0.0
    %v4500 = vand.u32 %v3900, 4294901760
    %v4501 = vsub.f32 %v3900, %v4500
    %4502 = vmatpush1.msra.mxu0 %v4501
    %4503 = vmatprep.subr.mxu0 0.0
    %v4504 = vand.u32 %v3894, 4294901760
    %v4505 = vsub.f32 %v3894, %v4504
    %4506 = vmatpush1.msra.mxu0 %v4505
    %4507 = vmatprep.subr.mxu0 0.0
    %v4508 = vand.u32 %v3888, 4294901760
    %v4509 = vsub.f32 %v3888, %v4508
    %4510 = vmatpush1.msra.mxu0 %v4509
    %4511 = vmatprep.subr.mxu0 0.0
    %v4512 = vand.u32 %v3882, 4294901760
    %v4513 = vsub.f32 %v3882, %v4512
    %4514 = vmatpush1.msra.mxu0 %v4513
    %4515 = vmatprep.subr.mxu0 0.0
    %v4516 = vand.u32 %v3876, 4294901760
    %v4517 = vsub.f32 %v3876, %v4516
    %4518 = vmatpush1.msra.mxu0 %v4517
    %4519 = vmatprep.subr.mxu0 0.0
    %4520 = vmatpush2.msra.mxu0 0.0
    %4521 = vmatprep.subr.mxu0 0.0
    %4522 = vmatpush2.msra.mxu0 0.0
    %4523 = vmatprep.subr.mxu0 0.0
    %4524 = vmatpush2.msra.mxu0 0.0
    %4525 = vmatprep.subr.mxu0 0.0
    %4526 = vmatpush2.msra.mxu0 0.0
    %4527 = vmatprep.subr.mxu0 0.0
    %4528 = vmatpush2.msra.mxu0 0.0
    %4529 = vmatprep.subr.mxu0 0.0
    %4530 = vmatpush2.msra.mxu0 0.0
    %4531 = vmatprep.subr.mxu0 0.0
    %4532 = vmatpush2.msra.mxu0 0.0
    %4533 = vmatprep.subr.mxu0 0.0
    %4534 = vmatpush2.msra.mxu0 0.0
    %4535 = vmatprep.subr.mxu0 0.0
    %4536 = vmatpush2.msra.mxu0 0.0
    %4537 = vmatprep.subr.mxu0 0.0
    %4538 = vmatpush2.msra.mxu0 0.0
    %4539 = vmatprep.subr.mxu0 0.0
    %4540 = vmatpush2.msra.mxu0 0.0
    %4541 = vmatprep.subr.mxu0 0.0
    %4542 = vmatpush2.msra.mxu0 0.0
    %4543 = vmatprep.subr.mxu0 0.0
    %4544 = vmatpush2.msra.mxu0 0.0
    %4545 = vmatprep.subr.mxu0 0.0
    %4546 = vmatpush2.msra.mxu0 0.0
    %4547 = vmatprep.subr.mxu0 0.0
    %4548 = vmatpush2.msra.mxu0 0.0
    %4549 = vmatprep.subr.mxu0 0.0
    %4550 = vmatpush2.msra.mxu0 0.0
    %4551 = vmatprep.mubr.f32.mxu0 0.0
    %v4552 = vand.u32 %v41, 4294901760
    %v4553 = vsub.f32 %v41, %v4552
    %4554 = vmatmul.mubr.f32.gmra.mxu0 %v4553
    %v4555 = vpop.f32.mrf.mxu0
    %v4556 = vadd.f32 %v4362, %v4555
    %v4557 = vpop.f32.mrf.mxu0
    %4558 = vmatprep.mubr.f32.mxu0 0.0
    %v4559 = vand.u32 %v42, 4294901760
    %v4560 = vsub.f32 %v42, %v4559
    %4561 = vmatmul.mubr.f32.gmra.mxu0 %v4560
    %v4562 = vpop.f32.mrf.mxu0
    %v4563 = vadd.f32 %v4368, %v4562
    %v4564 = vpop.f32.mrf.mxu0
    %4565 = vmatprep.mubr.f32.mxu0 0.0
    %v4566 = vand.u32 %v43, 4294901760
    %v4567 = vsub.f32 %v43, %v4566
    %4568 = vmatmul.mubr.f32.gmra.mxu0 %v4567
    %v4569 = vpop.f32.mrf.mxu0
    %v4570 = vadd.f32 %v4374, %v4569
    %v4571 = vpop.f32.mrf.mxu0
    %4572 = vmatprep.mubr.f32.mxu0 0.0
    %v4573 = vand.u32 %v44, 4294901760
    %v4574 = vsub.f32 %v44, %v4573
    %4575 = vmatmul.mubr.f32.gmra.mxu0 %v4574
    %v4576 = vpop.f32.mrf.mxu0
    %v4577 = vadd.f32 %v4380, %v4576
    %v4578 = vpop.f32.mrf.mxu0
    %4579 = vmatprep.mubr.f32.mxu0 0.0
    %v4580 = vand.u32 %v45, 4294901760
    %v4581 = vsub.f32 %v45, %v4580
    %4582 = vmatmul.mubr.f32.gmra.mxu0 %v4581
    %v4583 = vpop.f32.mrf.mxu0
    %v4584 = vadd.f32 %v4386, %v4583
    %v4585 = vpop.f32.mrf.mxu0
    %4586 = vmatprep.mubr.f32.mxu0 0.0
    %v4587 = vand.u32 %v46, 4294901760
    %v4588 = vsub.f32 %v46, %v4587
    %4589 = vmatmul.mubr.f32.gmra.mxu0 %v4588
    %v4590 = vpop.f32.mrf.mxu0
    %v4591 = vadd.f32 %v4392, %v4590
    %v4592 = vpop.f32.mrf.mxu0
    %4593 = vmatprep.mubr.f32.mxu0 0.0
    %v4594 = vand.u32 %v47, 4294901760
    %v4595 = vsub.f32 %v47, %v4594
    %4596 = vmatmul.mubr.f32.gmra.mxu0 %v4595
    %v4597 = vpop.f32.mrf.mxu0
    %v4598 = vadd.f32 %v4398, %v4597
    %v4599 = vpop.f32.mrf.mxu0
    %4600 = vmatprep.mubr.f32.mxu0 0.0
    %v4601 = vand.u32 %v48, 4294901760
    %v4602 = vsub.f32 %v48, %v4601
    %4603 = vmatmul.mubr.f32.gmra.mxu0 %v4602
    %v4604 = vpop.f32.mrf.mxu0
    %v4605 = vadd.f32 %v4404, %v4604
    %v4606 = vpop.f32.mrf.mxu0
    %4607 = vmatprep.mubr.f32.mxu0 0.0
    %v4608 = vand.u32 %v49, 4294901760
    %v4609 = vsub.f32 %v49, %v4608
    %4610 = vmatmul.mubr.f32.gmra.mxu0 %v4609
    %v4611 = vpop.f32.mrf.mxu0
    %v4612 = vadd.f32 %v4410, %v4611
    %v4613 = vpop.f32.mrf.mxu0
    %4614 = vmatprep.mubr.f32.mxu0 0.0
    %v4615 = vand.u32 %v50, 4294901760
    %v4616 = vsub.f32 %v50, %v4615
    %4617 = vmatmul.mubr.f32.gmra.mxu0 %v4616
    %v4618 = vpop.f32.mrf.mxu0
    %v4619 = vadd.f32 %v4416, %v4618
    %v4620 = vpop.f32.mrf.mxu0
    %4621 = vmatprep.mubr.f32.mxu0 0.0
    %v4622 = vand.u32 %v51, 4294901760
    %v4623 = vsub.f32 %v51, %v4622
    %4624 = vmatmul.mubr.f32.gmra.mxu0 %v4623
    %v4625 = vpop.f32.mrf.mxu0
    %v4626 = vadd.f32 %v4422, %v4625
    %v4627 = vpop.f32.mrf.mxu0
    %4628 = vmatprep.mubr.f32.mxu0 0.0
    %v4629 = vand.u32 %v52, 4294901760
    %v4630 = vsub.f32 %v52, %v4629
    %4631 = vmatmul.mubr.f32.gmra.mxu0 %v4630
    %v4632 = vpop.f32.mrf.mxu0
    %v4633 = vadd.f32 %v4428, %v4632
    %v4634 = vpop.f32.mrf.mxu0
    %4635 = vmatprep.mubr.f32.mxu0 0.0
    %v4636 = vand.u32 %v53, 4294901760
    %v4637 = vsub.f32 %v53, %v4636
    %4638 = vmatmul.mubr.f32.gmra.mxu0 %v4637
    %v4639 = vpop.f32.mrf.mxu0
    %v4640 = vadd.f32 %v4434, %v4639
    %v4641 = vpop.f32.mrf.mxu0
    %4642 = vmatprep.mubr.f32.mxu0 0.0
    %v4643 = vand.u32 %v54, 4294901760
    %v4644 = vsub.f32 %v54, %v4643
    %4645 = vmatmul.mubr.f32.gmra.mxu0 %v4644
    %v4646 = vpop.f32.mrf.mxu0
    %v4647 = vadd.f32 %v4440, %v4646
    %v4648 = vpop.f32.mrf.mxu0
    %4649 = vmatprep.mubr.f32.mxu0 0.0
    %v4650 = vand.u32 %v55, 4294901760
    %v4651 = vsub.f32 %v55, %v4650
    %4652 = vmatmul.mubr.f32.gmra.mxu0 %v4651
    %v4653 = vpop.f32.mrf.mxu0
    %v4654 = vadd.f32 %v4446, %v4653
    %v4655 = vpop.f32.mrf.mxu0
    %4656 = vmatprep.mubr.f32.mxu0 0.0
    %v4657 = vand.u32 %v56, 4294901760
    %v4658 = vsub.f32 %v56, %v4657
    %4659 = vmatmul.mubr.f32.gmra.mxu0 %v4658
    %v4660 = vpop.f32.mrf.mxu0
    %v4661 = vadd.f32 %v4452, %v4660
    %v4662 = vpop.f32.mrf.mxu0
    %4663 = vdwg.mxu0
    %4664 = vmatprep.subr.mxu0 0.0
    %v4665 = vand.u32 %v3966, 4294901760
    %4666 = vmatpush1.msra.mxu0 %v4665
    %4667 = vmatprep.subr.mxu0 0.0
    %v4668 = vand.u32 %v3960, 4294901760
    %4669 = vmatpush1.msra.mxu0 %v4668
    %4670 = vmatprep.subr.mxu0 0.0
    %v4671 = vand.u32 %v3954, 4294901760
    %4672 = vmatpush1.msra.mxu0 %v4671
    %4673 = vmatprep.subr.mxu0 0.0
    %v4674 = vand.u32 %v3948, 4294901760
    %4675 = vmatpush1.msra.mxu0 %v4674
    %4676 = vmatprep.subr.mxu0 0.0
    %v4677 = vand.u32 %v3942, 4294901760
    %4678 = vmatpush1.msra.mxu0 %v4677
    %4679 = vmatprep.subr.mxu0 0.0
    %v4680 = vand.u32 %v3936, 4294901760
    %4681 = vmatpush1.msra.mxu0 %v4680
    %4682 = vmatprep.subr.mxu0 0.0
    %v4683 = vand.u32 %v3930, 4294901760
    %4684 = vmatpush1.msra.mxu0 %v4683
    %4685 = vmatprep.subr.mxu0 0.0
    %v4686 = vand.u32 %v3924, 4294901760
    %4687 = vmatpush1.msra.mxu0 %v4686
    %4688 = vmatprep.subr.mxu0 0.0
    %v4689 = vand.u32 %v3918, 4294901760
    %4690 = vmatpush1.msra.mxu0 %v4689
    %4691 = vmatprep.subr.mxu0 0.0
    %v4692 = vand.u32 %v3912, 4294901760
    %4693 = vmatpush1.msra.mxu0 %v4692
    %4694 = vmatprep.subr.mxu0 0.0
    %v4695 = vand.u32 %v3906, 4294901760
    %4696 = vmatpush1.msra.mxu0 %v4695
    %4697 = vmatprep.subr.mxu0 0.0
    %v4698 = vand.u32 %v3900, 4294901760
    %4699 = vmatpush1.msra.mxu0 %v4698
    %4700 = vmatprep.subr.mxu0 0.0
    %v4701 = vand.u32 %v3894, 4294901760
    %4702 = vmatpush1.msra.mxu0 %v4701
    %4703 = vmatprep.subr.mxu0 0.0
    %v4704 = vand.u32 %v3888, 4294901760
    %4705 = vmatpush1.msra.mxu0 %v4704
    %4706 = vmatprep.subr.mxu0 0.0
    %v4707 = vand.u32 %v3882, 4294901760
    %4708 = vmatpush1.msra.mxu0 %v4707
    %4709 = vmatprep.subr.mxu0 0.0
    %v4710 = vand.u32 %v3876, 4294901760
    %4711 = vmatpush1.msra.mxu0 %v4710
    %4712 = vmatprep.subr.mxu0 0.0
    %4713 = vmatpush2.msra.mxu0 0.0
    %4714 = vmatprep.subr.mxu0 0.0
    %4715 = vmatpush2.msra.mxu0 0.0
    %4716 = vmatprep.subr.mxu0 0.0
    %4717 = vmatpush2.msra.mxu0 0.0
    %4718 = vmatprep.subr.mxu0 0.0
    %4719 = vmatpush2.msra.mxu0 0.0
    %4720 = vmatprep.subr.mxu0 0.0
    %4721 = vmatpush2.msra.mxu0 0.0
    %4722 = vmatprep.subr.mxu0 0.0
    %4723 = vmatpush2.msra.mxu0 0.0
    %4724 = vmatprep.subr.mxu0 0.0
    %4725 = vmatpush2.msra.mxu0 0.0
    %4726 = vmatprep.subr.mxu0 0.0
    %4727 = vmatpush2.msra.mxu0 0.0
    %4728 = vmatprep.subr.mxu0 0.0
    %4729 = vmatpush2.msra.mxu0 0.0
    %4730 = vmatprep.subr.mxu0 0.0
    %4731 = vmatpush2.msra.mxu0 0.0
    %4732 = vmatprep.subr.mxu0 0.0
    %4733 = vmatpush2.msra.mxu0 0.0
    %4734 = vmatprep.subr.mxu0 0.0
    %4735 = vmatpush2.msra.mxu0 0.0
    %4736 = vmatprep.subr.mxu0 0.0
    %4737 = vmatpush2.msra.mxu0 0.0
    %4738 = vmatprep.subr.mxu0 0.0
    %4739 = vmatpush2.msra.mxu0 0.0
    %4740 = vmatprep.subr.mxu0 0.0
    %4741 = vmatpush2.msra.mxu0 0.0
    %4742 = vmatprep.subr.mxu0 0.0
    %4743 = vmatpush2.msra.mxu0 0.0
    %4744 = vmatprep.mubr.f32.mxu0 0.0
    %v4745 = vand.u32 %v41, 4294901760
    %v4746 = vsub.f32 %v41, %v4745
    %v4747 = vand.u32 %v4746, 4294901760
    %4748 = vmatmul.mubr.f32.gmra.mxu0 %v4747
    %v4749 = vpop.f32.mrf.mxu0
    %v4750 = vadd.f32 %v4556, %v4749
    %v4751 = vpop.f32.mrf.mxu0
    %4752 = vmatprep.mubr.f32.mxu0 0.0
    %v4753 = vand.u32 %v42, 4294901760
    %v4754 = vsub.f32 %v42, %v4753
    %v4755 = vand.u32 %v4754, 4294901760
    %4756 = vmatmul.mubr.f32.gmra.mxu0 %v4755
    %v4757 = vpop.f32.mrf.mxu0
    %v4758 = vadd.f32 %v4563, %v4757
    %v4759 = vpop.f32.mrf.mxu0
    %4760 = vmatprep.mubr.f32.mxu0 0.0
    %v4761 = vand.u32 %v43, 4294901760
    %v4762 = vsub.f32 %v43, %v4761
    %v4763 = vand.u32 %v4762, 4294901760
    %4764 = vmatmul.mubr.f32.gmra.mxu0 %v4763
    %v4765 = vpop.f32.mrf.mxu0
    %v4766 = vadd.f32 %v4570, %v4765
    %v4767 = vpop.f32.mrf.mxu0
    %4768 = vmatprep.mubr.f32.mxu0 0.0
    %v4769 = vand.u32 %v44, 4294901760
    %v4770 = vsub.f32 %v44, %v4769
    %v4771 = vand.u32 %v4770, 4294901760
    %4772 = vmatmul.mubr.f32.gmra.mxu0 %v4771
    %v4773 = vpop.f32.mrf.mxu0
    %v4774 = vadd.f32 %v4577, %v4773
    %v4775 = vpop.f32.mrf.mxu0
    %4776 = vmatprep.mubr.f32.mxu0 0.0
    %v4777 = vand.u32 %v45, 4294901760
    %v4778 = vsub.f32 %v45, %v4777
    %v4779 = vand.u32 %v4778, 4294901760
    %4780 = vmatmul.mubr.f32.gmra.mxu0 %v4779
    %v4781 = vpop.f32.mrf.mxu0
    %v4782 = vadd.f32 %v4584, %v4781
    %v4783 = vpop.f32.mrf.mxu0
    %4784 = vmatprep.mubr.f32.mxu0 0.0
    %v4785 = vand.u32 %v46, 4294901760
    %v4786 = vsub.f32 %v46, %v4785
    %v4787 = vand.u32 %v4786, 4294901760
    %4788 = vmatmul.mubr.f32.gmra.mxu0 %v4787
    %v4789 = vpop.f32.mrf.mxu0
    %v4790 = vadd.f32 %v4591, %v4789
    %v4791 = vpop.f32.mrf.mxu0
    %4792 = vmatprep.mubr.f32.mxu0 0.0
    %v4793 = vand.u32 %v47, 4294901760
    %v4794 = vsub.f32 %v47, %v4793
    %v4795 = vand.u32 %v4794, 4294901760
    %4796 = vmatmul.mubr.f32.gmra.mxu0 %v4795
    %v4797 = vpop.f32.mrf.mxu0
    %v4798 = vadd.f32 %v4598, %v4797
    %v4799 = vpop.f32.mrf.mxu0
    %4800 = vmatprep.mubr.f32.mxu0 0.0
    %v4801 = vand.u32 %v48, 4294901760
    %v4802 = vsub.f32 %v48, %v4801
    %v4803 = vand.u32 %v4802, 4294901760
    %4804 = vmatmul.mubr.f32.gmra.mxu0 %v4803
    %v4805 = vpop.f32.mrf.mxu0
    %v4806 = vadd.f32 %v4605, %v4805
    %v4807 = vpop.f32.mrf.mxu0
    %4808 = vmatprep.mubr.f32.mxu0 0.0
    %v4809 = vand.u32 %v49, 4294901760
    %v4810 = vsub.f32 %v49, %v4809
    %v4811 = vand.u32 %v4810, 4294901760
    %4812 = vmatmul.mubr.f32.gmra.mxu0 %v4811
    %v4813 = vpop.f32.mrf.mxu0
    %v4814 = vadd.f32 %v4612, %v4813
    %v4815 = vpop.f32.mrf.mxu0
    %4816 = vmatprep.mubr.f32.mxu0 0.0
    %v4817 = vand.u32 %v50, 4294901760
    %v4818 = vsub.f32 %v50, %v4817
    %v4819 = vand.u32 %v4818, 4294901760
    %4820 = vmatmul.mubr.f32.gmra.mxu0 %v4819
    %v4821 = vpop.f32.mrf.mxu0
    %v4822 = vadd.f32 %v4619, %v4821
    %v4823 = vpop.f32.mrf.mxu0
    %4824 = vmatprep.mubr.f32.mxu0 0.0
    %v4825 = vand.u32 %v51, 4294901760
    %v4826 = vsub.f32 %v51, %v4825
    %v4827 = vand.u32 %v4826, 4294901760
    %4828 = vmatmul.mubr.f32.gmra.mxu0 %v4827
    %v4829 = vpop.f32.mrf.mxu0
    %v4830 = vadd.f32 %v4626, %v4829
    %v4831 = vpop.f32.mrf.mxu0
    %4832 = vmatprep.mubr.f32.mxu0 0.0
    %v4833 = vand.u32 %v52, 4294901760
    %v4834 = vsub.f32 %v52, %v4833
    %v4835 = vand.u32 %v4834, 4294901760
    %4836 = vmatmul.mubr.f32.gmra.mxu0 %v4835
    %v4837 = vpop.f32.mrf.mxu0
    %v4838 = vadd.f32 %v4633, %v4837
    %v4839 = vpop.f32.mrf.mxu0
    %4840 = vmatprep.mubr.f32.mxu0 0.0
    %v4841 = vand.u32 %v53, 4294901760
    %v4842 = vsub.f32 %v53, %v4841
    %v4843 = vand.u32 %v4842, 4294901760
    %4844 = vmatmul.mubr.f32.gmra.mxu0 %v4843
    %v4845 = vpop.f32.mrf.mxu0
    %v4846 = vadd.f32 %v4640, %v4845
    %v4847 = vpop.f32.mrf.mxu0
    %4848 = vmatprep.mubr.f32.mxu0 0.0
    %v4849 = vand.u32 %v54, 4294901760
    %v4850 = vsub.f32 %v54, %v4849
    %v4851 = vand.u32 %v4850, 4294901760
    %4852 = vmatmul.mubr.f32.gmra.mxu0 %v4851
    %v4853 = vpop.f32.mrf.mxu0
    %v4854 = vadd.f32 %v4647, %v4853
    %v4855 = vpop.f32.mrf.mxu0
    %4856 = vmatprep.mubr.f32.mxu0 0.0
    %v4857 = vand.u32 %v55, 4294901760
    %v4858 = vsub.f32 %v55, %v4857
    %v4859 = vand.u32 %v4858, 4294901760
    %4860 = vmatmul.mubr.f32.gmra.mxu0 %v4859
    %v4861 = vpop.f32.mrf.mxu0
    %v4862 = vadd.f32 %v4654, %v4861
    %v4863 = vpop.f32.mrf.mxu0
    %4864 = vmatprep.mubr.f32.mxu0 0.0
    %v4865 = vand.u32 %v56, 4294901760
    %v4866 = vsub.f32 %v56, %v4865
    %v4867 = vand.u32 %v4866, 4294901760
    %4868 = vmatmul.mubr.f32.gmra.mxu0 %v4867
    %v4869 = vpop.f32.mrf.mxu0
    %v4870 = vadd.f32 %v4661, %v4869
    %v4871 = vpop.f32.mrf.mxu0
    %4872 = vdwg.mxu0
    %4873 = vmatprep.subr.mxu0 0.0
    %v4874 = vand.u32 %v3966, 4294901760
    %v4875 = vsub.f32 %v3966, %v4874
    %v4876 = vand.u32 %v4875, 4294901760
    %4877 = vmatpush1.msra.mxu0 %v4876
    %4878 = vmatprep.subr.mxu0 0.0
    %v4879 = vand.u32 %v3960, 4294901760
    %v4880 = vsub.f32 %v3960, %v4879
    %v4881 = vand.u32 %v4880, 4294901760
    %4882 = vmatpush1.msra.mxu0 %v4881
    %4883 = vmatprep.subr.mxu0 0.0
    %v4884 = vand.u32 %v3954, 4294901760
    %v4885 = vsub.f32 %v3954, %v4884
    %v4886 = vand.u32 %v4885, 4294901760
    %4887 = vmatpush1.msra.mxu0 %v4886
    %4888 = vmatprep.subr.mxu0 0.0
    %v4889 = vand.u32 %v3948, 4294901760
    %v4890 = vsub.f32 %v3948, %v4889
    %v4891 = vand.u32 %v4890, 4294901760
    %4892 = vmatpush1.msra.mxu0 %v4891
    %4893 = vmatprep.subr.mxu0 0.0
    %v4894 = vand.u32 %v3942, 4294901760
    %v4895 = vsub.f32 %v3942, %v4894
    %v4896 = vand.u32 %v4895, 4294901760
    %4897 = vmatpush1.msra.mxu0 %v4896
    %4898 = vmatprep.subr.mxu0 0.0
    %v4899 = vand.u32 %v3936, 4294901760
    %v4900 = vsub.f32 %v3936, %v4899
    %v4901 = vand.u32 %v4900, 4294901760
    %4902 = vmatpush1.msra.mxu0 %v4901
    %4903 = vmatprep.subr.mxu0 0.0
    %v4904 = vand.u32 %v3930, 4294901760
    %v4905 = vsub.f32 %v3930, %v4904
    %v4906 = vand.u32 %v4905, 4294901760
    %4907 = vmatpush1.msra.mxu0 %v4906
    %4908 = vmatprep.subr.mxu0 0.0
    %v4909 = vand.u32 %v3924, 4294901760
    %v4910 = vsub.f32 %v3924, %v4909
    %v4911 = vand.u32 %v4910, 4294901760
    %4912 = vmatpush1.msra.mxu0 %v4911
    %4913 = vmatprep.subr.mxu0 0.0
    %v4914 = vand.u32 %v3918, 4294901760
    %v4915 = vsub.f32 %v3918, %v4914
    %v4916 = vand.u32 %v4915, 4294901760
    %4917 = vmatpush1.msra.mxu0 %v4916
    %4918 = vmatprep.subr.mxu0 0.0
    %v4919 = vand.u32 %v3912, 4294901760
    %v4920 = vsub.f32 %v3912, %v4919
    %v4921 = vand.u32 %v4920, 4294901760
    %4922 = vmatpush1.msra.mxu0 %v4921
    %4923 = vmatprep.subr.mxu0 0.0
    %v4924 = vand.u32 %v3906, 4294901760
    %v4925 = vsub.f32 %v3906, %v4924
    %v4926 = vand.u32 %v4925, 4294901760
    %4927 = vmatpush1.msra.mxu0 %v4926
    %4928 = vmatprep.subr.mxu0 0.0
    %v4929 = vand.u32 %v3900, 4294901760
    %v4930 = vsub.f32 %v3900, %v4929
    %v4931 = vand.u32 %v4930, 4294901760
    %4932 = vmatpush1.msra.mxu0 %v4931
    %4933 = vmatprep.subr.mxu0 0.0
    %v4934 = vand.u32 %v3894, 4294901760
    %v4935 = vsub.f32 %v3894, %v4934
    %v4936 = vand.u32 %v4935, 4294901760
    %4937 = vmatpush1.msra.mxu0 %v4936
    %4938 = vmatprep.subr.mxu0 0.0
    %v4939 = vand.u32 %v3888, 4294901760
    %v4940 = vsub.f32 %v3888, %v4939
    %v4941 = vand.u32 %v4940, 4294901760
    %4942 = vmatpush1.msra.mxu0 %v4941
    %4943 = vmatprep.subr.mxu0 0.0
    %v4944 = vand.u32 %v3882, 4294901760
    %v4945 = vsub.f32 %v3882, %v4944
    %v4946 = vand.u32 %v4945, 4294901760
    %4947 = vmatpush1.msra.mxu0 %v4946
    %4948 = vmatprep.subr.mxu0 0.0
    %v4949 = vand.u32 %v3876, 4294901760
    %v4950 = vsub.f32 %v3876, %v4949
    %v4951 = vand.u32 %v4950, 4294901760
    %4952 = vmatpush1.msra.mxu0 %v4951
    %4953 = vmatprep.subr.mxu0 0.0
    %4954 = vmatpush2.msra.mxu0 0.0
    %4955 = vmatprep.subr.mxu0 0.0
    %4956 = vmatpush2.msra.mxu0 0.0
    %4957 = vmatprep.subr.mxu0 0.0
    %4958 = vmatpush2.msra.mxu0 0.0
    %4959 = vmatprep.subr.mxu0 0.0
    %4960 = vmatpush2.msra.mxu0 0.0
    %4961 = vmatprep.subr.mxu0 0.0
    %4962 = vmatpush2.msra.mxu0 0.0
    %4963 = vmatprep.subr.mxu0 0.0
    %4964 = vmatpush2.msra.mxu0 0.0
    %4965 = vmatprep.subr.mxu0 0.0
    %4966 = vmatpush2.msra.mxu0 0.0
    %4967 = vmatprep.subr.mxu0 0.0
    %4968 = vmatpush2.msra.mxu0 0.0
    %4969 = vmatprep.subr.mxu0 0.0
    %4970 = vmatpush2.msra.mxu0 0.0
    %4971 = vmatprep.subr.mxu0 0.0
    %4972 = vmatpush2.msra.mxu0 0.0
    %4973 = vmatprep.subr.mxu0 0.0
    %4974 = vmatpush2.msra.mxu0 0.0
    %4975 = vmatprep.subr.mxu0 0.0
    %4976 = vmatpush2.msra.mxu0 0.0
    %4977 = vmatprep.subr.mxu0 0.0
    %4978 = vmatpush2.msra.mxu0 0.0
    %4979 = vmatprep.subr.mxu0 0.0
    %4980 = vmatpush2.msra.mxu0 0.0
    %4981 = vmatprep.subr.mxu0 0.0
    %4982 = vmatpush2.msra.mxu0 0.0
    %4983 = vmatprep.subr.mxu0 0.0
    %4984 = vmatpush2.msra.mxu0 0.0
    %4985 = vmatprep.mubr.f32.mxu0 0.0
    %v4986 = vand.u32 %v41, 4294901760
    %4987 = vmatmul.mubr.f32.gmra.mxu0 %v4986
    %v4988 = vpop.f32.mrf.mxu0
    %v4989 = vadd.f32 %v4750, %v4988
    %v4990 = vpop.f32.mrf.mxu0
    %4991 = vmatprep.mubr.f32.mxu0 0.0
    %v4992 = vand.u32 %v42, 4294901760
    %4993 = vmatmul.mubr.f32.gmra.mxu0 %v4992
    %v4994 = vpop.f32.mrf.mxu0
    %v4995 = vadd.f32 %v4758, %v4994
    %v4996 = vpop.f32.mrf.mxu0
    %4997 = vmatprep.mubr.f32.mxu0 0.0
    %v4998 = vand.u32 %v43, 4294901760
    %4999 = vmatmul.mubr.f32.gmra.mxu0 %v4998
    %v5000 = vpop.f32.mrf.mxu0
    %v5001 = vadd.f32 %v4766, %v5000
    %v5002 = vpop.f32.mrf.mxu0
    %5003 = vmatprep.mubr.f32.mxu0 0.0
    %v5004 = vand.u32 %v44, 4294901760
    %5005 = vmatmul.mubr.f32.gmra.mxu0 %v5004
    %v5006 = vpop.f32.mrf.mxu0
    %v5007 = vadd.f32 %v4774, %v5006
    %v5008 = vpop.f32.mrf.mxu0
    %5009 = vmatprep.mubr.f32.mxu0 0.0
    %v5010 = vand.u32 %v45, 4294901760
    %5011 = vmatmul.mubr.f32.gmra.mxu0 %v5010
    %v5012 = vpop.f32.mrf.mxu0
    %v5013 = vadd.f32 %v4782, %v5012
    %v5014 = vpop.f32.mrf.mxu0
    %5015 = vmatprep.mubr.f32.mxu0 0.0
    %v5016 = vand.u32 %v46, 4294901760
    %5017 = vmatmul.mubr.f32.gmra.mxu0 %v5016
    %v5018 = vpop.f32.mrf.mxu0
    %v5019 = vadd.f32 %v4790, %v5018
    %v5020 = vpop.f32.mrf.mxu0
    %5021 = vmatprep.mubr.f32.mxu0 0.0
    %v5022 = vand.u32 %v47, 4294901760
    %5023 = vmatmul.mubr.f32.gmra.mxu0 %v5022
    %v5024 = vpop.f32.mrf.mxu0
    %v5025 = vadd.f32 %v4798, %v5024
    %v5026 = vpop.f32.mrf.mxu0
    %5027 = vmatprep.mubr.f32.mxu0 0.0
    %v5028 = vand.u32 %v48, 4294901760
    %5029 = vmatmul.mubr.f32.gmra.mxu0 %v5028
    %v5030 = vpop.f32.mrf.mxu0
    %v5031 = vadd.f32 %v4806, %v5030
    %v5032 = vpop.f32.mrf.mxu0
    %5033 = vmatprep.mubr.f32.mxu0 0.0
    %v5034 = vand.u32 %v49, 4294901760
    %5035 = vmatmul.mubr.f32.gmra.mxu0 %v5034
    %v5036 = vpop.f32.mrf.mxu0
    %v5037 = vadd.f32 %v4814, %v5036
    %v5038 = vpop.f32.mrf.mxu0
    %5039 = vmatprep.mubr.f32.mxu0 0.0
    %v5040 = vand.u32 %v50, 4294901760
    %5041 = vmatmul.mubr.f32.gmra.mxu0 %v5040
    %v5042 = vpop.f32.mrf.mxu0
    %v5043 = vadd.f32 %v4822, %v5042
    %v5044 = vpop.f32.mrf.mxu0
    %5045 = vmatprep.mubr.f32.mxu0 0.0
    %v5046 = vand.u32 %v51, 4294901760
    %5047 = vmatmul.mubr.f32.gmra.mxu0 %v5046
    %v5048 = vpop.f32.mrf.mxu0
    %v5049 = vadd.f32 %v4830, %v5048
    %v5050 = vpop.f32.mrf.mxu0
    %5051 = vmatprep.mubr.f32.mxu0 0.0
    %v5052 = vand.u32 %v52, 4294901760
    %5053 = vmatmul.mubr.f32.gmra.mxu0 %v5052
    %v5054 = vpop.f32.mrf.mxu0
    %v5055 = vadd.f32 %v4838, %v5054
    %v5056 = vpop.f32.mrf.mxu0
    %5057 = vmatprep.mubr.f32.mxu0 0.0
    %v5058 = vand.u32 %v53, 4294901760
    %5059 = vmatmul.mubr.f32.gmra.mxu0 %v5058
    %v5060 = vpop.f32.mrf.mxu0
    %v5061 = vadd.f32 %v4846, %v5060
    %v5062 = vpop.f32.mrf.mxu0
    %5063 = vmatprep.mubr.f32.mxu0 0.0
    %v5064 = vand.u32 %v54, 4294901760
    %5065 = vmatmul.mubr.f32.gmra.mxu0 %v5064
    %v5066 = vpop.f32.mrf.mxu0
    %v5067 = vadd.f32 %v4854, %v5066
    %v5068 = vpop.f32.mrf.mxu0
    %5069 = vmatprep.mubr.f32.mxu0 0.0
    %v5070 = vand.u32 %v55, 4294901760
    %5071 = vmatmul.mubr.f32.gmra.mxu0 %v5070
    %v5072 = vpop.f32.mrf.mxu0
    %v5073 = vadd.f32 %v4862, %v5072
    %v5074 = vpop.f32.mrf.mxu0
    %5075 = vmatprep.mubr.f32.mxu0 0.0
    %v5076 = vand.u32 %v56, 4294901760
    %5077 = vmatmul.mubr.f32.gmra.mxu0 %v5076
    %v5078 = vpop.f32.mrf.mxu0
    %v5079 = vadd.f32 %v4870, %v5078
    %v5080 = vpop.f32.mrf.mxu0
    %5081 = vdwg.mxu0
    %5082 = vmatprep.subr.mxu0 0.0
    %v5083 = vand.u32 %v3966, 4294901760
    %5084 = vmatpush1.msra.mxu0 %v5083
    %5085 = vmatprep.subr.mxu0 0.0
    %v5086 = vand.u32 %v3960, 4294901760
    %5087 = vmatpush1.msra.mxu0 %v5086
    %5088 = vmatprep.subr.mxu0 0.0
    %v5089 = vand.u32 %v3954, 4294901760
    %5090 = vmatpush1.msra.mxu0 %v5089
    %5091 = vmatprep.subr.mxu0 0.0
    %v5092 = vand.u32 %v3948, 4294901760
    %5093 = vmatpush1.msra.mxu0 %v5092
    %5094 = vmatprep.subr.mxu0 0.0
    %v5095 = vand.u32 %v3942, 4294901760
    %5096 = vmatpush1.msra.mxu0 %v5095
    %5097 = vmatprep.subr.mxu0 0.0
    %v5098 = vand.u32 %v3936, 4294901760
    %5099 = vmatpush1.msra.mxu0 %v5098
    %5100 = vmatprep.subr.mxu0 0.0
    %v5101 = vand.u32 %v3930, 4294901760
    %5102 = vmatpush1.msra.mxu0 %v5101
    %5103 = vmatprep.subr.mxu0 0.0
    %v5104 = vand.u32 %v3924, 4294901760
    %5105 = vmatpush1.msra.mxu0 %v5104
    %5106 = vmatprep.subr.mxu0 0.0
    %v5107 = vand.u32 %v3918, 4294901760
    %5108 = vmatpush1.msra.mxu0 %v5107
    %5109 = vmatprep.subr.mxu0 0.0
    %v5110 = vand.u32 %v3912, 4294901760
    %5111 = vmatpush1.msra.mxu0 %v5110
    %5112 = vmatprep.subr.mxu0 0.0
    %v5113 = vand.u32 %v3906, 4294901760
    %5114 = vmatpush1.msra.mxu0 %v5113
    %5115 = vmatprep.subr.mxu0 0.0
    %v5116 = vand.u32 %v3900, 4294901760
    %5117 = vmatpush1.msra.mxu0 %v5116
    %5118 = vmatprep.subr.mxu0 0.0
    %v5119 = vand.u32 %v3894, 4294901760
    %5120 = vmatpush1.msra.mxu0 %v5119
    %5121 = vmatprep.subr.mxu0 0.0
    %v5122 = vand.u32 %v3888, 4294901760
    %5123 = vmatpush1.msra.mxu0 %v5122
    %5124 = vmatprep.subr.mxu0 0.0
    %v5125 = vand.u32 %v3882, 4294901760
    %5126 = vmatpush1.msra.mxu0 %v5125
    %5127 = vmatprep.subr.mxu0 0.0
    %v5128 = vand.u32 %v3876, 4294901760
    %5129 = vmatpush1.msra.mxu0 %v5128
    %5130 = vmatprep.subr.mxu0 0.0
    %5131 = vmatpush2.msra.mxu0 0.0
    %5132 = vmatprep.subr.mxu0 0.0
    %5133 = vmatpush2.msra.mxu0 0.0
    %5134 = vmatprep.subr.mxu0 0.0
    %5135 = vmatpush2.msra.mxu0 0.0
    %5136 = vmatprep.subr.mxu0 0.0
    %5137 = vmatpush2.msra.mxu0 0.0
    %5138 = vmatprep.subr.mxu0 0.0
    %5139 = vmatpush2.msra.mxu0 0.0
    %5140 = vmatprep.subr.mxu0 0.0
    %5141 = vmatpush2.msra.mxu0 0.0
    %5142 = vmatprep.subr.mxu0 0.0
    %5143 = vmatpush2.msra.mxu0 0.0
    %5144 = vmatprep.subr.mxu0 0.0
    %5145 = vmatpush2.msra.mxu0 0.0
    %5146 = vmatprep.subr.mxu0 0.0
    %5147 = vmatpush2.msra.mxu0 0.0
    %5148 = vmatprep.subr.mxu0 0.0
    %5149 = vmatpush2.msra.mxu0 0.0
    %5150 = vmatprep.subr.mxu0 0.0
    %5151 = vmatpush2.msra.mxu0 0.0
    %5152 = vmatprep.subr.mxu0 0.0
    %5153 = vmatpush2.msra.mxu0 0.0
    %5154 = vmatprep.subr.mxu0 0.0
    %5155 = vmatpush2.msra.mxu0 0.0
    %5156 = vmatprep.subr.mxu0 0.0
    %5157 = vmatpush2.msra.mxu0 0.0
    %5158 = vmatprep.subr.mxu0 0.0
    %5159 = vmatpush2.msra.mxu0 0.0
    %5160 = vmatprep.subr.mxu0 0.0
    %5161 = vmatpush2.msra.mxu0 0.0
    %5162 = vmatprep.mubr.f32.mxu0 0.0
    %v5163 = vand.u32 %v41, 4294901760
    %5164 = vmatmul.mubr.f32.gmra.mxu0 %v5163
    %v5165 = vpop.f32.mrf.mxu0
    %v5166 = vadd.f32 %v4989, %v5165
    %v5167 = vpop.f32.mrf.mxu0
    %5168 = vmatprep.mubr.f32.mxu0 0.0
    %v5169 = vand.u32 %v42, 4294901760
    %5170 = vmatmul.mubr.f32.gmra.mxu0 %v5169
    %v5171 = vpop.f32.mrf.mxu0
    %v5172 = vadd.f32 %v4995, %v5171
    %v5173 = vpop.f32.mrf.mxu0
    %5174 = vmatprep.mubr.f32.mxu0 0.0
    %v5175 = vand.u32 %v43, 4294901760
    %5176 = vmatmul.mubr.f32.gmra.mxu0 %v5175
    %v5177 = vpop.f32.mrf.mxu0
    %v5178 = vadd.f32 %v5001, %v5177
    %v5179 = vpop.f32.mrf.mxu0
    %5180 = vmatprep.mubr.f32.mxu0 0.0
    %v5181 = vand.u32 %v44, 4294901760
    %5182 = vmatmul.mubr.f32.gmra.mxu0 %v5181
    %v5183 = vpop.f32.mrf.mxu0
    %v5184 = vadd.f32 %v5007, %v5183
    %v5185 = vpop.f32.mrf.mxu0
    %5186 = vmatprep.mubr.f32.mxu0 0.0
    %v5187 = vand.u32 %v45, 4294901760
    %5188 = vmatmul.mubr.f32.gmra.mxu0 %v5187
    %v5189 = vpop.f32.mrf.mxu0
    %v5190 = vadd.f32 %v5013, %v5189
    %v5191 = vpop.f32.mrf.mxu0
    %5192 = vmatprep.mubr.f32.mxu0 0.0
    %v5193 = vand.u32 %v46, 4294901760
    %5194 = vmatmul.mubr.f32.gmra.mxu0 %v5193
    %v5195 = vpop.f32.mrf.mxu0
    %v5196 = vadd.f32 %v5019, %v5195
    %v5197 = vpop.f32.mrf.mxu0
    %5198 = vmatprep.mubr.f32.mxu0 0.0
    %v5199 = vand.u32 %v47, 4294901760
    %5200 = vmatmul.mubr.f32.gmra.mxu0 %v5199
    %v5201 = vpop.f32.mrf.mxu0
    %v5202 = vadd.f32 %v5025, %v5201
    %v5203 = vpop.f32.mrf.mxu0
    %5204 = vmatprep.mubr.f32.mxu0 0.0
    %v5205 = vand.u32 %v48, 4294901760
    %5206 = vmatmul.mubr.f32.gmra.mxu0 %v5205
    %v5207 = vpop.f32.mrf.mxu0
    %v5208 = vadd.f32 %v5031, %v5207
    %v5209 = vpop.f32.mrf.mxu0
    %5210 = vmatprep.mubr.f32.mxu0 0.0
    %v5211 = vand.u32 %v49, 4294901760
    %5212 = vmatmul.mubr.f32.gmra.mxu0 %v5211
    %v5213 = vpop.f32.mrf.mxu0
    %v5214 = vadd.f32 %v5037, %v5213
    %v5215 = vpop.f32.mrf.mxu0
    %5216 = vmatprep.mubr.f32.mxu0 0.0
    %v5217 = vand.u32 %v50, 4294901760
    %5218 = vmatmul.mubr.f32.gmra.mxu0 %v5217
    %v5219 = vpop.f32.mrf.mxu0
    %v5220 = vadd.f32 %v5043, %v5219
    %v5221 = vpop.f32.mrf.mxu0
    %5222 = vmatprep.mubr.f32.mxu0 0.0
    %v5223 = vand.u32 %v51, 4294901760
    %5224 = vmatmul.mubr.f32.gmra.mxu0 %v5223
    %v5225 = vpop.f32.mrf.mxu0
    %v5226 = vadd.f32 %v5049, %v5225
    %v5227 = vpop.f32.mrf.mxu0
    %5228 = vmatprep.mubr.f32.mxu0 0.0
    %v5229 = vand.u32 %v52, 4294901760
    %5230 = vmatmul.mubr.f32.gmra.mxu0 %v5229
    %v5231 = vpop.f32.mrf.mxu0
    %v5232 = vadd.f32 %v5055, %v5231
    %v5233 = vpop.f32.mrf.mxu0
    %5234 = vmatprep.mubr.f32.mxu0 0.0
    %v5235 = vand.u32 %v53, 4294901760
    %5236 = vmatmul.mubr.f32.gmra.mxu0 %v5235
    %v5237 = vpop.f32.mrf.mxu0
    %v5238 = vadd.f32 %v5061, %v5237
    %v5239 = vpop.f32.mrf.mxu0
    %5240 = vmatprep.mubr.f32.mxu0 0.0
    %v5241 = vand.u32 %v54, 4294901760
    %5242 = vmatmul.mubr.f32.gmra.mxu0 %v5241
    %v5243 = vpop.f32.mrf.mxu0
    %v5244 = vadd.f32 %v5067, %v5243
    %v5245 = vpop.f32.mrf.mxu0
    %5246 = vmatprep.mubr.f32.mxu0 0.0
    %v5247 = vand.u32 %v55, 4294901760
    %5248 = vmatmul.mubr.f32.gmra.mxu0 %v5247
    %v5249 = vpop.f32.mrf.mxu0
    %v5250 = vadd.f32 %v5073, %v5249
    %v5251 = vpop.f32.mrf.mxu0
    %5252 = vmatprep.mubr.f32.mxu0 0.0
    %v5253 = vand.u32 %v56, 4294901760
    %5254 = vmatmul.mubr.f32.gmra.mxu0 %v5253
    %v5255 = vpop.f32.mrf.mxu0
    %v5256 = vadd.f32 %v5079, %v5255
    %v5257 = vpop.f32.mrf.mxu0
    %5258 = vdwg.mxu0
    %5259 = vst [vmem:[%s2] sm:$0xff] %v5166
    %5260 = vst [vmem:[%s2 + $0x8] sm:$0xff] %v5172
    %5261 = vst [vmem:[%s2 + $0x10] sm:$0xff] %v5178
    %5262 = vst [vmem:[%s2 + $0x18] sm:$0xff] %v5184
    %5263 = vst [vmem:[%s2 + $0x20] sm:$0xff] %v5190
    %5264 = vst [vmem:[%s2 + $0x28] sm:$0xff] %v5196
    %5265 = vst [vmem:[%s2 + $0x30] sm:$0xff] %v5202
    %5266 = vst [vmem:[%s2 + $0x38] sm:$0xff] %v5208
    %5267 = vst [vmem:[%s2 + $0x40] sm:$0xff] %v5214
    %5268 = vst [vmem:[%s2 + $0x48] sm:$0xff] %v5220
    %5269 = vst [vmem:[%s2 + $0x50] sm:$0xff] %v5226
    %5270 = vst [vmem:[%s2 + $0x58] sm:$0xff] %v5232
    %5271 = vst [vmem:[%s2 + $0x60] sm:$0xff] %v5238
    %5272 = vst [vmem:[%s2 + $0x68] sm:$0xff] %v5244
    %5273 = vst [vmem:[%s2 + $0x70] sm:$0xff] %v5250
    %5274 = vst [vmem:[%s2 + $0x78] sm:$0xff] %v5256
    // Predicated region
    $region14: #{forward.1} parent=1 // pred_check
      _
    $region15: #{forward.1} parent=1 // pred_check_branch
      %5276 = sbr.rel (0) target = $region17
    $region16: #{forward.1} parent=1 // pred_region
      _
    $region17: #{forward.1} parent=1 // pred_fallthru
      _
    // Predicated region
    $region18: #{forward.1} parent=1 // pred_check
      _
    $region19: #{forward.1} parent=1 // pred_check_branch
      %5278 = sbr.rel (0) target = $region21
    $region20: #{forward.1} parent=1 // pred_region
      _
    $region21: #{forward.1} parent=1 // pred_fallthru
      _
    %5279 = vsyncpa [#allocation3], 1

</llo_original>
